<compile_context>
chip_gen: v5e
topology: v5e:2x2
jax: 0.10.0
libtpu: 0.0.40
codegen_flags: <defaults>
</compile_context>

<pallas_src>
import functools

import jax
import jax.numpy as jnp
from jax.experimental import pallas as pl
from jax.experimental.pallas import tpu as pltpu


# ----------------------------------------------------------------------------
# Pallas kernels: M-tiled fused GEMMs (bias + activation, optional chained GEMM)
# ----------------------------------------------------------------------------
def _apply_act(x, act):
    if act == "relu":
        return jnp.maximum(x, 0.0)
    if act == "sigmoid":
        return jax.nn.sigmoid(x)
    return x


def _gemm_kernel(x_ref, w_ref, b_ref, o_ref, *, act):
    acc = jnp.dot(x_ref[...], w_ref[...], preferred_element_type=jnp.float32)
    o_ref[...] = _apply_act(acc + b_ref[...], act).astype(o_ref.dtype)


def _gemm_chain_kernel(x_ref, w1_ref, b1_ref, w2_ref, b2_ref, o_ref, *, act1, act2):
    # out = act2(act1(x @ w1 + b1) @ w2 + b2); the intermediate stays in VMEM/vregs.
    h = jnp.dot(x_ref[...], w1_ref[...], preferred_element_type=jnp.float32)
    h = _apply_act(h + b1_ref[...], act1)
    acc = jnp.dot(h.astype(w2_ref.dtype), w2_ref[...],
                  preferred_element_type=jnp.float32)
    o_ref[...] = _apply_act(acc + b2_ref[...], act2).astype(o_ref.dtype)


def fused_gemm(x, w1, b1, act1="none", w2=None, b2=None, act2="none",
               out_dtype=jnp.bfloat16, tile_m=256):
    """M-tiled GEMM: act2(act1(x@w1+b1)@w2+b2) (second stage optional).

    x: (M, K) (cast to bf16), w*: bf16, b*: f32 row vectors (1, N)."""
    M, K = x.shape
    N1 = w1.shape[1]
    N = N1 if w2 is None else w2.shape[1]

    tm = M if M < tile_m else tile_m
    Mp = pl.cdiv(M, tm) * tm
    xp = jnp.pad(x, ((0, Mp - M), (0, 0))) if Mp != M else x
    grid = (Mp // tm,)

    x_spec = pl.BlockSpec((tm, K), lambda i: (i, 0))
    o_spec = pl.BlockSpec((tm, N), lambda i: (i, 0))

    def full(shape):
        return pl.BlockSpec(shape, lambda i: (0, 0))

    cp = pltpu.CompilerParams(dimension_semantics=("parallel",))

    if w2 is None:
        out = pl.pallas_call(
            functools.partial(_gemm_kernel, act=act1),
            grid=grid,
            in_specs=[x_spec, full((K, N1)), full((1, N1))],
            out_specs=o_spec,
            out_shape=jax.ShapeDtypeStruct((Mp, N), out_dtype),
            compiler_params=cp,
        )(xp.astype(jnp.bfloat16), w1, b1)
    else:
        out = pl.pallas_call(
            functools.partial(_gemm_chain_kernel, act1=act1, act2=act2),
            grid=grid,
            in_specs=[x_spec, full((K, N1)), full((1, N1)),
                      full((N1, N)), full((1, N))],
            out_specs=o_spec,
            out_shape=jax.ShapeDtypeStruct((Mp, N), out_dtype),
            compiler_params=cp,
        )(xp.astype(jnp.bfloat16), w1, b1, w2, b2)
    return out if Mp == M else out[:M]


# ----------------------------------------------------------------------------
# NHWC conv / sub-pixel conv-transpose wrappers (tiny XLA glue around the GEMMs)
# ----------------------------------------------------------------------------
def _im2col_s2(x):
    """3x3, stride-2, pad-1 patches. x: (B,H,W,C) -> (B*Ho*Wo, 9*C), tap-major."""
    B, H, W, C = x.shape
    Ho, Wo = H // 2, W // 2
    xp = jnp.pad(x, ((0, 0), (1, 1), (1, 1), (0, 0)))
    taps = [xp[:, i:i + 2 * Ho:2, j:j + 2 * Wo:2, :]
            for i in range(3) for j in range(3)]
    return jnp.stack(taps, axis=3).reshape(B * Ho * Wo, 9 * C), (B, Ho, Wo)


def conv3x3_s2_relu(x, wmat, b):
    patches, (B, Ho, Wo) = _im2col_s2(x)
    out = fused_gemm(patches, wmat, b, act1="relu")
    return out.reshape(B, Ho, Wo, wmat.shape[1])


def _im2col_subpixel(x):
    """2x2 window (pad bottom/right by 1) patches for the sub-pixel deconv GEMM."""
    B, H, W, C = x.shape
    xp = jnp.pad(x, ((0, 0), (0, 1), (0, 1), (0, 0)))
    taps = [xp[:, di:di + H, dj:dj + W, :] for di in range(2) for dj in range(2)]
    return jnp.stack(taps, axis=3).reshape(B * H * W, 4 * C), (B, H, W)


def _pixel_shuffle(y, B, H, W, Cout):
    """(B*H*W, 4*Cout) phase-major columns -> (B, 2H, 2W, Cout)."""
    return (y.reshape(B, H, W, 2, 2, Cout)
             .transpose(0, 1, 3, 2, 4, 5)
             .reshape(B, 2 * H, 2 * W, Cout))


def deconv3x3_s2_relu(x, w_eq, b4):
    """ConvTranspose2d(k=3, s=2, p=1, op=1) + ReLU via sub-pixel GEMM."""
    patches, (B, H, W) = _im2col_subpixel(x)
    Cout = w_eq.shape[1] // 4
    out = fused_gemm(patches, w_eq, b4, act1="relu")
    return _pixel_shuffle(out, B, H, W, Cout)


def deconv3_plus_final_mix(x, w_eq, b4, k_big):
    """relu(deconv3(x)) followed (in the same kernel) by the final layer's
    128->1 per-tap channel projection.  Output: per-pixel 9 tap values."""
    patches, (B, H, W) = _im2col_subpixel(x)
    zeros = jnp.zeros((1, k_big.shape[1]), jnp.float32)
    t = fused_gemm(patches, w_eq, b4, act1="relu",
                   w2=k_big, b2=zeros, act2="none", out_dtype=jnp.float32)
    return _pixel_shuffle(t, B, H, W, 9)          # (B, 2H, 2W, 9)


# ----------------------------------------------------------------------------
# Deterministic parameter construction (PyTorch-style fan-in uniform init)
# ----------------------------------------------------------------------------
def _uniform(key, shape, fan_in):
    bound = 1.0 / jnp.sqrt(jnp.asarray(fan_in, jnp.float32))
    return jax.random.uniform(key, shape, jnp.float32, -bound, bound)


def init_params(key, embedding_dim=2):
    ks = jax.random.split(key, 20)
    p = {}
    # Encoder
    p["conv1_w"] = _uniform(ks[0], (32, 1, 3, 3), 1 * 9)
    p["conv1_b"] = _uniform(ks[1], (32,), 1 * 9)
    p["conv2_w"] = _uniform(ks[2], (64, 32, 3, 3), 32 * 9)
    p["conv2_b"] = _uniform(ks[3], (64,), 32 * 9)
    p["conv3_w"] = _uniform(ks[4], (128, 64, 3, 3), 64 * 9)
    p["conv3_b"] = _uniform(ks[5], (128,), 64 * 9)
    p["enc_fc_w"] = _uniform(ks[6], (embedding_dim, 128 * 4 * 4), 128 * 4 * 4)
    p["enc_fc_b"] = _uniform(ks[7], (embedding_dim,), 128 * 4 * 4)
    # Decoder
    p["dec_fc_w"] = _uniform(ks[8], (128 * 4 * 4, embedding_dim), embedding_dim)
    p["dec_fc_b"] = _uniform(ks[9], (128 * 4 * 4,), embedding_dim)
    p["deconv1_w"] = _uniform(ks[10], (128, 64, 3, 3), 128 * 9)
    p["deconv1_b"] = _uniform(ks[11], (64,), 128 * 9)
    p["deconv2_w"] = _uniform(ks[12], (64, 32, 3, 3), 64 * 9)
    p["deconv2_b"] = _uniform(ks[13], (32,), 64 * 9)
    p["deconv3_w"] = _uniform(ks[14], (32, 128, 3, 3), 32 * 9)
    p["deconv3_b"] = _uniform(ks[15], (128,), 32 * 9)
    p["deconvf_w"] = _uniform(ks[16], (128, 1, 3, 3), 128 * 9)
    p["deconvf_b"] = _uniform(ks[17], (1,), 128 * 9)
    return p


def prepare_params(p, embedding_dim=2):
    """Transform PyTorch-layout params into GEMM-ready (NHWC, bf16) matrices."""
    f32, bf16 = jnp.float32, jnp.bfloat16

    def conv_w(w):                      # (Cout, Cin, 3, 3) -> (9*Cin, Cout), tap-major rows
        return jnp.transpose(w, (2, 3, 1, 0)).reshape(-1, w.shape[0]).astype(bf16)

    def row_bias(b):
        return b.astype(f32).reshape(1, -1)

    def deconv_w_subpixel(w):           # (Cin, Cout, 3, 3) -> (4*Cin, 4*Cout)
        Cin, Cout = w.shape[0], w.shape[1]
        weq = jnp.zeros((4, Cin, 4, Cout), f32)
        for di in range(2):
            for dj in range(2):
                for pi in range(2):
                    for pj in range(2):
                        kh, kw = pi - 2 * di + 1, pj - 2 * dj + 1
                        if 0 <= kh <= 2 and 0 <= kw <= 2:
                            weq = weq.at[di * 2 + dj, :, pi * 2 + pj, :].set(w[:, :, kh, kw])
        return weq.reshape(4 * Cin, 4 * Cout).astype(bf16)

    def deconv_b_subpixel(b):           # same bias for every sub-pixel phase
        return jnp.tile(b.astype(f32), 4).reshape(1, -1)

    g = {}
    g["c1_w"], g["c1_b"] = conv_w(p["conv1_w"]), row_bias(p["conv1_b"])
    g["c2_w"], g["c2_b"] = conv_w(p["conv2_w"]), row_bias(p["conv2_b"])
    g["c3_w"], g["c3_b"] = conv_w(p["conv3_w"]), row_bias(p["conv3_b"])

    # enc_fc: PyTorch flattens NCHW (c,h,w); our activations flatten NHWC (h,w,c)
    # -> permute the K axis of the weight accordingly (exact same math).
    w1 = (p["enc_fc_w"].reshape(embedding_dim, 128, 4, 4)
          .transpose(0, 2, 3, 1).reshape(embedding_dim, -1).T)
    g["fc1_w"], g["fc1_b"] = w1.astype(bf16), row_bias(p["enc_fc_b"])

    # dec_fc: permute the output (c,h,w) -> (h,w,c) so it reshapes directly to NHWC.
    w2 = (p["dec_fc_w"].reshape(128, 4, 4, embedding_dim)
          .transpose(1, 2, 0, 3).reshape(-1, embedding_dim).T)
    b2 = p["dec_fc_b"].reshape(128, 4, 4).transpose(1, 2, 0).reshape(1, -1)
    g["fc2_w"], g["fc2_b"] = w2.astype(bf16), b2.astype(f32)

    g["d1_w"], g["d1_b"] = deconv_w_subpixel(p["deconv1_w"]), deconv_b_subpixel(p["deconv1_b"])
    g["d2_w"], g["d2_b"] = deconv_w_subpixel(p["deconv2_w"]), deconv_b_subpixel(p["deconv2_b"])
    g["d3_w"], g["d3_b"] = deconv_w_subpixel(p["deconv3_w"]), deconv_b_subpixel(p["deconv3_b"])

    # deconv_final = ConvTranspose2d(128,1,k=3,s=1,p=1) == regular conv with the
    # spatially flipped kernel.  Per-tap 128->1 channel mix, replicated
    # block-diagonally over the 4 sub-pixel phases of deconv3's GEMM output.
    ktap = jnp.flip(p["deconvf_w"][:, 0, :, :], axis=(1, 2)).reshape(128, 9)
    g["df_kbig"] = jnp.kron(jnp.eye(4, dtype=f32), ktap).astype(bf16)   # (512, 36)
    g["df_b"] = p["deconvf_b"].astype(f32)                              # (1,)
    return g


# ----------------------------------------------------------------------------
# Forward pass (Autoencoder.forward semantics; NCHW in/out, NHWC internally)
# ----------------------------------------------------------------------------
def autoencoder_forward(g, x):
    B = x.shape[0]
    h = jnp.transpose(x, (0, 2, 3, 1))                         # NCHW -> NHWC (C=1: free)

    # ---- Encoder ----
    h = conv3x3_s2_relu(h, g["c1_w"], g["c1_b"])               # (B,16,16, 32)
    h = conv3x3_s2_relu(h, g["c2_w"], g["c2_b"])               # (B, 8, 8, 64)
    h = conv3x3_s2_relu(h, g["c3_w"], g["c3_b"])               # (B, 4, 4,128)

    # ---- Bottleneck: enc_fc -> z -> dec_fc fused in one kernel (z stays in VMEM) ----
    hf = h.reshape(B, 4 * 4 * 128)
    d = fused_gemm(hf, g["fc1_w"], g["fc1_b"], act1="none",
                   w2=g["fc2_w"], b2=g["fc2_b"], act2="none")  # (B, 2048)
    d = d.reshape(B, 4, 4, 128)

    # ---- Decoder ----
    d = deconv3x3_s2_relu(d, g["d1_w"], g["d1_b"])             # (B, 8, 8, 64)
    d = deconv3x3_s2_relu(d, g["d2_w"], g["d2_b"])             # (B,16,16, 32)
    t = deconv3_plus_final_mix(d, g["d3_w"], g["d3_b"], g["df_kbig"])   # (B,32,32,9)

    # Final ConvTranspose2d(128,1,k=3,s=1,p=1) + sigmoid: the channel projection is
    # already done per-tap inside the deconv3 kernel; only the 9-tap spatial sum,
    # bias and sigmoid remain (tiny elementwise epilogue).
    # TODO(synk): fold this 9-tap spatial sum + sigmoid into the deconv3 kernel
    # epilogue as well (needs in-kernel spatial shifts across pixel-shuffle phases).
    Hf, Wf = t.shape[1], t.shape[2]
    tp = jnp.pad(t, ((0, 0), (1, 1), (1, 1), (0, 0)))
    y = jnp.zeros((B, Hf, Wf), jnp.float32)
    for kh in range(3):
        for kw in range(3):
            y = y + tp[:, kh:kh + Hf, kw:kw + Wf, kh * 3 + kw]
    out = jax.nn.sigmoid(y + g["df_b"])                        # (B,32,32) f32
    return out[:, None, :, :]                                  # (B,1,32,32) NCHW


if __name__ == "__main__":
    key = jax.random.PRNGKey(0)
    k_param, k_x = jax.random.split(key)
    params = init_params(k_param, embedding_dim=2)
    gemm_params = prepare_params(params, embedding_dim=2)

    # Module implies 1x32x32 inputs (32 -> 16 -> 8 -> 4 with three stride-2 convs).
    x = jax.random.normal(k_x, (2, 1, 32, 32), dtype=jnp.float32)

    fwd = jax.jit(autoencoder_forward)
    out = jax.block_until_ready(fwd(gemm_params, x))

    assert out.shape == (2, 1, 32, 32), out.shape
    assert out.dtype == jnp.float32
    assert bool(jnp.all(jnp.isfinite(out)))
    assert bool(jnp.all((out >= 0.0) & (out <= 1.0)))  # sigmoid output range
    print("KERNEL_OK")
</pallas_src>

<mosaic_0001>
module attributes {stable_mosaic.version = 11 : i64} {
  func.func @_gemm_kernel(%arg0: i32, %arg1: memref<256x9xbf16, #tpu.memory_space<vmem>>, %arg2: memref<9x32xbf16, #tpu.memory_space<vmem>>, %arg3: memref<1x32xf32, #tpu.memory_space<vmem>>, %arg4: memref<256x32xbf16, #tpu.memory_space<vmem>>) attributes {dimension_semantics = [#tpu.dimension_semantics<parallel>], iteration_bounds = array<i64: 2>, scalar_prefetch = 0 : i64, scratch_operands = 0 : i64, tpu.core_type = #tpu.core_type<tc>, window_params = [{transform_indices = @transform_0, window_bounds = array<i64: 256, 9>}, {pipeline_mode = #tpu.pipeline_mode<synchronous>, transform_indices = @transform_1, window_bounds = array<i64: 9, 32>}, {pipeline_mode = #tpu.pipeline_mode<synchronous>, transform_indices = @transform_2, window_bounds = array<i64: 1, 32>}, {transform_indices = @transform_3, window_bounds = array<i64: 256, 32>}]} {
    %c0 = arith.constant 0 : index
    %c0_0 = arith.constant 0 : index
    %0 = vector.load %arg1[%c0, %c0_0] : memref<256x9xbf16, #tpu.memory_space<vmem>>, vector<256x9xbf16>
    %c0_1 = arith.constant 0 : index
    %c0_2 = arith.constant 0 : index
    %1 = vector.load %arg2[%c0_1, %c0_2] : memref<9x32xbf16, #tpu.memory_space<vmem>>, vector<9x32xbf16>
    %cst = arith.constant dense<0.000000e+00> : vector<256x32xf32>
    %2 = tpu.matmul %0, %1, %cst {dimension_numbers = #tpu.dot_dimension_numbers<[1], [0], [0], [1], [0, 0, 1, 1], [], []>} : vector<256x9xbf16>, vector<9x32xbf16>, vector<256x32xf32> -> vector<256x32xf32>
    %c0_3 = arith.constant 0 : index
    %c0_4 = arith.constant 0 : index
    %3 = vector.load %arg3[%c0_3, %c0_4] : memref<1x32xf32, #tpu.memory_space<vmem>>, vector<1x32xf32>
    %4 = vector.broadcast %3 : vector<1x32xf32> to vector<256x32xf32>
    %5 = arith.addf %2, %4 : vector<256x32xf32>
    %cst_5 = arith.constant 0.000000e+00 : f32
    %6 = vector.broadcast %cst_5 : f32 to vector<256x32xf32>
    %7 = arith.maximumf %5, %6 : vector<256x32xf32>
    %8 = arith.truncf %7 : vector<256x32xf32> to vector<256x32xbf16>
    %c0_6 = arith.constant 0 : index
    %c0_7 = arith.constant 0 : index
    %9 = vector.load %arg4[%c0_6, %c0_7] : memref<256x32xbf16, #tpu.memory_space<vmem>>, vector<256x32xbf16>
    tpu.vector_store %arg4[%c0_6, %c0_7], %8 {strides = array<i32>} : memref<256x32xbf16, #tpu.memory_space<vmem>>, vector<256x32xbf16>,
    return
  }
  func.func @transform_0(%arg0: i32) -> (i32, i32) {
    %c0_i32 = arith.constant 0 : i32
    %c0_i32_0 = arith.constant 0 : i32
    return %arg0, %c0_i32 : i32, i32
  }
  func.func @transform_1(%arg0: i32) -> (i32, i32) {
    %c0_i32 = arith.constant 0 : i32
    %c0_i32_0 = arith.constant 0 : i32
    %c0_i32_1 = arith.constant 0 : i32
    return %c0_i32, %c0_i32_0 : i32, i32
  }
  func.func @transform_2(%arg0: i32) -> (i32, i32) {
    %c0_i32 = arith.constant 0 : i32
    %c0_i32_0 = arith.constant 0 : i32
    %c0_i32_1 = arith.constant 0 : i32
    return %c0_i32, %c0_i32_0 : i32, i32
  }
  func.func @transform_3(%arg0: i32) -> (i32, i32) {
    %c0_i32 = arith.constant 0 : i32
    %c0_i32_0 = arith.constant 0 : i32
    return %arg0, %c0_i32 : i32, i32
  }
}

module attributes {stable_mosaic.version = 11 : i64} {
  func.func @_gemm_kernel(%arg0: i32, %arg1: memref<128x288xbf16, #tpu.memory_space<vmem>>, %arg2: memref<288x64xbf16, #tpu.memory_space<vmem>>, %arg3: memref<1x64xf32, #tpu.memory_space<vmem>>, %arg4: memref<128x64xbf16, #tpu.memory_space<vmem>>) attributes {dimension_semantics = [#tpu.dimension_semantics<parallel>], iteration_bounds = array<i64: 1>, scalar_prefetch = 0 : i64, scratch_operands = 0 : i64, tpu.core_type = #tpu.core_type<tc>, window_params = [{transform_indices = @transform_0, window_bounds = array<i64: 128, 288>}, {pipeline_mode = #tpu.pipeline_mode<synchronous>, transform_indices = @transform_1, window_bounds = array<i64: 288, 64>}, {pipeline_mode = #tpu.pipeline_mode<synchronous>, transform_indices = @transform_2, window_bounds = array<i64: 1, 64>}, {transform_indices = @transform_3, window_bounds = array<i64: 128, 64>}]} {
    %c0 = arith.constant 0 : index
    %c0_0 = arith.constant 0 : index
    %0 = vector.load %arg1[%c0, %c0_0] : memref<128x288xbf16, #tpu.memory_space<vmem>>, vector<128x288xbf16>
    %c0_1 = arith.constant 0 : index
    %c0_2 = arith.constant 0 : index
    %1 = vector.load %arg2[%c0_1, %c0_2] : memref<288x64xbf16, #tpu.memory_space<vmem>>, vector<288x64xbf16>
    %cst = arith.constant dense<0.000000e+00> : vector<128x64xf32>
    %2 = tpu.matmul %0, %1, %cst {dimension_numbers = #tpu.dot_dimension_numbers<[1], [0], [0], [1], [0, 0, 1, 1], [], []>} : vector<128x288xbf16>, vector<288x64xbf16>, vector<128x64xf32> -> vector<128x64xf32>
    %c0_3 = arith.constant 0 : index
    %c0_4 = arith.constant 0 : index
    %3 = vector.load %arg3[%c0_3, %c0_4] : memref<1x64xf32, #tpu.memory_space<vmem>>, vector<1x64xf32>
    %4 = vector.broadcast %3 : vector<1x64xf32> to vector<128x64xf32>
    %5 = arith.addf %2, %4 : vector<128x64xf32>
    %cst_5 = arith.constant 0.000000e+00 : f32
    %6 = vector.broadcast %cst_5 : f32 to vector<128x64xf32>
    %7 = arith.maximumf %5, %6 : vector<128x64xf32>
    %8 = arith.truncf %7 : vector<128x64xf32> to vector<128x64xbf16>
    %c0_6 = arith.constant 0 : index
    %c0_7 = arith.constant 0 : index
    %9 = vector.load %arg4[%c0_6, %c0_7] : memref<128x64xbf16, #tpu.memory_space<vmem>>, vector<128x64xbf16>
    tpu.vector_store %arg4[%c0_6, %c0_7], %8 {strides = array<i32>} : memref<128x64xbf16, #tpu.memory_space<vmem>>, vector<128x64xbf16>,
    return
  }
  func.func @transform_0(%arg0: i32) -> (i32, i32) {
    %c0_i32 = arith.constant 0 : i32
    %c0_i32_0 = arith.constant 0 : i32
    return %arg0, %c0_i32 : i32, i32
  }
  func.func @transform_1(%arg0: i32) -> (i32, i32) {
    %c0_i32 = arith.constant 0 : i32
    %c0_i32_0 = arith.constant 0 : i32
    %c0_i32_1 = arith.constant 0 : i32
    return %c0_i32, %c0_i32_0 : i32, i32
  }
  func.func @transform_2(%arg0: i32) -> (i32, i32) {
    %c0_i32 = arith.constant 0 : i32
    %c0_i32_0 = arith.constant 0 : i32
    %c0_i32_1 = arith.constant 0 : i32
    return %c0_i32, %c0_i32_0 : i32, i32
  }
  func.func @transform_3(%arg0: i32) -> (i32, i32) {
    %c0_i32 = arith.constant 0 : i32
    %c0_i32_0 = arith.constant 0 : i32
    return %arg0, %c0_i32 : i32, i32
  }
}

module attributes {stable_mosaic.version = 11 : i64} {
  func.func @_gemm_kernel(%arg0: i32, %arg1: memref<32x576xbf16, #tpu.memory_space<vmem>>, %arg2: memref<576x128xbf16, #tpu.memory_space<vmem>>, %arg3: memref<1x128xf32, #tpu.memory_space<vmem>>, %arg4: memref<32x128xbf16, #tpu.memory_space<vmem>>) attributes {dimension_semantics = [#tpu.dimension_semantics<parallel>], iteration_bounds = array<i64: 1>, scalar_prefetch = 0 : i64, scratch_operands = 0 : i64, tpu.core_type = #tpu.core_type<tc>, window_params = [{transform_indices = @transform_0, window_bounds = array<i64: 32, 576>}, {pipeline_mode = #tpu.pipeline_mode<synchronous>, transform_indices = @transform_1, window_bounds = array<i64: 576, 128>}, {pipeline_mode = #tpu.pipeline_mode<synchronous>, transform_indices = @transform_2, window_bounds = array<i64: 1, 128>}, {transform_indices = @transform_3, window_bounds = array<i64: 32, 128>}]} {
    %c0 = arith.constant 0 : index
    %c0_0 = arith.constant 0 : index
    %0 = vector.load %arg1[%c0, %c0_0] : memref<32x576xbf16, #tpu.memory_space<vmem>>, vector<32x576xbf16>
    %c0_1 = arith.constant 0 : index
    %c0_2 = arith.constant 0 : index
    %1 = vector.load %arg2[%c0_1, %c0_2] : memref<576x128xbf16, #tpu.memory_space<vmem>>, vector<576x128xbf16>
    %cst = arith.constant dense<0.000000e+00> : vector<32x128xf32>
    %2 = tpu.matmul %0, %1, %cst {dimension_numbers = #tpu.dot_dimension_numbers<[1], [0], [0], [1], [0, 0, 1, 1], [], []>} : vector<32x576xbf16>, vector<576x128xbf16>, vector<32x128xf32> -> vector<32x128xf32>
    %c0_3 = arith.constant 0 : index
    %c0_4 = arith.constant 0 : index
    %3 = vector.load %arg3[%c0_3, %c0_4] : memref<1x128xf32, #tpu.memory_space<vmem>>, vector<1x128xf32>
    %4 = vector.broadcast %3 : vector<1x128xf32> to vector<32x128xf32>
    %5 = arith.addf %2, %4 : vector<32x128xf32>
    %cst_5 = arith.constant 0.000000e+00 : f32
    %6 = vector.broadcast %cst_5 : f32 to vector<32x128xf32>
    %7 = arith.maximumf %5, %6 : vector<32x128xf32>
    %8 = arith.truncf %7 : vector<32x128xf32> to vector<32x128xbf16>
    %c0_6 = arith.constant 0 : index
    %c0_7 = arith.constant 0 : index
    %9 = vector.load %arg4[%c0_6, %c0_7] : memref<32x128xbf16, #tpu.memory_space<vmem>>, vector<32x128xbf16>
    tpu.vector_store %arg4[%c0_6, %c0_7], %8 {strides = array<i32>} : memref<32x128xbf16, #tpu.memory_space<vmem>>, vector<32x128xbf16>,
    return
  }
  func.func @transform_0(%arg0: i32) -> (i32, i32) {
    %c0_i32 = arith.constant 0 : i32
    %c0_i32_0 = arith.constant 0 : i32
    return %arg0, %c0_i32 : i32, i32
  }
  func.func @transform_1(%arg0: i32) -> (i32, i32) {
    %c0_i32 = arith.constant 0 : i32
    %c0_i32_0 = arith.constant 0 : i32
    %c0_i32_1 = arith.constant 0 : i32
    return %c0_i32, %c0_i32_0 : i32, i32
  }
  func.func @transform_2(%arg0: i32) -> (i32, i32) {
    %c0_i32 = arith.constant 0 : i32
    %c0_i32_0 = arith.constant 0 : i32
    %c0_i32_1 = arith.constant 0 : i32
    return %c0_i32, %c0_i32_0 : i32, i32
  }
  func.func @transform_3(%arg0: i32) -> (i32, i32) {
    %c0_i32 = arith.constant 0 : i32
    %c0_i32_0 = arith.constant 0 : i32
    return %arg0, %c0_i32 : i32, i32
  }
}

module attributes {stable_mosaic.version = 11 : i64} {
  func.func @_gemm_chain_kernel(%arg0: i32, %arg1: memref<2x2048xbf16, #tpu.memory_space<vmem>>, %arg2: memref<2048x2xbf16, #tpu.memory_space<vmem>>, %arg3: memref<1x2xf32, #tpu.memory_space<vmem>>, %arg4: memref<2x2048xbf16, #tpu.memory_space<vmem>>, %arg5: memref<1x2048xf32, #tpu.memory_space<vmem>>, %arg6: memref<2x2048xbf16, #tpu.memory_space<vmem>>) attributes {dimension_semantics = [#tpu.dimension_semantics<parallel>], iteration_bounds = array<i64: 1>, scalar_prefetch = 0 : i64, scratch_operands = 0 : i64, tpu.core_type = #tpu.core_type<tc>, window_params = [{transform_indices = @transform_0, window_bounds = array<i64: 2, 2048>}, {pipeline_mode = #tpu.pipeline_mode<synchronous>, transform_indices = @transform_1, window_bounds = array<i64: 2048, 2>}, {pipeline_mode = #tpu.pipeline_mode<synchronous>, transform_indices = @transform_2, window_bounds = array<i64: 1, 2>}, {pipeline_mode = #tpu.pipeline_mode<synchronous>, transform_indices = @transform_3, window_bounds = array<i64: 2, 2048>}, {pipeline_mode = #tpu.pipeline_mode<synchronous>, transform_indices = @transform_4, window_bounds = array<i64: 1, 2048>}, {transform_indices = @transform_5, window_bounds = array<i64: 2, 2048>}]} {
    %c0 = arith.constant 0 : index
    %c0_0 = arith.constant 0 : index
    %0 = vector.load %arg1[%c0, %c0_0] : memref<2x2048xbf16, #tpu.memory_space<vmem>>, vector<2x2048xbf16>
    %c0_1 = arith.constant 0 : index
    %c0_2 = arith.constant 0 : index
    %1 = vector.load %arg2[%c0_1, %c0_2] : memref<2048x2xbf16, #tpu.memory_space<vmem>>, vector<2048x2xbf16>
    %cst = arith.constant dense<0.000000e+00> : vector<2x2xf32>
    %2 = tpu.matmul %0, %1, %cst {dimension_numbers = #tpu.dot_dimension_numbers<[1], [0], [0], [1], [0, 0, 1, 1], [], []>} : vector<2x2048xbf16>, vector<2048x2xbf16>, vector<2x2xf32> -> vector<2x2xf32>
    %c0_3 = arith.constant 0 : index
    %c0_4 = arith.constant 0 : index
    %3 = vector.load %arg3[%c0_3, %c0_4] : memref<1x2xf32, #tpu.memory_space<vmem>>, vector<1x2xf32>
    %4 = vector.broadcast %3 : vector<1x2xf32> to vector<2x2xf32>
    %5 = arith.addf %2, %4 : vector<2x2xf32>
    %6 = arith.truncf %5 : vector<2x2xf32> to vector<2x2xbf16>
    %c0_5 = arith.constant 0 : index
    %c0_6 = arith.constant 0 : index
    %7 = vector.load %arg4[%c0_5, %c0_6] : memref<2x2048xbf16, #tpu.memory_space<vmem>>, vector<2x2048xbf16>
    %cst_7 = arith.constant dense<0.000000e+00> : vector<2x2048xf32>
    %8 = tpu.matmul %6, %7, %cst_7 {dimension_numbers = #tpu.dot_dimension_numbers<[1], [0], [0], [1], [0, 0, 1, 1], [], []>} : vector<2x2xbf16>, vector<2x2048xbf16>, vector<2x2048xf32> -> vector<2x2048xf32>
    %c0_8 = arith.constant 0 : index
    %c0_9 = arith.constant 0 : index
    %9 = vector.load %arg5[%c0_8, %c0_9] : memref<1x2048xf32, #tpu.memory_space<vmem>>, vector<1x2048xf32>
    %10 = vector.broadcast %9 : vector<1x2048xf32> to vector<2x2048xf32>
    %11 = arith.addf %8, %10 : vector<2x2048xf32>
    %12 = arith.truncf %11 : vector<2x2048xf32> to vector<2x2048xbf16>
    %c0_10 = arith.constant 0 : index
    %c0_11 = arith.constant 0 : index
    %13 = vector.load %arg6[%c0_10, %c0_11] : memref<2x2048xbf16, #tpu.memory_space<vmem>>, vector<2x2048xbf16>
    tpu.vector_store %arg6[%c0_10, %c0_11], %12 {strides = array<i32>} : memref<2x2048xbf16, #tpu.memory_space<vmem>>, vector<2x2048xbf16>,
    return
  }
  func.func @transform_0(%arg0: i32) -> (i32, i32) {
    %c0_i32 = arith.constant 0 : i32
    %c0_i32_0 = arith.constant 0 : i32
    return %arg0, %c0_i32 : i32, i32
  }
  func.func @transform_1(%arg0: i32) -> (i32, i32) {
    %c0_i32 = arith.constant 0 : i32
    %c0_i32_0 = arith.constant 0 : i32
    %c0_i32_1 = arith.constant 0 : i32
    return %c0_i32, %c0_i32_0 : i32, i32
  }
  func.func @transform_2(%arg0: i32) -> (i32, i32) {
    %c0_i32 = arith.constant 0 : i32
    %c0_i32_0 = arith.constant 0 : i32
    %c0_i32_1 = arith.constant 0 : i32
    return %c0_i32, %c0_i32_0 : i32, i32
  }
  func.func @transform_3(%arg0: i32) -> (i32, i32) {
    %c0_i32 = arith.constant 0 : i32
    %c0_i32_0 = arith.constant 0 : i32
    %c0_i32_1 = arith.constant 0 : i32
    return %c0_i32, %c0_i32_0 : i32, i32
  }
  func.func @transform_4(%arg0: i32) -> (i32, i32) {
    %c0_i32 = arith.constant 0 : i32
    %c0_i32_0 = arith.constant 0 : i32
    %c0_i32_1 = arith.constant 0 : i32
    return %c0_i32, %c0_i32_0 : i32, i32
  }
  func.func @transform_5(%arg0: i32) -> (i32, i32) {
    %c0_i32 = arith.constant 0 : i32
    %c0_i32_0 = arith.constant 0 : i32
    return %arg0, %c0_i32 : i32, i32
  }
}

module attributes {stable_mosaic.version = 11 : i64} {
  func.func @_gemm_kernel(%arg0: i32, %arg1: memref<32x512xbf16, #tpu.memory_space<vmem>>, %arg2: memref<512x256xbf16, #tpu.memory_space<vmem>>, %arg3: memref<1x256xf32, #tpu.memory_space<vmem>>, %arg4: memref<32x256xbf16, #tpu.memory_space<vmem>>) attributes {dimension_semantics = [#tpu.dimension_semantics<parallel>], iteration_bounds = array<i64: 1>, scalar_prefetch = 0 : i64, scratch_operands = 0 : i64, tpu.core_type = #tpu.core_type<tc>, window_params = [{transform_indices = @transform_0, window_bounds = array<i64: 32, 512>}, {pipeline_mode = #tpu.pipeline_mode<synchronous>, transform_indices = @transform_1, window_bounds = array<i64: 512, 256>}, {pipeline_mode = #tpu.pipeline_mode<synchronous>, transform_indices = @transform_2, window_bounds = array<i64: 1, 256>}, {transform_indices = @transform_3, window_bounds = array<i64: 32, 256>}]} {
    %c0 = arith.constant 0 : index
    %c0_0 = arith.constant 0 : index
    %0 = vector.load %arg1[%c0, %c0_0] : memref<32x512xbf16, #tpu.memory_space<vmem>>, vector<32x512xbf16>
    %c0_1 = arith.constant 0 : index
    %c0_2 = arith.constant 0 : index
    %1 = vector.load %arg2[%c0_1, %c0_2] : memref<512x256xbf16, #tpu.memory_space<vmem>>, vector<512x256xbf16>
    %cst = arith.constant dense<0.000000e+00> : vector<32x256xf32>
    %2 = tpu.matmul %0, %1, %cst {dimension_numbers = #tpu.dot_dimension_numbers<[1], [0], [0], [1], [0, 0, 1, 1], [], []>} : vector<32x512xbf16>, vector<512x256xbf16>, vector<32x256xf32> -> vector<32x256xf32>
    %c0_3 = arith.constant 0 : index
    %c0_4 = arith.constant 0 : index
    %3 = vector.load %arg3[%c0_3, %c0_4] : memref<1x256xf32, #tpu.memory_space<vmem>>, vector<1x256xf32>
    %4 = vector.broadcast %3 : vector<1x256xf32> to vector<32x256xf32>
    %5 = arith.addf %2, %4 : vector<32x256xf32>
    %cst_5 = arith.constant 0.000000e+00 : f32
    %6 = vector.broadcast %cst_5 : f32 to vector<32x256xf32>
    %7 = arith.maximumf %5, %6 : vector<32x256xf32>
    %8 = arith.truncf %7 : vector<32x256xf32> to vector<32x256xbf16>
    %c0_6 = arith.constant 0 : index
    %c0_7 = arith.constant 0 : index
    %9 = vector.load %arg4[%c0_6, %c0_7] : memref<32x256xbf16, #tpu.memory_space<vmem>>, vector<32x256xbf16>
    tpu.vector_store %arg4[%c0_6, %c0_7], %8 {strides = array<i32>} : memref<32x256xbf16, #tpu.memory_space<vmem>>, vector<32x256xbf16>,
    return
  }
  func.func @transform_0(%arg0: i32) -> (i32, i32) {
    %c0_i32 = arith.constant 0 : i32
    %c0_i32_0 = arith.constant 0 : i32
    return %arg0, %c0_i32 : i32, i32
  }
  func.func @transform_1(%arg0: i32) -> (i32, i32) {
    %c0_i32 = arith.constant 0 : i32
    %c0_i32_0 = arith.constant 0 : i32
    %c0_i32_1 = arith.constant 0 : i32
    return %c0_i32, %c0_i32_0 : i32, i32
  }
  func.func @transform_2(%arg0: i32) -> (i32, i32) {
    %c0_i32 = arith.constant 0 : i32
    %c0_i32_0 = arith.constant 0 : i32
    %c0_i32_1 = arith.constant 0 : i32
    return %c0_i32, %c0_i32_0 : i32, i32
  }
  func.func @transform_3(%arg0: i32) -> (i32, i32) {
    %c0_i32 = arith.constant 0 : i32
    %c0_i32_0 = arith.constant 0 : i32
    return %arg0, %c0_i32 : i32, i32
  }
}

module attributes {stable_mosaic.version = 11 : i64} {
  func.func @_gemm_kernel(%arg0: i32, %arg1: memref<128x256xbf16, #tpu.memory_space<vmem>>, %arg2: memref<256x128xbf16, #tpu.memory_space<vmem>>, %arg3: memref<1x128xf32, #tpu.memory_space<vmem>>, %arg4: memref<128x128xbf16, #tpu.memory_space<vmem>>) attributes {dimension_semantics = [#tpu.dimension_semantics<parallel>], iteration_bounds = array<i64: 1>, scalar_prefetch = 0 : i64, scratch_operands = 0 : i64, tpu.core_type = #tpu.core_type<tc>, window_params = [{transform_indices = @transform_0, window_bounds = array<i64: 128, 256>}, {pipeline_mode = #tpu.pipeline_mode<synchronous>, transform_indices = @transform_1, window_bounds = array<i64: 256, 128>}, {pipeline_mode = #tpu.pipeline_mode<synchronous>, transform_indices = @transform_2, window_bounds = array<i64: 1, 128>}, {transform_indices = @transform_3, window_bounds = array<i64: 128, 128>}]} {
    %c0 = arith.constant 0 : index
    %c0_0 = arith.constant 0 : index
    %0 = vector.load %arg1[%c0, %c0_0] : memref<128x256xbf16, #tpu.memory_space<vmem>>, vector<128x256xbf16>
    %c0_1 = arith.constant 0 : index
    %c0_2 = arith.constant 0 : index
    %1 = vector.load %arg2[%c0_1, %c0_2] : memref<256x128xbf16, #tpu.memory_space<vmem>>, vector<256x128xbf16>
    %cst = arith.constant dense<0.000000e+00> : vector<128x128xf32>
    %2 = tpu.matmul %0, %1, %cst {dimension_numbers = #tpu.dot_dimension_numbers<[1], [0], [0], [1], [0, 0, 1, 1], [], []>} : vector<128x256xbf16>, vector<256x128xbf16>, vector<128x128xf32> -> vector<128x128xf32>
    %c0_3 = arith.constant 0 : index
    %c0_4 = arith.constant 0 : index
    %3 = vector.load %arg3[%c0_3, %c0_4] : memref<1x128xf32, #tpu.memory_space<vmem>>, vector<1x128xf32>
    %4 = vector.broadcast %3 : vector<1x128xf32> to vector<128x128xf32>
    %5 = arith.addf %2, %4 : vector<128x128xf32>
    %cst_5 = arith.constant 0.000000e+00 : f32
    %6 = vector.broadcast %cst_5 : f32 to vector<128x128xf32>
    %7 = arith.maximumf %5, %6 : vector<128x128xf32>
    %8 = arith.truncf %7 : vector<128x128xf32> to vector<128x128xbf16>
    %c0_6 = arith.constant 0 : index
    %c0_7 = arith.constant 0 : index
    %9 = vector.load %arg4[%c0_6, %c0_7] : memref<128x128xbf16, #tpu.memory_space<vmem>>, vector<128x128xbf16>
    tpu.vector_store %arg4[%c0_6, %c0_7], %8 {strides = array<i32>} : memref<128x128xbf16, #tpu.memory_space<vmem>>, vector<128x128xbf16>,
    return
  }
  func.func @transform_0(%arg0: i32) -> (i32, i32) {
    %c0_i32 = arith.constant 0 : i32
    %c0_i32_0 = arith.constant 0 : i32
    return %arg0, %c0_i32 : i32, i32
  }
  func.func @transform_1(%arg0: i32) -> (i32, i32) {
    %c0_i32 = arith.constant 0 : i32
    %c0_i32_0 = arith.constant 0 : i32
    %c0_i32_1 = arith.constant 0 : i32
    return %c0_i32, %c0_i32_0 : i32, i32
  }
  func.func @transform_2(%arg0: i32) -> (i32, i32) {
    %c0_i32 = arith.constant 0 : i32
    %c0_i32_0 = arith.constant 0 : i32
    %c0_i32_1 = arith.constant 0 : i32
    return %c0_i32, %c0_i32_0 : i32, i32
  }
  func.func @transform_3(%arg0: i32) -> (i32, i32) {
    %c0_i32 = arith.constant 0 : i32
    %c0_i32_0 = arith.constant 0 : i32
    return %arg0, %c0_i32 : i32, i32
  }
}

module attributes {stable_mosaic.version = 11 : i64} {
  func.func @_gemm_chain_kernel(%arg0: i32, %arg1: memref<256x128xbf16, #tpu.memory_space<vmem>>, %arg2: memref<128x512xbf16, #tpu.memory_space<vmem>>, %arg3: memref<1x512xf32, #tpu.memory_space<vmem>>, %arg4: memref<512x36xbf16, #tpu.memory_space<vmem>>, %arg5: memref<1x36xf32, #tpu.memory_space<vmem>>, %arg6: memref<256x36xf32, #tpu.memory_space<vmem>>) attributes {dimension_semantics = [#tpu.dimension_semantics<parallel>], iteration_bounds = array<i64: 2>, scalar_prefetch = 0 : i64, scratch_operands = 0 : i64, tpu.core_type = #tpu.core_type<tc>, window_params = [{transform_indices = @transform_0, window_bounds = array<i64: 256, 128>}, {pipeline_mode = #tpu.pipeline_mode<synchronous>, transform_indices = @transform_1, window_bounds = array<i64: 128, 512>}, {pipeline_mode = #tpu.pipeline_mode<synchronous>, transform_indices = @transform_2, window_bounds = array<i64: 1, 512>}, {pipeline_mode = #tpu.pipeline_mode<synchronous>, transform_indices = @transform_3, window_bounds = array<i64: 512, 36>}, {pipeline_mode = #tpu.pipeline_mode<synchronous>, transform_indices = @transform_4, window_bounds = array<i64: 1, 36>}, {transform_indices = @transform_5, window_bounds = array<i64: 256, 36>}]} {
    %c0 = arith.constant 0 : index
    %c0_0 = arith.constant 0 : index
    %0 = vector.load %arg1[%c0, %c0_0] : memref<256x128xbf16, #tpu.memory_space<vmem>>, vector<256x128xbf16>
    %c0_1 = arith.constant 0 : index
    %c0_2 = arith.constant 0 : index
    %1 = vector.load %arg2[%c0_1, %c0_2] : memref<128x512xbf16, #tpu.memory_space<vmem>>, vector<128x512xbf16>
    %cst = arith.constant dense<0.000000e+00> : vector<256x512xf32>
    %2 = tpu.matmul %0, %1, %cst {dimension_numbers = #tpu.dot_dimension_numbers<[1], [0], [0], [1], [0, 0, 1, 1], [], []>} : vector<256x128xbf16>, vector<128x512xbf16>, vector<256x512xf32> -> vector<256x512xf32>
    %c0_3 = arith.constant 0 : index
    %c0_4 = arith.constant 0 : index
    %3 = vector.load %arg3[%c0_3, %c0_4] : memref<1x512xf32, #tpu.memory_space<vmem>>, vector<1x512xf32>
    %4 = vector.broadcast %3 : vector<1x512xf32> to vector<256x512xf32>
    %5 = arith.addf %2, %4 : vector<256x512xf32>
    %cst_5 = arith.constant 0.000000e+00 : f32
    %6 = vector.broadcast %cst_5 : f32 to vector<256x512xf32>
    %7 = arith.maximumf %5, %6 : vector<256x512xf32>
    %8 = arith.truncf %7 : vector<256x512xf32> to vector<256x512xbf16>
    %c0_6 = arith.constant 0 : index
    %c0_7 = arith.constant 0 : index
    %9 = vector.load %arg4[%c0_6, %c0_7] : memref<512x36xbf16, #tpu.memory_space<vmem>>, vector<512x36xbf16>
    %cst_8 = arith.constant dense<0.000000e+00> : vector<256x36xf32>
    %10 = tpu.matmul %8, %9, %cst_8 {dimension_numbers = #tpu.dot_dimension_numbers<[1], [0], [0], [1], [0, 0, 1, 1], [], []>} : vector<256x512xbf16>, vector<512x36xbf16>, vector<256x36xf32> -> vector<256x36xf32>
    %c0_9 = arith.constant 0 : index
    %c0_10 = arith.constant 0 : index
    %11 = vector.load %arg5[%c0_9, %c0_10] : memref<1x36xf32, #tpu.memory_space<vmem>>, vector<1x36xf32>
    %12 = vector.broadcast %11 : vector<1x36xf32> to vector<256x36xf32>
    %13 = arith.addf %10, %12 : vector<256x36xf32>
    %c0_11 = arith.constant 0 : index
    %c0_12 = arith.constant 0 : index
    %14 = vector.load %arg6[%c0_11, %c0_12] : memref<256x36xf32, #tpu.memory_space<vmem>>, vector<256x36xf32>
    tpu.vector_store %arg6[%c0_11, %c0_12], %13 {strides = array<i32>} : memref<256x36xf32, #tpu.memory_space<vmem>>, vector<256x36xf32>,
    return
  }
  func.func @transform_0(%arg0: i32) -> (i32, i32) {
    %c0_i32 = arith.constant 0 : i32
    %c0_i32_0 = arith.constant 0 : i32
    return %arg0, %c0_i32 : i32, i32
  }
  func.func @transform_1(%arg0: i32) -> (i32, i32) {
    %c0_i32 = arith.constant 0 : i32
    %c0_i32_0 = arith.constant 0 : i32
    %c0_i32_1 = arith.constant 0 : i32
    return %c0_i32, %c0_i32_0 : i32, i32
  }
  func.func @transform_2(%arg0: i32) -> (i32, i32) {
    %c0_i32 = arith.constant 0 : i32
    %c0_i32_0 = arith.constant 0 : i32
    %c0_i32_1 = arith.constant 0 : i32
    return %c0_i32, %c0_i32_0 : i32, i32
  }
  func.func @transform_3(%arg0: i32) -> (i32, i32) {
    %c0_i32 = arith.constant 0 : i32
    %c0_i32_0 = arith.constant 0 : i32
    %c0_i32_1 = arith.constant 0 : i32
    return %c0_i32, %c0_i32_0 : i32, i32
  }
  func.func @transform_4(%arg0: i32) -> (i32, i32) {
    %c0_i32 = arith.constant 0 : i32
    %c0_i32_0 = arith.constant 0 : i32
    %c0_i32_1 = arith.constant 0 : i32
    return %c0_i32, %c0_i32_0 : i32, i32
  }
  func.func @transform_5(%arg0: i32) -> (i32, i32) {
    %c0_i32 = arith.constant 0 : i32
    %c0_i32_0 = arith.constant 0 : i32
    return %arg0, %c0_i32 : i32, i32
  }
}

</mosaic_0001>

<llo_original>
// kernel: autoencoder_forward.7
$region0: #{autoencoder_forward.7}
  #allocation0 [shape = 'u32[]', space=smem, size = 0x4, offset = 0x4, fixed_abs, tag = 'smem constant byte address 0x4 - core index']
  #allocation1 [shape = 'u32[72,128]{1,0:T(1,128)}', space=vmem, size = 0x9000, scoped, tag = 'internal scratch']
  %s0 = inlined_call_operand.vmem [shape: bf16[512,9], index: 0, kind: input, shape index: {}]
  %s1 = inlined_call_operand.vmem [shape: bf16[9,32], index: 1, kind: input, shape index: {}]
  %s2 = inlined_call_operand.vmem [shape: f32[1,32], index: 2, kind: input, shape index: {}]
  %s3 = inlined_call_operand.vmem [shape: bf16[512,32], index: 3, kind: output, shape index: {}]
  %s4 = sld [smem:[#allocation0]]
  $region45: #{autoencoder_forward.7} parent=0
    _
  %s6 = ssub.s32 1, %s4
  %s7 = scalar_select 0, %s6, %s4
  loop: start=0, step=1, limit=4
  $region2: #{autoencoder_forward.7} parent=0 // loop_pre_header
    _
  $region3: #{autoencoder_forward.7} parent=0 // loop_header
    %s9 = sphi 0, %s13
    %p10 = scmp.ge.s32.totalorder %s9, 4
    %s19 = sphi 0, %s21
    %s22 = sphi 0, %s19
    %s23 = sphi 0, %s22
    %s39 = sphi 0, %s23
    %s43 = sphi 0, %s43
    %s45 = sphi 0, %s43
    %s46 = sphi 0, %s45
    %s60 = sphi 0, %s46
    %s64 = sphi 0, %s64
    %s66 = sphi 0, %s64
    %s67 = sphi 0, %s66
    %s81 = sphi 0, %s67
    %s87 = sphi 0, %s89
    %s90 = sphi 0, %s87
    %s91 = sphi 0, %s90
    %s107 = sphi 0, %s91
  $region4: #{autoencoder_forward.7} parent=0 // loop_header_branch
    %12 = sbr.rel (%p10) target = $region8
  $region5: #{autoencoder_forward.7} parent=0 // loop_body
    %s14 = ssub.s32 %s9, 1
    %s15 = ssub.s32 %s9, 2
    %s16 = sadd.s32 %s9, 1
    %s17 = ssub.s32 %s9, %s16
    %p18 = scmp.eq.s32.totalorder %s17, 0
    %s20 = sadd.s32 %s19, 1
    %s21 = scalar_select %p18, %s19, %s20
    %p24 = pneg %p18
    %p25 = scmp.eq.s32.totalorder %s9, 1
    %p26 = por %p24, %p25
    %p27 = scmp.ne.s32.totalorder %s19, %s22
    %p28 = scmp.eq.s32.totalorder %s9, 0
    %p29 = por %p27, %p28
    %p30 = scmp.ne.s32.totalorder %s19, %s22
    %p31 = scmp.eq.s32.totalorder %s14, 1
    %p32 = por %p30, %p31
    %p33 = scmp.ne.s32.totalorder %s22, %s23
    %p34 = scmp.eq.s32.totalorder %s14, 0
    %p35 = por %p33, %p34
    %p36 = scmp.ne.s32.totalorder %s22, %s23
    %p37 = scmp.eq.s32.totalorder %s15, 1
    %p38 = por %p36, %p37
    %p40 = scmp.ne.s32.totalorder %s23, %s39
    %p41 = scmp.eq.s32.totalorder %s15, 0
    %p42 = por %p40, %p41
    %s44 = sadd.s32 %s43, 1
    %p47 = scmp.eq.s32.totalorder %s9, 1
    %p48 = scmp.ne.s32.totalorder %s43, %s45
    %p49 = scmp.eq.s32.totalorder %s9, 0
    %p50 = por %p48, %p49
    %p51 = scmp.ne.s32.totalorder %s43, %s45
    %p52 = scmp.eq.s32.totalorder %s14, 1
    %p53 = por %p51, %p52
    %p54 = scmp.ne.s32.totalorder %s45, %s46
    %p55 = scmp.eq.s32.totalorder %s14, 0
    %p56 = por %p54, %p55
    %p57 = scmp.ne.s32.totalorder %s45, %s46
    %p58 = scmp.eq.s32.totalorder %s15, 1
    %p59 = por %p57, %p58
    %p61 = scmp.ne.s32.totalorder %s46, %s60
    %p62 = scmp.eq.s32.totalorder %s15, 0
    %p63 = por %p61, %p62
    %s65 = sadd.s32 %s64, 1
    %p68 = scmp.eq.s32.totalorder %s9, 1
    %p69 = scmp.ne.s32.totalorder %s64, %s66
    %p70 = scmp.eq.s32.totalorder %s9, 0
    %p71 = por %p69, %p70
    %p72 = scmp.ne.s32.totalorder %s64, %s66
    %p73 = scmp.eq.s32.totalorder %s14, 1
    %p74 = por %p72, %p73
    %p75 = scmp.ne.s32.totalorder %s66, %s67
    %p76 = scmp.eq.s32.totalorder %s14, 0
    %p77 = por %p75, %p76
    %p78 = scmp.ne.s32.totalorder %s66, %s67
    %p79 = scmp.eq.s32.totalorder %s15, 1
    %p80 = por %p78, %p79
    %p82 = scmp.ne.s32.totalorder %s67, %s81
    %p83 = scmp.eq.s32.totalorder %s15, 0
    %p84 = por %p82, %p83
    %s85 = ssub.s32 %s9, %s16
    %p86 = scmp.eq.s32.totalorder %s85, 0
    %s88 = sadd.s32 %s87, 1
    %s89 = scalar_select %p86, %s87, %s88
    %p92 = pneg %p86
    %p93 = scmp.eq.s32.totalorder %s9, 1
    %p94 = por %p92, %p93
    %p95 = scmp.ne.s32.totalorder %s87, %s90
    %p96 = scmp.eq.s32.totalorder %s9, 0
    %p97 = por %p95, %p96
    %p98 = scmp.ne.s32.totalorder %s87, %s90
    %p99 = scmp.eq.s32.totalorder %s14, 1
    %p100 = por %p98, %p99
    %p101 = scmp.ne.s32.totalorder %s90, %s91
    %p102 = scmp.eq.s32.totalorder %s14, 0
    %p103 = por %p101, %p102
    %p104 = scmp.ne.s32.totalorder %s90, %s91
    %p105 = scmp.eq.s32.totalorder %s15, 1
    %p106 = por %p104, %p105
    %p108 = scmp.ne.s32.totalorder %s91, %s107
    %p109 = scmp.eq.s32.totalorder %s15, 0
    %p110 = por %p108, %p109
    %p111 = scmp.le.s32.totalorder 1, %s9
    %p112 = scmp.lt.s32.totalorder %s9, 3
    %p113 = pnand %p111, %p112
    %p114 = pneg %p113
    // Predicated region
    $region9: #{autoencoder_forward.7} parent=5 // pred_check
      _
    $region10: #{autoencoder_forward.7} parent=5 // pred_check_branch
      %116 = sbr.rel (%p113) target = $region12
    $region11: #{autoencoder_forward.7} parent=5 // pred_region
      %s117 = ssub.s32 %s9, 1
      // Predicated region
      $region13: #{autoencoder_forward.7} parent=11 // pred_check
        %p118 = pneg %p56
      $region14: #{autoencoder_forward.7} parent=11 // pred_check_branch
        %120 = sbr.rel (%p118) target = $region16
      $region15: #{autoencoder_forward.7} parent=11 // pred_region
        _
      $region16: #{autoencoder_forward.7} parent=11 // pred_fallthru
        _
      // Predicated region
      $region17: #{autoencoder_forward.7} parent=11 // pred_check
        %p121 = pneg %p77
      $region18: #{autoencoder_forward.7} parent=11 // pred_check_branch
        %123 = sbr.rel (%p121) target = $region20
      $region19: #{autoencoder_forward.7} parent=11 // pred_region
        _
      $region20: #{autoencoder_forward.7} parent=11 // pred_fallthru
        _
    $region12: #{autoencoder_forward.7} parent=5 // pred_fallthru
      _
    %p124 = scmp.lt.s32.totalorder %s9, 2
    // Predicated region
    $region21: #{autoencoder_forward.7} parent=5 // pred_check
      %p125 = pneg %p124
    $region22: #{autoencoder_forward.7} parent=5 // pred_check_branch
      %127 = sbr.rel (%p125) target = $region24
    $region23: #{autoencoder_forward.7} parent=5 // pred_region
      // Predicated region
      $region25: #{autoencoder_forward.7} parent=23 // pred_check
        %p128 = pneg %p29
      $region26: #{autoencoder_forward.7} parent=23 // pred_check_branch
        %130 = sbr.rel (%p128) target = $region28
      $region27: #{autoencoder_forward.7} parent=23 // pred_region
        %s131 = smul.u32 32, %s9
        %p132 = scmp.lt.s32.totalorder %s131, 63
        %s133 = scalar_select %p132, %s131, 63
        %s134 = smul.addr %s133, 4
        %s135 = scalar_lea.vmem %s0, %s134
        %s136 = smul.u32 32, %s9
      $region28: #{autoencoder_forward.7} parent=23 // pred_fallthru
        _
    $region24: #{autoencoder_forward.7} parent=5 // pred_fallthru
      _
    %p137 = scmp.le.s32.totalorder 1, %s9
    %p138 = scmp.lt.s32.totalorder %s9, 3
    %p139 = pnand %p137, %p138
    %p140 = pneg %p139
    // Predicated region
    $region29: #{autoencoder_forward.7} parent=5 // pred_check
      _
    $region30: #{autoencoder_forward.7} parent=5 // pred_check_branch
      %142 = sbr.rel (%p139) target = $region32
    $region31: #{autoencoder_forward.7} parent=5 // pred_region
      %s143 = ssub.s32 %s9, 1
      %s144 = smul.u32 32, %s14
      %p145 = scmp.lt.s32.totalorder %s144, 63
      %s146 = scalar_select %p145, %s144, 63
      %s147 = smul.addr %s146, 4
      %s148 = scalar_lea.vmem %s0, %s147
      %p149 = pneg %p35
      %p150 = pneg %p32
      %p151 = pneg %p56
      %p152 = pneg %p53
      %p153 = pneg %p77
      %p154 = pneg %p74
      %p155 = pneg %p103
      %p156 = pneg %p100
      %s157 = smul.u32 32, %s14
      %p158 = scmp.lt.s32.totalorder %s157, 63
      %s159 = scalar_select %p158, %s157, 63
      %s160 = smul.addr %s159, 4
      %s161 = scalar_lea.vmem %s3, %s160
      %s162 = smul.u32 32, %s14
      %p163 = scmp.lt.s32.totalorder %s162, 63
      %s164 = scalar_select %p163, %s162, 63
      %s165 = smul.addr %s164, 4
      %s166 = scalar_lea.vmem %s0, %s165
      %s167 = smul.u32 32, %s14
      %s168 = smul.u32 32, %s14
      %p169 = scmp.lt.s32.totalorder %s168, 63
      %s170 = scalar_select %p169, %s168, 63
      %s171 = smul.addr %s170, 4
      %s172 = scalar_lea.vmem %s3, %s171
      %s173 = smul.u32 32, %s14
      %v175 = vld [vmem:[%s166] sm:$0xf]
      %v176 = vld [vmem:[%s166 + $0x4] sm:$0xf]
      %v177 = vld [vmem:[%s166 + $0x8] sm:$0xf]
      %v178 = vld [vmem:[%s166 + $0xc] sm:$0xf]
      %v179 = vld [vmem:[%s166 + $0x10] sm:$0xf]
      %v180 = vld [vmem:[%s166 + $0x14] sm:$0xf]
      %v181 = vld [vmem:[%s166 + $0x18] sm:$0xf]
      %v182 = vld [vmem:[%s166 + $0x1c] sm:$0xf]
      %v183 = vld [vmem:[%s166 + $0x20] sm:$0xf]
      %v184 = vld [vmem:[%s166 + $0x24] sm:$0xf]
      %v185 = vld [vmem:[%s166 + $0x28] sm:$0xf]
      %v186 = vld [vmem:[%s166 + $0x2c] sm:$0xf]
      %v187 = vld [vmem:[%s166 + $0x30] sm:$0xf]
      %v188 = vld [vmem:[%s166 + $0x34] sm:$0xf]
      %v189 = vld [vmem:[%s166 + $0x38] sm:$0xf]
      %v190 = vld [vmem:[%s166 + $0x3c] sm:$0xf]
      %v191 = vld [vmem:[%s166 + $0x40] sm:$0xf]
      %v192 = vld [vmem:[%s166 + $0x44] sm:$0xf]
      %v193 = vld [vmem:[%s166 + $0x48] sm:$0xf]
      %v194 = vld [vmem:[%s166 + $0x4c] sm:$0xf]
      %v195 = vld [vmem:[%s166 + $0x50] sm:$0xf]
      %v196 = vld [vmem:[%s166 + $0x54] sm:$0xf]
      %v197 = vld [vmem:[%s166 + $0x58] sm:$0xf]
      %v198 = vld [vmem:[%s166 + $0x5c] sm:$0xf]
      %v199 = vld [vmem:[%s166 + $0x60] sm:$0xf]
      %v200 = vld [vmem:[%s166 + $0x64] sm:$0xf]
      %v201 = vld [vmem:[%s166 + $0x68] sm:$0xf]
      %v202 = vld [vmem:[%s166 + $0x6c] sm:$0xf]
      %v203 = vld [vmem:[%s166 + $0x70] sm:$0xf]
      %v204 = vld [vmem:[%s166 + $0x74] sm:$0xf]
      %v205 = vld [vmem:[%s166 + $0x78] sm:$0xf]
      %v206 = vld [vmem:[%s166 + $0x7c] sm:$0xf]
      %v207 = vld [vmem:[%s1] sm:$0xf]
      %v208 = vld [vmem:[%s1 + $0x4] sm:$0x1]
      %v209 = vld [vmem:[%s2] sm:$0x1]
      %v211 = vperm.slane %v209, 0
      %v245 = vunpack.c.l.b16 %v175
      %v246 = vunpack.c.l.b16 %v176
      %v247 = vunpack.c.l.b16 %v177
      %v248 = vunpack.c.l.b16 %v178
      %v249 = vunpack.c.l.b16 %v179
      %v250 = vunpack.c.l.b16 %v180
      %v251 = vunpack.c.l.b16 %v181
      %v252 = vunpack.c.l.b16 %v182
      %v253 = vunpack.c.l.b16 %v183
      %v254 = vunpack.c.l.b16 %v184
      %v255 = vunpack.c.l.b16 %v185
      %v256 = vunpack.c.l.b16 %v186
      %v257 = vunpack.c.l.b16 %v187
      %v258 = vunpack.c.l.b16 %v188
      %v259 = vunpack.c.l.b16 %v189
      %v260 = vunpack.c.l.b16 %v190
      %v261 = vunpack.c.l.b16 %v191
      %v262 = vunpack.c.l.b16 %v192
      %v263 = vunpack.c.l.b16 %v193
      %v264 = vunpack.c.l.b16 %v194
      %v265 = vunpack.c.l.b16 %v195
      %v266 = vunpack.c.l.b16 %v196
      %v267 = vunpack.c.l.b16 %v197
      %v268 = vunpack.c.l.b16 %v198
      %v269 = vunpack.c.l.b16 %v199
      %v270 = vunpack.c.l.b16 %v200
      %v271 = vunpack.c.l.b16 %v201
      %v272 = vunpack.c.l.b16 %v202
      %v273 = vunpack.c.l.b16 %v203
      %v274 = vunpack.c.l.b16 %v204
      %v275 = vunpack.c.l.b16 %v205
      %v276 = vunpack.c.l.b16 %v206
      %v277 = vpack.c.b16 %v246, %v245
      %v278 = vpack.c.b16 %v248, %v247
      %v279 = vpack.c.b16 %v250, %v249
      %v280 = vpack.c.b16 %v252, %v251
      %v281 = vpack.c.b16 %v254, %v253
      %v282 = vpack.c.b16 %v256, %v255
      %v283 = vpack.c.b16 %v258, %v257
      %v284 = vpack.c.b16 %v260, %v259
      %v285 = vpack.c.b16 %v262, %v261
      %v286 = vpack.c.b16 %v264, %v263
      %v287 = vpack.c.b16 %v266, %v265
      %v288 = vpack.c.b16 %v268, %v267
      %v289 = vpack.c.b16 %v270, %v269
      %v290 = vpack.c.b16 %v272, %v271
      %v291 = vpack.c.b16 %v274, %v273
      %v292 = vpack.c.b16 %v276, %v275
      %v295 = vunpack.c.l.b16 %v207
      %v296 = vunpack.c.l.b16 %v208
      %v297 = vpack.c.b16 %v296, %v295
      %vm298 = vcmask 72704
      %v300 = vsel %vm298, %v277, 0
      %v303 = vsel %vm298, %v278, 0
      %v306 = vsel %vm298, %v279, 0
      %v309 = vsel %vm298, %v280, 0
      %v312 = vsel %vm298, %v281, 0
      %v315 = vsel %vm298, %v282, 0
      %v318 = vsel %vm298, %v283, 0
      %v321 = vsel %vm298, %v284, 0
      %v324 = vsel %vm298, %v285, 0
      %v327 = vsel %vm298, %v286, 0
      %v330 = vsel %vm298, %v287, 0
      %v333 = vsel %vm298, %v288, 0
      %v336 = vsel %vm298, %v289, 0
      %v339 = vsel %vm298, %v290, 0
      %v342 = vsel %vm298, %v291, 0
      %v345 = vsel %vm298, %v292, 0
      %vm347 = vcmask 1043456
      %vm348 = vcmask 1044480
      %v349 = vsel %vm347, 4294967295, 65535
      %v350 = vsel %vm348, %v349, 0
      %v352 = vand.u32 %v297, %v350
      %354 = vmatpush.bf16.msra.mxu0 0
      %355 = vmatpush.bf16.msra.mxu0 0
      %356 = vmatpush.bf16.msra.mxu0 0
      %357 = vmatpush.bf16.msra.mxu0 0
      %358 = vmatpush.bf16.msra.mxu0 0
      %359 = vmatpush.bf16.msra.mxu0 0
      %360 = vmatpush.bf16.msra.mxu0 0
      %361 = vmatpush.bf16.msra.mxu0 %v352
      %362 = vmatmul.bf16.gmra.mxu0 %v300
      %v363 = vpop.f32.mrf.mxu0
      %v364 = vadd.f32 %v211, %v363
      %v365 = vpop.f32.mrf.mxu0
      %v366 = vadd.f32 %v211, %v365
      %367 = vmatmul.bf16.gmra.mxu0 %v303
      %v368 = vpop.f32.mrf.mxu0
      %v369 = vadd.f32 %v211, %v368
      %v370 = vpop.f32.mrf.mxu0
      %v371 = vadd.f32 %v211, %v370
      %372 = vmatmul.bf16.gmra.mxu0 %v306
      %v373 = vpop.f32.mrf.mxu0
      %v374 = vadd.f32 %v211, %v373
      %v375 = vpop.f32.mrf.mxu0
      %v376 = vadd.f32 %v211, %v375
      %377 = vmatmul.bf16.gmra.mxu0 %v309
      %v378 = vpop.f32.mrf.mxu0
      %v379 = vadd.f32 %v211, %v378
      %v380 = vpop.f32.mrf.mxu0
      %v381 = vadd.f32 %v211, %v380
      %382 = vmatmul.bf16.gmra.mxu0 %v312
      %v383 = vpop.f32.mrf.mxu0
      %v384 = vadd.f32 %v211, %v383
      %v385 = vpop.f32.mrf.mxu0
      %v386 = vadd.f32 %v211, %v385
      %387 = vmatmul.bf16.gmra.mxu0 %v315
      %v388 = vpop.f32.mrf.mxu0
      %v389 = vadd.f32 %v211, %v388
      %v390 = vpop.f32.mrf.mxu0
      %v391 = vadd.f32 %v211, %v390
      %392 = vmatmul.bf16.gmra.mxu0 %v318
      %v393 = vpop.f32.mrf.mxu0
      %v394 = vadd.f32 %v211, %v393
      %v395 = vpop.f32.mrf.mxu0
      %v396 = vadd.f32 %v211, %v395
      %397 = vmatmul.bf16.gmra.mxu0 %v321
      %v398 = vpop.f32.mrf.mxu0
      %v399 = vadd.f32 %v211, %v398
      %v400 = vpop.f32.mrf.mxu0
      %v401 = vadd.f32 %v211, %v400
      %402 = vmatmul.bf16.gmra.mxu0 %v324
      %v403 = vpop.f32.mrf.mxu0
      %v404 = vadd.f32 %v211, %v403
      %v405 = vpop.f32.mrf.mxu0
      %v406 = vadd.f32 %v211, %v405
      %407 = vmatmul.bf16.gmra.mxu0 %v327
      %v408 = vpop.f32.mrf.mxu0
      %v409 = vadd.f32 %v211, %v408
      %v410 = vpop.f32.mrf.mxu0
      %v411 = vadd.f32 %v211, %v410
      %412 = vmatmul.bf16.gmra.mxu0 %v330
      %v413 = vpop.f32.mrf.mxu0
      %v414 = vadd.f32 %v211, %v413
      %v415 = vpop.f32.mrf.mxu0
      %v416 = vadd.f32 %v211, %v415
      %417 = vmatmul.bf16.gmra.mxu0 %v333
      %v418 = vpop.f32.mrf.mxu0
      %v419 = vadd.f32 %v211, %v418
      %v420 = vpop.f32.mrf.mxu0
      %v421 = vadd.f32 %v211, %v420
      %422 = vmatmul.bf16.gmra.mxu0 %v336
      %v423 = vpop.f32.mrf.mxu0
      %v424 = vadd.f32 %v211, %v423
      %v425 = vpop.f32.mrf.mxu0
      %v426 = vadd.f32 %v211, %v425
      %427 = vmatmul.bf16.gmra.mxu0 %v339
      %v428 = vpop.f32.mrf.mxu0
      %v429 = vadd.f32 %v211, %v428
      %v430 = vpop.f32.mrf.mxu0
      %v431 = vadd.f32 %v211, %v430
      %432 = vmatmul.bf16.gmra.mxu0 %v342
      %v433 = vpop.f32.mrf.mxu0
      %v434 = vadd.f32 %v211, %v433
      %v435 = vpop.f32.mrf.mxu0
      %v436 = vadd.f32 %v211, %v435
      %437 = vmatmul.bf16.gmra.mxu0 %v345
      %v438 = vpop.f32.mrf.mxu0
      %v439 = vadd.f32 %v211, %v438
      %v440 = vpop.f32.mrf.mxu0
      %v441 = vadd.f32 %v211, %v440
      %442 = vdwg.mxu0
      %v443 = vmax.f32 %v364, 0.0
      %v444 = vmax.f32 %v366, 0.0
      %v445 = vmax.f32 %v369, 0.0
      %v446 = vmax.f32 %v371, 0.0
      %v447 = vmax.f32 %v374, 0.0
      %v448 = vmax.f32 %v376, 0.0
      %v449 = vmax.f32 %v379, 0.0
      %v450 = vmax.f32 %v381, 0.0
      %v451 = vmax.f32 %v384, 0.0
      %v452 = vmax.f32 %v386, 0.0
      %v453 = vmax.f32 %v389, 0.0
      %v454 = vmax.f32 %v391, 0.0
      %v455 = vmax.f32 %v394, 0.0
      %v456 = vmax.f32 %v396, 0.0
      %v457 = vmax.f32 %v399, 0.0
      %v458 = vmax.f32 %v401, 0.0
      %v459 = vmax.f32 %v404, 0.0
      %v460 = vmax.f32 %v406, 0.0
      %v461 = vmax.f32 %v409, 0.0
      %v462 = vmax.f32 %v411, 0.0
      %v463 = vmax.f32 %v414, 0.0
      %v464 = vmax.f32 %v416, 0.0
      %v465 = vmax.f32 %v419, 0.0
      %v466 = vmax.f32 %v421, 0.0
      %v467 = vmax.f32 %v424, 0.0
      %v468 = vmax.f32 %v426, 0.0
      %v469 = vmax.f32 %v429, 0.0
      %v470 = vmax.f32 %v431, 0.0
      %v471 = vmax.f32 %v434, 0.0
      %v472 = vmax.f32 %v436, 0.0
      %v473 = vmax.f32 %v439, 0.0
      %v474 = vmax.f32 %v441, 0.0
      %v475 = vpack.c.bf16 %v443, %v443
      %v476 = vpack.c.bf16 %v444, %v444
      %v477 = vpack.c.bf16 %v445, %v445
      %v478 = vpack.c.bf16 %v446, %v446
      %v479 = vpack.c.bf16 %v447, %v447
      %v480 = vpack.c.bf16 %v448, %v448
      %v481 = vpack.c.bf16 %v449, %v449
      %v482 = vpack.c.bf16 %v450, %v450
      %v483 = vpack.c.bf16 %v451, %v451
      %v484 = vpack.c.bf16 %v452, %v452
      %v485 = vpack.c.bf16 %v453, %v453
      %v486 = vpack.c.bf16 %v454, %v454
      %v487 = vpack.c.bf16 %v455, %v455
      %v488 = vpack.c.bf16 %v456, %v456
      %v489 = vpack.c.bf16 %v457, %v457
      %v490 = vpack.c.bf16 %v458, %v458
      %v491 = vpack.c.bf16 %v459, %v459
      %v492 = vpack.c.bf16 %v460, %v460
      %v493 = vpack.c.bf16 %v461, %v461
      %v494 = vpack.c.bf16 %v462, %v462
      %v495 = vpack.c.bf16 %v463, %v463
      %v496 = vpack.c.bf16 %v464, %v464
      %v497 = vpack.c.bf16 %v465, %v465
      %v498 = vpack.c.bf16 %v466, %v466
      %v499 = vpack.c.bf16 %v467, %v467
      %v500 = vpack.c.bf16 %v468, %v468
      %v501 = vpack.c.bf16 %v469, %v469
      %v502 = vpack.c.bf16 %v470, %v470
      %v503 = vpack.c.bf16 %v471, %v471
      %v504 = vpack.c.bf16 %v472, %v472
      %v505 = vpack.c.bf16 %v473, %v473
      %v506 = vpack.c.bf16 %v474, %v474
      %vm507 = vcmask 257024
      %508 = vst.msk [vmem:[%s172] sm:$0xf] %vm507, %v475
      %509 = vst.msk [vmem:[%s172 + $0x4] sm:$0xf] %vm507, %v476
      %510 = vst.msk [vmem:[%s172 + $0x8] sm:$0xf] %vm507, %v477
      %511 = vst.msk [vmem:[%s172 + $0xc] sm:$0xf] %vm507, %v478
      %512 = vst.msk [vmem:[%s172 + $0x10] sm:$0xf] %vm507, %v479
      %513 = vst.msk [vmem:[%s172 + $0x14] sm:$0xf] %vm507, %v480
      %514 = vst.msk [vmem:[%s172 + $0x18] sm:$0xf] %vm507, %v481
      %515 = vst.msk [vmem:[%s172 + $0x1c] sm:$0xf] %vm507, %v482
      %516 = vst.msk [vmem:[%s172 + $0x20] sm:$0xf] %vm507, %v483
      %517 = vst.msk [vmem:[%s172 + $0x24] sm:$0xf] %vm507, %v484
      %518 = vst.msk [vmem:[%s172 + $0x28] sm:$0xf] %vm507, %v485
      %519 = vst.msk [vmem:[%s172 + $0x2c] sm:$0xf] %vm507, %v486
      %520 = vst.msk [vmem:[%s172 + $0x30] sm:$0xf] %vm507, %v487
      %521 = vst.msk [vmem:[%s172 + $0x34] sm:$0xf] %vm507, %v488
      %522 = vst.msk [vmem:[%s172 + $0x38] sm:$0xf] %vm507, %v489
      %523 = vst.msk [vmem:[%s172 + $0x3c] sm:$0xf] %vm507, %v490
      %524 = vst.msk [vmem:[%s172 + $0x40] sm:$0xf] %vm507, %v491
      %525 = vst.msk [vmem:[%s172 + $0x44] sm:$0xf] %vm507, %v492
      %526 = vst.msk [vmem:[%s172 + $0x48] sm:$0xf] %vm507, %v493
      %527 = vst.msk [vmem:[%s172 + $0x4c] sm:$0xf] %vm507, %v494
      %528 = vst.msk [vmem:[%s172 + $0x50] sm:$0xf] %vm507, %v495
      %529 = vst.msk [vmem:[%s172 + $0x54] sm:$0xf] %vm507, %v496
      %530 = vst.msk [vmem:[%s172 + $0x58] sm:$0xf] %vm507, %v497
      %531 = vst.msk [vmem:[%s172 + $0x5c] sm:$0xf] %vm507, %v498
      %532 = vst.msk [vmem:[%s172 + $0x60] sm:$0xf] %vm507, %v499
      %533 = vst.msk [vmem:[%s172 + $0x64] sm:$0xf] %vm507, %v500
      %534 = vst.msk [vmem:[%s172 + $0x68] sm:$0xf] %vm507, %v501
      %535 = vst.msk [vmem:[%s172 + $0x6c] sm:$0xf] %vm507, %v502
      %536 = vst.msk [vmem:[%s172 + $0x70] sm:$0xf] %vm507, %v503
      %537 = vst.msk [vmem:[%s172 + $0x74] sm:$0xf] %vm507, %v504
      %538 = vst.msk [vmem:[%s172 + $0x78] sm:$0xf] %vm507, %v505
      %539 = vst.msk [vmem:[%s172 + $0x7c] sm:$0xf] %vm507, %v506
      %s540 = smul.u32 32, %s14
      %p541 = scmp.lt.s32.totalorder %s540, 63
      %s542 = scalar_select %p541, %s540, 63
      %s543 = smul.addr %s542, 4
      %s544 = scalar_lea.vmem %s3, %s543
      // Predicated region
      $region33: #{autoencoder_forward.7} parent=31 // pred_check
        %p545 = pneg %p100
      $region34: #{autoencoder_forward.7} parent=31 // pred_check_branch
        %547 = sbr.rel (%p545) target = $region36
      $region35: #{autoencoder_forward.7} parent=31 // pred_region
        %s548 = smul.u32 32, %s14
      $region36: #{autoencoder_forward.7} parent=31 // pred_fallthru
        _
    $region32: #{autoencoder_forward.7} parent=5 // pred_fallthru
      _
    %p549 = scmp.le.s32.totalorder 2, %s9
    // Predicated region
    $region37: #{autoencoder_forward.7} parent=5 // pred_check
      %p550 = pneg %p549
    $region38: #{autoencoder_forward.7} parent=5 // pred_check_branch
      %552 = sbr.rel (%p550) target = $region40
    $region39: #{autoencoder_forward.7} parent=5 // pred_region
      %s553 = ssub.s32 %s9, 2
      // Predicated region
      $region41: #{autoencoder_forward.7} parent=39 // pred_check
        %p554 = pneg %p106
      $region42: #{autoencoder_forward.7} parent=39 // pred_check_branch
        %556 = sbr.rel (%p554) target = $region44
      $region43: #{autoencoder_forward.7} parent=39 // pred_region
        %s557 = smul.u32 32, %s15
        %p558 = scmp.lt.s32.totalorder %s557, 63
        %s559 = scalar_select %p558, %s557, 63
        %s560 = smul.addr %s559, 4
        %s561 = scalar_lea.vmem %s3, %s560
      $region44: #{autoencoder_forward.7} parent=39 // pred_fallthru
        _
    $region40: #{autoencoder_forward.7} parent=5 // pred_fallthru
      _
  $region6: #{autoencoder_forward.7} parent=0 // loop_footer
    %s13 = sadd.s32 1, %s9
  $region7: #{autoencoder_forward.7} parent=0 // loop_footer_branch
    %8 = sbr.rel target = $region3
  $region8: #{autoencoder_forward.7} parent=0 // loop_exit
    _

// kernel: autoencoder_forward.8
$region0: #{autoencoder_forward.8}
  #allocation0 [shape = 'u32[]', space=smem, size = 0x4, offset = 0x4, fixed_abs, tag = 'smem constant byte address 0x4 - core index']
  #allocation1 [shape = 'u32[72,128]{1,0:T(1,128)}', space=vmem, size = 0x9000, scoped, tag = 'internal scratch']
  %s0 = inlined_call_operand.vmem [shape: bf16[128,288], index: 0, kind: input, shape index: {}]
  %s1 = inlined_call_operand.vmem [shape: bf16[288,64], index: 1, kind: input, shape index: {}]
  %s2 = inlined_call_operand.vmem [shape: f32[1,64], index: 2, kind: input, shape index: {}]
  %s3 = inlined_call_operand.vmem [shape: bf16[128,64], index: 3, kind: output, shape index: {}]
  %s4 = sld [smem:[#allocation0]]
  $region22: #{autoencoder_forward.8} parent=0
    _
  %s6 = ssub.s32 1, %s4
  %s7 = scalar_select 0, %s6, %s4
  // Predicated region
  $region2: #{autoencoder_forward.8} parent=0 // pred_check
    _
  $region3: #{autoencoder_forward.8} parent=0 // pred_check_branch
    %9 = sbr.rel (0) target = $region5
  $region4: #{autoencoder_forward.8} parent=0 // pred_region
    _
  $region5: #{autoencoder_forward.8} parent=0 // pred_fallthru
    _
  // Predicated region
  $region6: #{autoencoder_forward.8} parent=0 // pred_check
    _
  $region7: #{autoencoder_forward.8} parent=0 // pred_check_branch
    %11 = sbr.rel (0) target = $region9
  $region8: #{autoencoder_forward.8} parent=0 // pred_region
    _
  $region9: #{autoencoder_forward.8} parent=0 // pred_fallthru
    _
  // Predicated region
  $region10: #{autoencoder_forward.8} parent=0 // pred_check
    _
  $region11: #{autoencoder_forward.8} parent=0 // pred_check_branch
    %13 = sbr.rel (0) target = $region13
  $region12: #{autoencoder_forward.8} parent=0 // pred_region
    _
  $region13: #{autoencoder_forward.8} parent=0 // pred_fallthru
    _
  %v15 = vld [vmem:[%s0] sm:$0xff]
  %v16 = vld [vmem:[%s0 + $0x8] sm:$0xf]
  %v17 = vld [vmem:[%s0 + $0xc] sm:$0xff]
  %v18 = vld [vmem:[%s0 + $0x14] sm:$0xf]
  %v19 = vld [vmem:[%s0 + $0x18] sm:$0xff]
  %v20 = vld [vmem:[%s0 + $0x20] sm:$0xf]
  %v21 = vld [vmem:[%s0 + $0x24] sm:$0xff]
  %v22 = vld [vmem:[%s0 + $0x2c] sm:$0xf]
  %v23 = vld [vmem:[%s0 + $0x30] sm:$0xff]
  %v24 = vld [vmem:[%s0 + $0x38] sm:$0xf]
  %v25 = vld [vmem:[%s0 + $0x3c] sm:$0xff]
  %v26 = vld [vmem:[%s0 + $0x44] sm:$0xf]
  %v27 = vld [vmem:[%s0 + $0x48] sm:$0xff]
  %v28 = vld [vmem:[%s0 + $0x50] sm:$0xf]
  %v29 = vld [vmem:[%s0 + $0x54] sm:$0xff]
  %v30 = vld [vmem:[%s0 + $0x5c] sm:$0xf]
  %v31 = vld [vmem:[%s0 + $0x60] sm:$0xff]
  %v32 = vld [vmem:[%s0 + $0x68] sm:$0xf]
  %v33 = vld [vmem:[%s0 + $0x6c] sm:$0xff]
  %v34 = vld [vmem:[%s0 + $0x74] sm:$0xf]
  %v35 = vld [vmem:[%s0 + $0x78] sm:$0xff]
  %v36 = vld [vmem:[%s0 + $0x80] sm:$0xf]
  %v37 = vld [vmem:[%s0 + $0x84] sm:$0xff]
  %v38 = vld [vmem:[%s0 + $0x8c] sm:$0xf]
  %v39 = vld [vmem:[%s0 + $0x90] sm:$0xff]
  %v40 = vld [vmem:[%s0 + $0x98] sm:$0xf]
  %v41 = vld [vmem:[%s0 + $0x9c] sm:$0xff]
  %v42 = vld [vmem:[%s0 + $0xa4] sm:$0xf]
  %v43 = vld [vmem:[%s0 + $0xa8] sm:$0xff]
  %v44 = vld [vmem:[%s0 + $0xb0] sm:$0xf]
  %v45 = vld [vmem:[%s0 + $0xb4] sm:$0xff]
  %v46 = vld [vmem:[%s0 + $0xbc] sm:$0xf]
  %v47 = vld [vmem:[%s1] sm:$0xf]
  %v48 = vld [vmem:[%s1 + $0x4] sm:$0xf]
  %v49 = vld [vmem:[%s1 + $0x8] sm:$0xf]
  %v50 = vld [vmem:[%s1 + $0xc] sm:$0xf]
  %v51 = vld [vmem:[%s1 + $0x10] sm:$0xf]
  %v52 = vld [vmem:[%s1 + $0x14] sm:$0xf]
  %v53 = vld [vmem:[%s1 + $0x18] sm:$0xf]
  %v54 = vld [vmem:[%s1 + $0x1c] sm:$0xf]
  %v55 = vld [vmem:[%s1 + $0x20] sm:$0xf]
  %v56 = vld [vmem:[%s1 + $0x24] sm:$0xf]
  %v57 = vld [vmem:[%s1 + $0x28] sm:$0xf]
  %v58 = vld [vmem:[%s1 + $0x2c] sm:$0xf]
  %v59 = vld [vmem:[%s1 + $0x30] sm:$0xf]
  %v60 = vld [vmem:[%s1 + $0x34] sm:$0xf]
  %v61 = vld [vmem:[%s1 + $0x38] sm:$0xf]
  %v62 = vld [vmem:[%s1 + $0x3c] sm:$0xf]
  %v63 = vld [vmem:[%s1 + $0x40] sm:$0xf]
  %v64 = vld [vmem:[%s1 + $0x44] sm:$0xf]
  %v65 = vld [vmem:[%s1 + $0x48] sm:$0xf]
  %v66 = vld [vmem:[%s1 + $0x4c] sm:$0xf]
  %v67 = vld [vmem:[%s1 + $0x50] sm:$0xf]
  %v68 = vld [vmem:[%s1 + $0x54] sm:$0xf]
  %v69 = vld [vmem:[%s1 + $0x58] sm:$0xf]
  %v70 = vld [vmem:[%s1 + $0x5c] sm:$0xf]
  %v71 = vld [vmem:[%s1 + $0x60] sm:$0xf]
  %v72 = vld [vmem:[%s1 + $0x64] sm:$0xf]
  %v73 = vld [vmem:[%s1 + $0x68] sm:$0xf]
  %v74 = vld [vmem:[%s1 + $0x6c] sm:$0xf]
  %v75 = vld [vmem:[%s1 + $0x70] sm:$0xf]
  %v76 = vld [vmem:[%s1 + $0x74] sm:$0xf]
  %v77 = vld [vmem:[%s1 + $0x78] sm:$0xf]
  %v78 = vld [vmem:[%s1 + $0x7c] sm:$0xf]
  %v79 = vld [vmem:[%s1 + $0x80] sm:$0xf]
  %v80 = vld [vmem:[%s1 + $0x84] sm:$0xf]
  %v81 = vld [vmem:[%s1 + $0x88] sm:$0xf]
  %v82 = vld [vmem:[%s1 + $0x8c] sm:$0xf]
  %v83 = vld [vmem:[%s2] sm:$0x1]
  %v85 = vperm.slane %v83, 0
  %v119 = vunpack.c.l.b16 %v15
  %v120 = vunpack.c.h.b16 %v15
  %v121 = vunpack.c.l.b16 %v16
  %v122 = vunpack.c.l.b16 %v17
  %v123 = vunpack.c.h.b16 %v17
  %v124 = vunpack.c.l.b16 %v18
  %v125 = vunpack.c.l.b16 %v19
  %v126 = vunpack.c.h.b16 %v19
  %v127 = vunpack.c.l.b16 %v20
  %v128 = vunpack.c.l.b16 %v21
  %v129 = vunpack.c.h.b16 %v21
  %v130 = vunpack.c.l.b16 %v22
  %v131 = vunpack.c.l.b16 %v23
  %v132 = vunpack.c.h.b16 %v23
  %v133 = vunpack.c.l.b16 %v24
  %v134 = vunpack.c.l.b16 %v25
  %v135 = vunpack.c.h.b16 %v25
  %v136 = vunpack.c.l.b16 %v26
  %v137 = vunpack.c.l.b16 %v27
  %v138 = vunpack.c.h.b16 %v27
  %v139 = vunpack.c.l.b16 %v28
  %v140 = vunpack.c.l.b16 %v29
  %v141 = vunpack.c.h.b16 %v29
  %v142 = vunpack.c.l.b16 %v30
  %v143 = vunpack.c.l.b16 %v31
  %v144 = vunpack.c.h.b16 %v31
  %v145 = vunpack.c.l.b16 %v32
  %v146 = vunpack.c.l.b16 %v33
  %v147 = vunpack.c.h.b16 %v33
  %v148 = vunpack.c.l.b16 %v34
  %v149 = vunpack.c.l.b16 %v35
  %v150 = vunpack.c.h.b16 %v35
  %v151 = vunpack.c.l.b16 %v36
  %v152 = vunpack.c.l.b16 %v37
  %v153 = vunpack.c.h.b16 %v37
  %v154 = vunpack.c.l.b16 %v38
  %v155 = vunpack.c.l.b16 %v39
  %v156 = vunpack.c.h.b16 %v39
  %v157 = vunpack.c.l.b16 %v40
  %v158 = vunpack.c.l.b16 %v41
  %v159 = vunpack.c.h.b16 %v41
  %v160 = vunpack.c.l.b16 %v42
  %v161 = vunpack.c.l.b16 %v43
  %v162 = vunpack.c.h.b16 %v43
  %v163 = vunpack.c.l.b16 %v44
  %v164 = vunpack.c.l.b16 %v45
  %v165 = vunpack.c.h.b16 %v45
  %v166 = vunpack.c.l.b16 %v46
  %v167 = vpack.c.b16 %v122, %v119
  %v168 = vpack.c.b16 %v123, %v120
  %v169 = vpack.c.b16 %v124, %v121
  %v170 = vpack.c.b16 %v128, %v125
  %v171 = vpack.c.b16 %v129, %v126
  %v172 = vpack.c.b16 %v130, %v127
  %v173 = vpack.c.b16 %v134, %v131
  %v174 = vpack.c.b16 %v135, %v132
  %v175 = vpack.c.b16 %v136, %v133
  %v176 = vpack.c.b16 %v140, %v137
  %v177 = vpack.c.b16 %v141, %v138
  %v178 = vpack.c.b16 %v142, %v139
  %v179 = vpack.c.b16 %v146, %v143
  %v180 = vpack.c.b16 %v147, %v144
  %v181 = vpack.c.b16 %v148, %v145
  %v182 = vpack.c.b16 %v152, %v149
  %v183 = vpack.c.b16 %v153, %v150
  %v184 = vpack.c.b16 %v154, %v151
  %v185 = vpack.c.b16 %v158, %v155
  %v186 = vpack.c.b16 %v159, %v156
  %v187 = vpack.c.b16 %v160, %v157
  %v188 = vpack.c.b16 %v164, %v161
  %v189 = vpack.c.b16 %v165, %v162
  %v190 = vpack.c.b16 %v166, %v163
  %v243 = vunpack.c.l.b16 %v47
  %v244 = vunpack.c.l.b16 %v48
  %v245 = vunpack.c.l.b16 %v49
  %v246 = vunpack.c.l.b16 %v50
  %v247 = vunpack.c.l.b16 %v51
  %v248 = vunpack.c.l.b16 %v52
  %v249 = vunpack.c.l.b16 %v53
  %v250 = vunpack.c.l.b16 %v54
  %v251 = vunpack.c.l.b16 %v55
  %v252 = vunpack.c.l.b16 %v56
  %v253 = vunpack.c.l.b16 %v57
  %v254 = vunpack.c.l.b16 %v58
  %v255 = vunpack.c.l.b16 %v59
  %v256 = vunpack.c.l.b16 %v60
  %v257 = vunpack.c.l.b16 %v61
  %v258 = vunpack.c.l.b16 %v62
  %v259 = vunpack.c.l.b16 %v63
  %v260 = vunpack.c.l.b16 %v64
  %v261 = vunpack.c.l.b16 %v65
  %v262 = vunpack.c.l.b16 %v66
  %v263 = vunpack.c.l.b16 %v67
  %v264 = vunpack.c.l.b16 %v68
  %v265 = vunpack.c.l.b16 %v69
  %v266 = vunpack.c.l.b16 %v70
  %v267 = vunpack.c.l.b16 %v71
  %v268 = vunpack.c.l.b16 %v72
  %v269 = vunpack.c.l.b16 %v73
  %v270 = vunpack.c.l.b16 %v74
  %v271 = vunpack.c.l.b16 %v75
  %v272 = vunpack.c.l.b16 %v76
  %v273 = vunpack.c.l.b16 %v77
  %v274 = vunpack.c.l.b16 %v78
  %v275 = vunpack.c.l.b16 %v79
  %v276 = vunpack.c.l.b16 %v80
  %v277 = vunpack.c.l.b16 %v81
  %v278 = vunpack.c.l.b16 %v82
  %v279 = vpack.c.b16 %v244, %v243
  %v280 = vpack.c.b16 %v246, %v245
  %v281 = vpack.c.b16 %v248, %v247
  %v282 = vpack.c.b16 %v250, %v249
  %v283 = vpack.c.b16 %v252, %v251
  %v284 = vpack.c.b16 %v254, %v253
  %v285 = vpack.c.b16 %v256, %v255
  %v286 = vpack.c.b16 %v258, %v257
  %v287 = vpack.c.b16 %v260, %v259
  %v288 = vpack.c.b16 %v262, %v261
  %v289 = vpack.c.b16 %v264, %v263
  %v290 = vpack.c.b16 %v266, %v265
  %v291 = vpack.c.b16 %v268, %v267
  %v292 = vpack.c.b16 %v270, %v269
  %v293 = vpack.c.b16 %v272, %v271
  %v294 = vpack.c.b16 %v274, %v273
  %v295 = vpack.c.b16 %v276, %v275
  %v296 = vpack.c.b16 %v278, %v277
  %vm315 = vcmask 261120
  %v317 = vsel %vm315, %v169, 0
  %v320 = vsel %vm315, %v172, 0
  %v323 = vsel %vm315, %v175, 0
  %v326 = vsel %vm315, %v178, 0
  %v329 = vsel %vm315, %v181, 0
  %v332 = vsel %vm315, %v184, 0
  %v335 = vsel %vm315, %v187, 0
  %v338 = vsel %vm315, %v190, 0
  %340 = vmatpush.bf16.msra.mxu0 %v286
  %341 = vmatpush.bf16.msra.mxu0 %v285
  %342 = vmatpush.bf16.msra.mxu0 %v284
  %343 = vmatpush.bf16.msra.mxu0 %v283
  %344 = vmatpush.bf16.msra.mxu0 %v282
  %345 = vmatpush.bf16.msra.mxu0 %v281
  %346 = vmatpush.bf16.msra.mxu0 %v280
  %347 = vmatpush.bf16.msra.mxu0 %v279
  %348 = vmatmul.bf16.gmra.mxu0 %v167
  %v349 = vpop.f32.mrf.mxu0
  %v350 = vadd.f32 %v85, %v349
  %v351 = vpop.f32.mrf.mxu0
  %v352 = vadd.f32 %v85, %v351
  %353 = vmatmul.bf16.gmra.mxu0 %v170
  %v354 = vpop.f32.mrf.mxu0
  %v355 = vadd.f32 %v85, %v354
  %v356 = vpop.f32.mrf.mxu0
  %v357 = vadd.f32 %v85, %v356
  %358 = vmatmul.bf16.gmra.mxu0 %v173
  %v359 = vpop.f32.mrf.mxu0
  %v360 = vadd.f32 %v85, %v359
  %v361 = vpop.f32.mrf.mxu0
  %v362 = vadd.f32 %v85, %v361
  %363 = vmatmul.bf16.gmra.mxu0 %v176
  %v364 = vpop.f32.mrf.mxu0
  %v365 = vadd.f32 %v85, %v364
  %v366 = vpop.f32.mrf.mxu0
  %v367 = vadd.f32 %v85, %v366
  %368 = vmatmul.bf16.gmra.mxu0 %v179
  %v369 = vpop.f32.mrf.mxu0
  %v370 = vadd.f32 %v85, %v369
  %v371 = vpop.f32.mrf.mxu0
  %v372 = vadd.f32 %v85, %v371
  %373 = vmatmul.bf16.gmra.mxu0 %v182
  %v374 = vpop.f32.mrf.mxu0
  %v375 = vadd.f32 %v85, %v374
  %v376 = vpop.f32.mrf.mxu0
  %v377 = vadd.f32 %v85, %v376
  %378 = vmatmul.bf16.gmra.mxu0 %v185
  %v379 = vpop.f32.mrf.mxu0
  %v380 = vadd.f32 %v85, %v379
  %v381 = vpop.f32.mrf.mxu0
  %v382 = vadd.f32 %v85, %v381
  %383 = vmatmul.bf16.gmra.mxu0 %v188
  %v384 = vpop.f32.mrf.mxu0
  %v385 = vadd.f32 %v85, %v384
  %v386 = vpop.f32.mrf.mxu0
  %v387 = vadd.f32 %v85, %v386
  %388 = vdwg.mxu0
  %389 = vmatpush.bf16.msra.mxu0 %v294
  %390 = vmatpush.bf16.msra.mxu0 %v293
  %391 = vmatpush.bf16.msra.mxu0 %v292
  %392 = vmatpush.bf16.msra.mxu0 %v291
  %393 = vmatpush.bf16.msra.mxu0 %v290
  %394 = vmatpush.bf16.msra.mxu0 %v289
  %395 = vmatpush.bf16.msra.mxu0 %v288
  %396 = vmatpush.bf16.msra.mxu0 %v287
  %397 = vmatmul.bf16.gmra.mxu0 %v168
  %v398 = vpop.f32.mrf.mxu0
  %v399 = vadd.f32 %v350, %v398
  %v400 = vpop.f32.mrf.mxu0
  %v401 = vadd.f32 %v352, %v400
  %402 = vmatmul.bf16.gmra.mxu0 %v171
  %v403 = vpop.f32.mrf.mxu0
  %v404 = vadd.f32 %v355, %v403
  %v405 = vpop.f32.mrf.mxu0
  %v406 = vadd.f32 %v357, %v405
  %407 = vmatmul.bf16.gmra.mxu0 %v174
  %v408 = vpop.f32.mrf.mxu0
  %v409 = vadd.f32 %v360, %v408
  %v410 = vpop.f32.mrf.mxu0
  %v411 = vadd.f32 %v362, %v410
  %412 = vmatmul.bf16.gmra.mxu0 %v177
  %v413 = vpop.f32.mrf.mxu0
  %v414 = vadd.f32 %v365, %v413
  %v415 = vpop.f32.mrf.mxu0
  %v416 = vadd.f32 %v367, %v415
  %417 = vmatmul.bf16.gmra.mxu0 %v180
  %v418 = vpop.f32.mrf.mxu0
  %v419 = vadd.f32 %v370, %v418
  %v420 = vpop.f32.mrf.mxu0
  %v421 = vadd.f32 %v372, %v420
  %422 = vmatmul.bf16.gmra.mxu0 %v183
  %v423 = vpop.f32.mrf.mxu0
  %v424 = vadd.f32 %v375, %v423
  %v425 = vpop.f32.mrf.mxu0
  %v426 = vadd.f32 %v377, %v425
  %427 = vmatmul.bf16.gmra.mxu0 %v186
  %v428 = vpop.f32.mrf.mxu0
  %v429 = vadd.f32 %v380, %v428
  %v430 = vpop.f32.mrf.mxu0
  %v431 = vadd.f32 %v382, %v430
  %432 = vmatmul.bf16.gmra.mxu0 %v189
  %v433 = vpop.f32.mrf.mxu0
  %v434 = vadd.f32 %v385, %v433
  %v435 = vpop.f32.mrf.mxu0
  %v436 = vadd.f32 %v387, %v435
  %437 = vdwg.mxu0
  %438 = vmatpush.bf16.msra.mxu0 0
  %439 = vmatpush.bf16.msra.mxu0 0
  %440 = vmatpush.bf16.msra.mxu0 0
  %441 = vmatpush.bf16.msra.mxu0 0
  %442 = vmatpush.bf16.msra.mxu0 0
  %443 = vmatpush.bf16.msra.mxu0 0
  %444 = vmatpush.bf16.msra.mxu0 %v296
  %445 = vmatpush.bf16.msra.mxu0 %v295
  %446 = vmatmul.bf16.gmra.mxu0 %v317
  %v447 = vpop.f32.mrf.mxu0
  %v448 = vadd.f32 %v399, %v447
  %v449 = vpop.f32.mrf.mxu0
  %v450 = vadd.f32 %v401, %v449
  %451 = vmatmul.bf16.gmra.mxu0 %v320
  %v452 = vpop.f32.mrf.mxu0
  %v453 = vadd.f32 %v404, %v452
  %v454 = vpop.f32.mrf.mxu0
  %v455 = vadd.f32 %v406, %v454
  %456 = vmatmul.bf16.gmra.mxu0 %v323
  %v457 = vpop.f32.mrf.mxu0
  %v458 = vadd.f32 %v409, %v457
  %v459 = vpop.f32.mrf.mxu0
  %v460 = vadd.f32 %v411, %v459
  %461 = vmatmul.bf16.gmra.mxu0 %v326
  %v462 = vpop.f32.mrf.mxu0
  %v463 = vadd.f32 %v414, %v462
  %v464 = vpop.f32.mrf.mxu0
  %v465 = vadd.f32 %v416, %v464
  %466 = vmatmul.bf16.gmra.mxu0 %v329
  %v467 = vpop.f32.mrf.mxu0
  %v468 = vadd.f32 %v419, %v467
  %v469 = vpop.f32.mrf.mxu0
  %v470 = vadd.f32 %v421, %v469
  %471 = vmatmul.bf16.gmra.mxu0 %v332
  %v472 = vpop.f32.mrf.mxu0
  %v473 = vadd.f32 %v424, %v472
  %v474 = vpop.f32.mrf.mxu0
  %v475 = vadd.f32 %v426, %v474
  %476 = vmatmul.bf16.gmra.mxu0 %v335
  %v477 = vpop.f32.mrf.mxu0
  %v478 = vadd.f32 %v429, %v477
  %v479 = vpop.f32.mrf.mxu0
  %v480 = vadd.f32 %v431, %v479
  %481 = vmatmul.bf16.gmra.mxu0 %v338
  %v482 = vpop.f32.mrf.mxu0
  %v483 = vadd.f32 %v434, %v482
  %v484 = vpop.f32.mrf.mxu0
  %v485 = vadd.f32 %v436, %v484
  %486 = vdwg.mxu0
  %v487 = vmax.f32 %v448, 0.0
  %v488 = vmax.f32 %v450, 0.0
  %v489 = vmax.f32 %v453, 0.0
  %v490 = vmax.f32 %v455, 0.0
  %v491 = vmax.f32 %v458, 0.0
  %v492 = vmax.f32 %v460, 0.0
  %v493 = vmax.f32 %v463, 0.0
  %v494 = vmax.f32 %v465, 0.0
  %v495 = vmax.f32 %v468, 0.0
  %v496 = vmax.f32 %v470, 0.0
  %v497 = vmax.f32 %v473, 0.0
  %v498 = vmax.f32 %v475, 0.0
  %v499 = vmax.f32 %v478, 0.0
  %v500 = vmax.f32 %v480, 0.0
  %v501 = vmax.f32 %v483, 0.0
  %v502 = vmax.f32 %v485, 0.0
  %v503 = vpack.c.bf16 %v487, %v487
  %v504 = vpack.c.bf16 %v488, %v488
  %v505 = vpack.c.bf16 %v489, %v489
  %v506 = vpack.c.bf16 %v490, %v490
  %v507 = vpack.c.bf16 %v491, %v491
  %v508 = vpack.c.bf16 %v492, %v492
  %v509 = vpack.c.bf16 %v493, %v493
  %v510 = vpack.c.bf16 %v494, %v494
  %v511 = vpack.c.bf16 %v495, %v495
  %v512 = vpack.c.bf16 %v496, %v496
  %v513 = vpack.c.bf16 %v497, %v497
  %v514 = vpack.c.bf16 %v498, %v498
  %v515 = vpack.c.bf16 %v499, %v499
  %v516 = vpack.c.bf16 %v500, %v500
  %v517 = vpack.c.bf16 %v501, %v501
  %v518 = vpack.c.bf16 %v502, %v502
  %vm519 = vcmask 519168
  %520 = vst.msk [vmem:[%s3] sm:$0xf] %vm519, %v503
  %521 = vst.msk [vmem:[%s3 + $0x4] sm:$0xf] %vm519, %v504
  %522 = vst.msk [vmem:[%s3 + $0x8] sm:$0xf] %vm519, %v505
  %523 = vst.msk [vmem:[%s3 + $0xc] sm:$0xf] %vm519, %v506
  %524 = vst.msk [vmem:[%s3 + $0x10] sm:$0xf] %vm519, %v507
  %525 = vst.msk [vmem:[%s3 + $0x14] sm:$0xf] %vm519, %v508
  %526 = vst.msk [vmem:[%s3 + $0x18] sm:$0xf] %vm519, %v509
  %527 = vst.msk [vmem:[%s3 + $0x1c] sm:$0xf] %vm519, %v510
  %528 = vst.msk [vmem:[%s3 + $0x20] sm:$0xf] %vm519, %v511
  %529 = vst.msk [vmem:[%s3 + $0x24] sm:$0xf] %vm519, %v512
  %530 = vst.msk [vmem:[%s3 + $0x28] sm:$0xf] %vm519, %v513
  %531 = vst.msk [vmem:[%s3 + $0x2c] sm:$0xf] %vm519, %v514
  %532 = vst.msk [vmem:[%s3 + $0x30] sm:$0xf] %vm519, %v515
  %533 = vst.msk [vmem:[%s3 + $0x34] sm:$0xf] %vm519, %v516
  %534 = vst.msk [vmem:[%s3 + $0x38] sm:$0xf] %vm519, %v517
  %535 = vst.msk [vmem:[%s3 + $0x3c] sm:$0xf] %vm519, %v518
  // Predicated region
  $region14: #{autoencoder_forward.8} parent=0 // pred_check
    _
  $region15: #{autoencoder_forward.8} parent=0 // pred_check_branch
    %537 = sbr.rel (0) target = $region17
  $region16: #{autoencoder_forward.8} parent=0 // pred_region
    _
  $region17: #{autoencoder_forward.8} parent=0 // pred_fallthru
    _
  // Predicated region
  $region18: #{autoencoder_forward.8} parent=0 // pred_check
    _
  $region19: #{autoencoder_forward.8} parent=0 // pred_check_branch
    %539 = sbr.rel (0) target = $region21
  $region20: #{autoencoder_forward.8} parent=0 // pred_region
    _
  $region21: #{autoencoder_forward.8} parent=0 // pred_fallthru
    _

// kernel: autoencoder_forward.9
$region0: #{autoencoder_forward.9}
  #allocation0 [shape = 'u32[]', space=smem, size = 0x4, offset = 0x4, fixed_abs, tag = 'smem constant byte address 0x4 - core index']
  #allocation1 [shape = 'u32[72,128]{1,0:T(1,128)}', space=vmem, size = 0x9000, scoped, tag = 'internal scratch']
  %s0 = inlined_call_operand.vmem [shape: bf16[32,576], index: 0, kind: input, shape index: {}]
  %s1 = inlined_call_operand.vmem [shape: bf16[576,128], index: 1, kind: input, shape index: {}]
  %s2 = inlined_call_operand.vmem [shape: f32[1,128], index: 2, kind: input, shape index: {}]
  %s3 = inlined_call_operand.vmem [shape: bf16[32,128], index: 3, kind: output, shape index: {}]
  %s4 = sld [smem:[#allocation0]]
  $region22: #{autoencoder_forward.9} parent=0
    _
  %s6 = ssub.s32 1, %s4
  %s7 = scalar_select 0, %s6, %s4
  // Predicated region
  $region2: #{autoencoder_forward.9} parent=0 // pred_check
    _
  $region3: #{autoencoder_forward.9} parent=0 // pred_check_branch
    %9 = sbr.rel (0) target = $region5
  $region4: #{autoencoder_forward.9} parent=0 // pred_region
    _
  $region5: #{autoencoder_forward.9} parent=0 // pred_fallthru
    _
  // Predicated region
  $region6: #{autoencoder_forward.9} parent=0 // pred_check
    _
  $region7: #{autoencoder_forward.9} parent=0 // pred_check_branch
    %11 = sbr.rel (0) target = $region9
  $region8: #{autoencoder_forward.9} parent=0 // pred_region
    _
  $region9: #{autoencoder_forward.9} parent=0 // pred_fallthru
    _
  // Predicated region
  $region10: #{autoencoder_forward.9} parent=0 // pred_check
    _
  $region11: #{autoencoder_forward.9} parent=0 // pred_check_branch
    %13 = sbr.rel (0) target = $region13
  $region12: #{autoencoder_forward.9} parent=0 // pred_region
    _
  $region13: #{autoencoder_forward.9} parent=0 // pred_fallthru
    _
  %v15 = vld [vmem:[%s0] sm:$0xff]
  %v16 = vld [vmem:[%s0 + $0x8] sm:$0xff]
  %v17 = vld [vmem:[%s0 + $0x10] sm:$0xf]
  %v18 = vld [vmem:[%s0 + $0x14] sm:$0xff]
  %v19 = vld [vmem:[%s0 + $0x1c] sm:$0xff]
  %v20 = vld [vmem:[%s0 + $0x24] sm:$0xf]
  %v21 = vld [vmem:[%s0 + $0x28] sm:$0xff]
  %v22 = vld [vmem:[%s0 + $0x30] sm:$0xff]
  %v23 = vld [vmem:[%s0 + $0x38] sm:$0xf]
  %v24 = vld [vmem:[%s0 + $0x3c] sm:$0xff]
  %v25 = vld [vmem:[%s0 + $0x44] sm:$0xff]
  %v26 = vld [vmem:[%s0 + $0x4c] sm:$0xf]
  %v27 = vld [vmem:[%s1] sm:$0xf]
  %v28 = vld [vmem:[%s1 + $0x4] sm:$0xf]
  %v29 = vld [vmem:[%s1 + $0x8] sm:$0xf]
  %v30 = vld [vmem:[%s1 + $0xc] sm:$0xf]
  %v31 = vld [vmem:[%s1 + $0x10] sm:$0xf]
  %v32 = vld [vmem:[%s1 + $0x14] sm:$0xf]
  %v33 = vld [vmem:[%s1 + $0x18] sm:$0xf]
  %v34 = vld [vmem:[%s1 + $0x1c] sm:$0xf]
  %v35 = vld [vmem:[%s1 + $0x20] sm:$0xf]
  %v36 = vld [vmem:[%s1 + $0x24] sm:$0xf]
  %v37 = vld [vmem:[%s1 + $0x28] sm:$0xf]
  %v38 = vld [vmem:[%s1 + $0x2c] sm:$0xf]
  %v39 = vld [vmem:[%s1 + $0x30] sm:$0xf]
  %v40 = vld [vmem:[%s1 + $0x34] sm:$0xf]
  %v41 = vld [vmem:[%s1 + $0x38] sm:$0xf]
  %v42 = vld [vmem:[%s1 + $0x3c] sm:$0xf]
  %v43 = vld [vmem:[%s1 + $0x40] sm:$0xf]
  %v44 = vld [vmem:[%s1 + $0x44] sm:$0xf]
  %v45 = vld [vmem:[%s1 + $0x48] sm:$0xf]
  %v46 = vld [vmem:[%s1 + $0x4c] sm:$0xf]
  %v47 = vld [vmem:[%s1 + $0x50] sm:$0xf]
  %v48 = vld [vmem:[%s1 + $0x54] sm:$0xf]
  %v49 = vld [vmem:[%s1 + $0x58] sm:$0xf]
  %v50 = vld [vmem:[%s1 + $0x5c] sm:$0xf]
  %v51 = vld [vmem:[%s1 + $0x60] sm:$0xf]
  %v52 = vld [vmem:[%s1 + $0x64] sm:$0xf]
  %v53 = vld [vmem:[%s1 + $0x68] sm:$0xf]
  %v54 = vld [vmem:[%s1 + $0x6c] sm:$0xf]
  %v55 = vld [vmem:[%s1 + $0x70] sm:$0xf]
  %v56 = vld [vmem:[%s1 + $0x74] sm:$0xf]
  %v57 = vld [vmem:[%s1 + $0x78] sm:$0xf]
  %v58 = vld [vmem:[%s1 + $0x7c] sm:$0xf]
  %v59 = vld [vmem:[%s1 + $0x80] sm:$0xf]
  %v60 = vld [vmem:[%s1 + $0x84] sm:$0xf]
  %v61 = vld [vmem:[%s1 + $0x88] sm:$0xf]
  %v62 = vld [vmem:[%s1 + $0x8c] sm:$0xf]
  %v63 = vld [vmem:[%s1 + $0x90] sm:$0xf]
  %v64 = vld [vmem:[%s1 + $0x94] sm:$0xf]
  %v65 = vld [vmem:[%s1 + $0x98] sm:$0xf]
  %v66 = vld [vmem:[%s1 + $0x9c] sm:$0xf]
  %v67 = vld [vmem:[%s1 + $0xa0] sm:$0xf]
  %v68 = vld [vmem:[%s1 + $0xa4] sm:$0xf]
  %v69 = vld [vmem:[%s1 + $0xa8] sm:$0xf]
  %v70 = vld [vmem:[%s1 + $0xac] sm:$0xf]
  %v71 = vld [vmem:[%s1 + $0xb0] sm:$0xf]
  %v72 = vld [vmem:[%s1 + $0xb4] sm:$0xf]
  %v73 = vld [vmem:[%s1 + $0xb8] sm:$0xf]
  %v74 = vld [vmem:[%s1 + $0xbc] sm:$0xf]
  %v75 = vld [vmem:[%s1 + $0xc0] sm:$0xf]
  %v76 = vld [vmem:[%s1 + $0xc4] sm:$0xf]
  %v77 = vld [vmem:[%s1 + $0xc8] sm:$0xf]
  %v78 = vld [vmem:[%s1 + $0xcc] sm:$0xf]
  %v79 = vld [vmem:[%s1 + $0xd0] sm:$0xf]
  %v80 = vld [vmem:[%s1 + $0xd4] sm:$0xf]
  %v81 = vld [vmem:[%s1 + $0xd8] sm:$0xf]
  %v82 = vld [vmem:[%s1 + $0xdc] sm:$0xf]
  %v83 = vld [vmem:[%s1 + $0xe0] sm:$0xf]
  %v84 = vld [vmem:[%s1 + $0xe4] sm:$0xf]
  %v85 = vld [vmem:[%s1 + $0xe8] sm:$0xf]
  %v86 = vld [vmem:[%s1 + $0xec] sm:$0xf]
  %v87 = vld [vmem:[%s1 + $0xf0] sm:$0xf]
  %v88 = vld [vmem:[%s1 + $0xf4] sm:$0xf]
  %v89 = vld [vmem:[%s1 + $0xf8] sm:$0xf]
  %v90 = vld [vmem:[%s1 + $0xfc] sm:$0xf]
  %v91 = vld [vmem:[%s1 + $0x100] sm:$0xf]
  %v92 = vld [vmem:[%s1 + $0x104] sm:$0xf]
  %v93 = vld [vmem:[%s1 + $0x108] sm:$0xf]
  %v94 = vld [vmem:[%s1 + $0x10c] sm:$0xf]
  %v95 = vld [vmem:[%s1 + $0x110] sm:$0xf]
  %v96 = vld [vmem:[%s1 + $0x114] sm:$0xf]
  %v97 = vld [vmem:[%s1 + $0x118] sm:$0xf]
  %v98 = vld [vmem:[%s1 + $0x11c] sm:$0xf]
  %v99 = vld [vmem:[%s2] sm:$0x1]
  %v101 = vperm.slane %v99, 0
  %v115 = vunpack.c.l.b16 %v15
  %v116 = vunpack.c.h.b16 %v15
  %v117 = vunpack.c.l.b16 %v16
  %v118 = vunpack.c.h.b16 %v16
  %v119 = vunpack.c.l.b16 %v17
  %v120 = vunpack.c.l.b16 %v18
  %v121 = vunpack.c.h.b16 %v18
  %v122 = vunpack.c.l.b16 %v19
  %v123 = vunpack.c.h.b16 %v19
  %v124 = vunpack.c.l.b16 %v20
  %v125 = vunpack.c.l.b16 %v21
  %v126 = vunpack.c.h.b16 %v21
  %v127 = vunpack.c.l.b16 %v22
  %v128 = vunpack.c.h.b16 %v22
  %v129 = vunpack.c.l.b16 %v23
  %v130 = vunpack.c.l.b16 %v24
  %v131 = vunpack.c.h.b16 %v24
  %v132 = vunpack.c.l.b16 %v25
  %v133 = vunpack.c.h.b16 %v25
  %v134 = vunpack.c.l.b16 %v26
  %v135 = vpack.c.b16 %v120, %v115
  %v136 = vpack.c.b16 %v121, %v116
  %v137 = vpack.c.b16 %v122, %v117
  %v138 = vpack.c.b16 %v123, %v118
  %v139 = vpack.c.b16 %v124, %v119
  %v140 = vpack.c.b16 %v130, %v125
  %v141 = vpack.c.b16 %v131, %v126
  %v142 = vpack.c.b16 %v132, %v127
  %v143 = vpack.c.b16 %v133, %v128
  %v144 = vpack.c.b16 %v134, %v129
  %v225 = vunpack.c.l.b16 %v27
  %v226 = vunpack.c.l.b16 %v28
  %v227 = vunpack.c.l.b16 %v29
  %v228 = vunpack.c.l.b16 %v30
  %v229 = vunpack.c.l.b16 %v31
  %v230 = vunpack.c.l.b16 %v32
  %v231 = vunpack.c.l.b16 %v33
  %v232 = vunpack.c.l.b16 %v34
  %v233 = vunpack.c.l.b16 %v35
  %v234 = vunpack.c.l.b16 %v36
  %v235 = vunpack.c.l.b16 %v37
  %v236 = vunpack.c.l.b16 %v38
  %v237 = vunpack.c.l.b16 %v39
  %v238 = vunpack.c.l.b16 %v40
  %v239 = vunpack.c.l.b16 %v41
  %v240 = vunpack.c.l.b16 %v42
  %v241 = vunpack.c.l.b16 %v43
  %v242 = vunpack.c.l.b16 %v44
  %v243 = vunpack.c.l.b16 %v45
  %v244 = vunpack.c.l.b16 %v46
  %v245 = vunpack.c.l.b16 %v47
  %v246 = vunpack.c.l.b16 %v48
  %v247 = vunpack.c.l.b16 %v49
  %v248 = vunpack.c.l.b16 %v50
  %v249 = vunpack.c.l.b16 %v51
  %v250 = vunpack.c.l.b16 %v52
  %v251 = vunpack.c.l.b16 %v53
  %v252 = vunpack.c.l.b16 %v54
  %v253 = vunpack.c.l.b16 %v55
  %v254 = vunpack.c.l.b16 %v56
  %v255 = vunpack.c.l.b16 %v57
  %v256 = vunpack.c.l.b16 %v58
  %v257 = vunpack.c.l.b16 %v59
  %v258 = vunpack.c.l.b16 %v60
  %v259 = vunpack.c.l.b16 %v61
  %v260 = vunpack.c.l.b16 %v62
  %v261 = vunpack.c.l.b16 %v63
  %v262 = vunpack.c.l.b16 %v64
  %v263 = vunpack.c.l.b16 %v65
  %v264 = vunpack.c.l.b16 %v66
  %v265 = vunpack.c.l.b16 %v67
  %v266 = vunpack.c.l.b16 %v68
  %v267 = vunpack.c.l.b16 %v69
  %v268 = vunpack.c.l.b16 %v70
  %v269 = vunpack.c.l.b16 %v71
  %v270 = vunpack.c.l.b16 %v72
  %v271 = vunpack.c.l.b16 %v73
  %v272 = vunpack.c.l.b16 %v74
  %v273 = vunpack.c.l.b16 %v75
  %v274 = vunpack.c.l.b16 %v76
  %v275 = vunpack.c.l.b16 %v77
  %v276 = vunpack.c.l.b16 %v78
  %v277 = vunpack.c.l.b16 %v79
  %v278 = vunpack.c.l.b16 %v80
  %v279 = vunpack.c.l.b16 %v81
  %v280 = vunpack.c.l.b16 %v82
  %v281 = vunpack.c.l.b16 %v83
  %v282 = vunpack.c.l.b16 %v84
  %v283 = vunpack.c.l.b16 %v85
  %v284 = vunpack.c.l.b16 %v86
  %v285 = vunpack.c.l.b16 %v87
  %v286 = vunpack.c.l.b16 %v88
  %v287 = vunpack.c.l.b16 %v89
  %v288 = vunpack.c.l.b16 %v90
  %v289 = vunpack.c.l.b16 %v91
  %v290 = vunpack.c.l.b16 %v92
  %v291 = vunpack.c.l.b16 %v93
  %v292 = vunpack.c.l.b16 %v94
  %v293 = vunpack.c.l.b16 %v95
  %v294 = vunpack.c.l.b16 %v96
  %v295 = vunpack.c.l.b16 %v97
  %v296 = vunpack.c.l.b16 %v98
  %v297 = vpack.c.b16 %v226, %v225
  %v298 = vpack.c.b16 %v228, %v227
  %v299 = vpack.c.b16 %v230, %v229
  %v300 = vpack.c.b16 %v232, %v231
  %v301 = vpack.c.b16 %v234, %v233
  %v302 = vpack.c.b16 %v236, %v235
  %v303 = vpack.c.b16 %v238, %v237
  %v304 = vpack.c.b16 %v240, %v239
  %v305 = vpack.c.b16 %v242, %v241
  %v306 = vpack.c.b16 %v244, %v243
  %v307 = vpack.c.b16 %v246, %v245
  %v308 = vpack.c.b16 %v248, %v247
  %v309 = vpack.c.b16 %v250, %v249
  %v310 = vpack.c.b16 %v252, %v251
  %v311 = vpack.c.b16 %v254, %v253
  %v312 = vpack.c.b16 %v256, %v255
  %v313 = vpack.c.b16 %v258, %v257
  %v314 = vpack.c.b16 %v260, %v259
  %v315 = vpack.c.b16 %v262, %v261
  %v316 = vpack.c.b16 %v264, %v263
  %v317 = vpack.c.b16 %v266, %v265
  %v318 = vpack.c.b16 %v268, %v267
  %v319 = vpack.c.b16 %v270, %v269
  %v320 = vpack.c.b16 %v272, %v271
  %v321 = vpack.c.b16 %v274, %v273
  %v322 = vpack.c.b16 %v276, %v275
  %v323 = vpack.c.b16 %v278, %v277
  %v324 = vpack.c.b16 %v280, %v279
  %v325 = vpack.c.b16 %v282, %v281
  %v326 = vpack.c.b16 %v284, %v283
  %v327 = vpack.c.b16 %v286, %v285
  %v328 = vpack.c.b16 %v288, %v287
  %v329 = vpack.c.b16 %v290, %v289
  %v330 = vpack.c.b16 %v292, %v291
  %v331 = vpack.c.b16 %v294, %v293
  %v332 = vpack.c.b16 %v296, %v295
  %vm369 = vcmask 523264
  %v371 = vsel %vm369, %v139, 0
  %v374 = vsel %vm369, %v144, 0
  %376 = vmatpush.bf16.msra.mxu0 %v304
  %377 = vmatpush.bf16.msra.mxu0 %v303
  %378 = vmatpush.bf16.msra.mxu0 %v302
  %379 = vmatpush.bf16.msra.mxu0 %v301
  %380 = vmatpush.bf16.msra.mxu0 %v300
  %381 = vmatpush.bf16.msra.mxu0 %v299
  %382 = vmatpush.bf16.msra.mxu0 %v298
  %383 = vmatpush.bf16.msra.mxu0 %v297
  %384 = vmatmul.bf16.gmra.mxu0 %v135
  %v385 = vpop.f32.mrf.mxu0
  %v386 = vadd.f32 %v101, %v385
  %v387 = vpop.f32.mrf.mxu0
  %v388 = vadd.f32 %v101, %v387
  %389 = vmatmul.bf16.gmra.mxu0 %v140
  %v390 = vpop.f32.mrf.mxu0
  %v391 = vadd.f32 %v101, %v390
  %v392 = vpop.f32.mrf.mxu0
  %v393 = vadd.f32 %v101, %v392
  %394 = vdwg.mxu0
  %395 = vmatpush.bf16.msra.mxu0 %v312
  %396 = vmatpush.bf16.msra.mxu0 %v311
  %397 = vmatpush.bf16.msra.mxu0 %v310
  %398 = vmatpush.bf16.msra.mxu0 %v309
  %399 = vmatpush.bf16.msra.mxu0 %v308
  %400 = vmatpush.bf16.msra.mxu0 %v307
  %401 = vmatpush.bf16.msra.mxu0 %v306
  %402 = vmatpush.bf16.msra.mxu0 %v305
  %403 = vmatmul.bf16.gmra.mxu0 %v136
  %v404 = vpop.f32.mrf.mxu0
  %v405 = vadd.f32 %v386, %v404
  %v406 = vpop.f32.mrf.mxu0
  %v407 = vadd.f32 %v388, %v406
  %408 = vmatmul.bf16.gmra.mxu0 %v141
  %v409 = vpop.f32.mrf.mxu0
  %v410 = vadd.f32 %v391, %v409
  %v411 = vpop.f32.mrf.mxu0
  %v412 = vadd.f32 %v393, %v411
  %413 = vdwg.mxu0
  %414 = vmatpush.bf16.msra.mxu0 %v320
  %415 = vmatpush.bf16.msra.mxu0 %v319
  %416 = vmatpush.bf16.msra.mxu0 %v318
  %417 = vmatpush.bf16.msra.mxu0 %v317
  %418 = vmatpush.bf16.msra.mxu0 %v316
  %419 = vmatpush.bf16.msra.mxu0 %v315
  %420 = vmatpush.bf16.msra.mxu0 %v314
  %421 = vmatpush.bf16.msra.mxu0 %v313
  %422 = vmatmul.bf16.gmra.mxu0 %v137
  %v423 = vpop.f32.mrf.mxu0
  %v424 = vadd.f32 %v405, %v423
  %v425 = vpop.f32.mrf.mxu0
  %v426 = vadd.f32 %v407, %v425
  %427 = vmatmul.bf16.gmra.mxu0 %v142
  %v428 = vpop.f32.mrf.mxu0
  %v429 = vadd.f32 %v410, %v428
  %v430 = vpop.f32.mrf.mxu0
  %v431 = vadd.f32 %v412, %v430
  %432 = vdwg.mxu0
  %433 = vmatpush.bf16.msra.mxu0 %v328
  %434 = vmatpush.bf16.msra.mxu0 %v327
  %435 = vmatpush.bf16.msra.mxu0 %v326
  %436 = vmatpush.bf16.msra.mxu0 %v325
  %437 = vmatpush.bf16.msra.mxu0 %v324
  %438 = vmatpush.bf16.msra.mxu0 %v323
  %439 = vmatpush.bf16.msra.mxu0 %v322
  %440 = vmatpush.bf16.msra.mxu0 %v321
  %441 = vmatmul.bf16.gmra.mxu0 %v138
  %v442 = vpop.f32.mrf.mxu0
  %v443 = vadd.f32 %v424, %v442
  %v444 = vpop.f32.mrf.mxu0
  %v445 = vadd.f32 %v426, %v444
  %446 = vmatmul.bf16.gmra.mxu0 %v143
  %v447 = vpop.f32.mrf.mxu0
  %v448 = vadd.f32 %v429, %v447
  %v449 = vpop.f32.mrf.mxu0
  %v450 = vadd.f32 %v431, %v449
  %451 = vdwg.mxu0
  %452 = vmatpush.bf16.msra.mxu0 0
  %453 = vmatpush.bf16.msra.mxu0 0
  %454 = vmatpush.bf16.msra.mxu0 0
  %455 = vmatpush.bf16.msra.mxu0 0
  %456 = vmatpush.bf16.msra.mxu0 %v332
  %457 = vmatpush.bf16.msra.mxu0 %v331
  %458 = vmatpush.bf16.msra.mxu0 %v330
  %459 = vmatpush.bf16.msra.mxu0 %v329
  %460 = vmatmul.bf16.gmra.mxu0 %v371
  %v461 = vpop.f32.mrf.mxu0
  %v462 = vadd.f32 %v443, %v461
  %v463 = vpop.f32.mrf.mxu0
  %v464 = vadd.f32 %v445, %v463
  %465 = vmatmul.bf16.gmra.mxu0 %v374
  %v466 = vpop.f32.mrf.mxu0
  %v467 = vadd.f32 %v448, %v466
  %v468 = vpop.f32.mrf.mxu0
  %v469 = vadd.f32 %v450, %v468
  %470 = vdwg.mxu0
  %v471 = vmax.f32 %v462, 0.0
  %v472 = vmax.f32 %v464, 0.0
  %v473 = vmax.f32 %v467, 0.0
  %v474 = vmax.f32 %v469, 0.0
  %v475 = vpack.c.bf16 %v471, %v471
  %v476 = vpack.c.bf16 %v472, %v472
  %v477 = vpack.c.bf16 %v473, %v473
  %v478 = vpack.c.bf16 %v474, %v474
  %479 = vst [vmem:[%s3] sm:$0xf] %v475
  %480 = vst [vmem:[%s3 + $0x4] sm:$0xf] %v476
  %481 = vst [vmem:[%s3 + $0x8] sm:$0xf] %v477
  %482 = vst [vmem:[%s3 + $0xc] sm:$0xf] %v478
  // Predicated region
  $region14: #{autoencoder_forward.9} parent=0 // pred_check
    _
  $region15: #{autoencoder_forward.9} parent=0 // pred_check_branch
    %484 = sbr.rel (0) target = $region17
  $region16: #{autoencoder_forward.9} parent=0 // pred_region
    _
  $region17: #{autoencoder_forward.9} parent=0 // pred_fallthru
    _
  // Predicated region
  $region18: #{autoencoder_forward.9} parent=0 // pred_check
    _
  $region19: #{autoencoder_forward.9} parent=0 // pred_check_branch
    %486 = sbr.rel (0) target = $region21
  $region20: #{autoencoder_forward.9} parent=0 // pred_region
    _
  $region21: #{autoencoder_forward.9} parent=0 // pred_fallthru
    _

// kernel: autoencoder_forward.11
$region0: #{autoencoder_forward.11}
  #allocation0 [shape = 'u32[]', space=smem, size = 0x4, offset = 0x4, fixed_abs, tag = 'smem constant byte address 0x4 - core index']
  #allocation1 [shape = 'u32[72,128]{1,0:T(1,128)}', space=vmem, size = 0x9000, scoped, tag = 'internal scratch']
  %s0 = inlined_call_operand.vmem [shape: bf16[32,512], index: 0, kind: input, shape index: {}]
  %s1 = inlined_call_operand.vmem [shape: bf16[512,256], index: 1, kind: input, shape index: {}]
  %s2 = inlined_call_operand.vmem [shape: f32[1,256], index: 2, kind: input, shape index: {}]
  %s3 = inlined_call_operand.vmem [shape: bf16[32,256], index: 3, kind: output, shape index: {}]
  %s4 = sld [smem:[#allocation0]]
  $region22: #{autoencoder_forward.11} parent=0
    _
  %s6 = ssub.s32 1, %s4
  %s7 = scalar_select 0, %s6, %s4
  // Predicated region
  $region2: #{autoencoder_forward.11} parent=0 // pred_check
    _
  $region3: #{autoencoder_forward.11} parent=0 // pred_check_branch
    %9 = sbr.rel (0) target = $region5
  $region4: #{autoencoder_forward.11} parent=0 // pred_region
    _
  $region5: #{autoencoder_forward.11} parent=0 // pred_fallthru
    _
  // Predicated region
  $region6: #{autoencoder_forward.11} parent=0 // pred_check
    _
  $region7: #{autoencoder_forward.11} parent=0 // pred_check_branch
    %11 = sbr.rel (0) target = $region9
  $region8: #{autoencoder_forward.11} parent=0 // pred_region
    _
  $region9: #{autoencoder_forward.11} parent=0 // pred_fallthru
    _
  // Predicated region
  $region10: #{autoencoder_forward.11} parent=0 // pred_check
    _
  $region11: #{autoencoder_forward.11} parent=0 // pred_check_branch
    %13 = sbr.rel (0) target = $region13
  $region12: #{autoencoder_forward.11} parent=0 // pred_region
    _
  $region13: #{autoencoder_forward.11} parent=0 // pred_fallthru
    _
  %v14 = vld [vmem:[%s0] sm:$0xff]
  %v15 = vld [vmem:[%s0 + $0x8] sm:$0xff]
  %v16 = vld [vmem:[%s0 + $0x10] sm:$0xff]
  %v17 = vld [vmem:[%s0 + $0x18] sm:$0xff]
  %v18 = vld [vmem:[%s0 + $0x20] sm:$0xff]
  %v19 = vld [vmem:[%s0 + $0x28] sm:$0xff]
  %v20 = vld [vmem:[%s0 + $0x30] sm:$0xff]
  %v21 = vld [vmem:[%s0 + $0x38] sm:$0xff]
  %v22 = vld [vmem:[%s1] sm:$0xff]
  %v23 = vld [vmem:[%s1 + $0x8] sm:$0xff]
  %v24 = vld [vmem:[%s1 + $0x10] sm:$0xff]
  %v25 = vld [vmem:[%s1 + $0x18] sm:$0xff]
  %v26 = vld [vmem:[%s1 + $0x20] sm:$0xff]
  %v27 = vld [vmem:[%s1 + $0x28] sm:$0xff]
  %v28 = vld [vmem:[%s1 + $0x30] sm:$0xff]
  %v29 = vld [vmem:[%s1 + $0x38] sm:$0xff]
  %v30 = vld [vmem:[%s1 + $0x40] sm:$0xff]
  %v31 = vld [vmem:[%s1 + $0x48] sm:$0xff]
  %v32 = vld [vmem:[%s1 + $0x50] sm:$0xff]
  %v33 = vld [vmem:[%s1 + $0x58] sm:$0xff]
  %v34 = vld [vmem:[%s1 + $0x60] sm:$0xff]
  %v35 = vld [vmem:[%s1 + $0x68] sm:$0xff]
  %v36 = vld [vmem:[%s1 + $0x70] sm:$0xff]
  %v37 = vld [vmem:[%s1 + $0x78] sm:$0xff]
  %v38 = vld [vmem:[%s1 + $0x80] sm:$0xff]
  %v39 = vld [vmem:[%s1 + $0x88] sm:$0xff]
  %v40 = vld [vmem:[%s1 + $0x90] sm:$0xff]
  %v41 = vld [vmem:[%s1 + $0x98] sm:$0xff]
  %v42 = vld [vmem:[%s1 + $0xa0] sm:$0xff]
  %v43 = vld [vmem:[%s1 + $0xa8] sm:$0xff]
  %v44 = vld [vmem:[%s1 + $0xb0] sm:$0xff]
  %v45 = vld [vmem:[%s1 + $0xb8] sm:$0xff]
  %v46 = vld [vmem:[%s1 + $0xc0] sm:$0xff]
  %v47 = vld [vmem:[%s1 + $0xc8] sm:$0xff]
  %v48 = vld [vmem:[%s1 + $0xd0] sm:$0xff]
  %v49 = vld [vmem:[%s1 + $0xd8] sm:$0xff]
  %v50 = vld [vmem:[%s1 + $0xe0] sm:$0xff]
  %v51 = vld [vmem:[%s1 + $0xe8] sm:$0xff]
  %v52 = vld [vmem:[%s1 + $0xf0] sm:$0xff]
  %v53 = vld [vmem:[%s1 + $0xf8] sm:$0xff]
  %v54 = vld [vmem:[%s1 + $0x100] sm:$0xff]
  %v55 = vld [vmem:[%s1 + $0x108] sm:$0xff]
  %v56 = vld [vmem:[%s1 + $0x110] sm:$0xff]
  %v57 = vld [vmem:[%s1 + $0x118] sm:$0xff]
  %v58 = vld [vmem:[%s1 + $0x120] sm:$0xff]
  %v59 = vld [vmem:[%s1 + $0x128] sm:$0xff]
  %v60 = vld [vmem:[%s1 + $0x130] sm:$0xff]
  %v61 = vld [vmem:[%s1 + $0x138] sm:$0xff]
  %v62 = vld [vmem:[%s1 + $0x140] sm:$0xff]
  %v63 = vld [vmem:[%s1 + $0x148] sm:$0xff]
  %v64 = vld [vmem:[%s1 + $0x150] sm:$0xff]
  %v65 = vld [vmem:[%s1 + $0x158] sm:$0xff]
  %v66 = vld [vmem:[%s1 + $0x160] sm:$0xff]
  %v67 = vld [vmem:[%s1 + $0x168] sm:$0xff]
  %v68 = vld [vmem:[%s1 + $0x170] sm:$0xff]
  %v69 = vld [vmem:[%s1 + $0x178] sm:$0xff]
  %v70 = vld [vmem:[%s1 + $0x180] sm:$0xff]
  %v71 = vld [vmem:[%s1 + $0x188] sm:$0xff]
  %v72 = vld [vmem:[%s1 + $0x190] sm:$0xff]
  %v73 = vld [vmem:[%s1 + $0x198] sm:$0xff]
  %v74 = vld [vmem:[%s1 + $0x1a0] sm:$0xff]
  %v75 = vld [vmem:[%s1 + $0x1a8] sm:$0xff]
  %v76 = vld [vmem:[%s1 + $0x1b0] sm:$0xff]
  %v77 = vld [vmem:[%s1 + $0x1b8] sm:$0xff]
  %v78 = vld [vmem:[%s1 + $0x1c0] sm:$0xff]
  %v79 = vld [vmem:[%s1 + $0x1c8] sm:$0xff]
  %v80 = vld [vmem:[%s1 + $0x1d0] sm:$0xff]
  %v81 = vld [vmem:[%s1 + $0x1d8] sm:$0xff]
  %v82 = vld [vmem:[%s1 + $0x1e0] sm:$0xff]
  %v83 = vld [vmem:[%s1 + $0x1e8] sm:$0xff]
  %v84 = vld [vmem:[%s1 + $0x1f0] sm:$0xff]
  %v85 = vld [vmem:[%s1 + $0x1f8] sm:$0xff]
  %v86 = vld [vmem:[%s2] sm:$0x3]
  %v88 = vperm.slane %v86, 0
  %v89 = vperm.slane %v86, 1
  %v100 = vunpack.c.l.b16 %v14
  %v101 = vunpack.c.h.b16 %v14
  %v102 = vunpack.c.l.b16 %v15
  %v103 = vunpack.c.h.b16 %v15
  %v104 = vunpack.c.l.b16 %v16
  %v105 = vunpack.c.h.b16 %v16
  %v106 = vunpack.c.l.b16 %v17
  %v107 = vunpack.c.h.b16 %v17
  %v108 = vunpack.c.l.b16 %v18
  %v109 = vunpack.c.h.b16 %v18
  %v110 = vunpack.c.l.b16 %v19
  %v111 = vunpack.c.h.b16 %v19
  %v112 = vunpack.c.l.b16 %v20
  %v113 = vunpack.c.h.b16 %v20
  %v114 = vunpack.c.l.b16 %v21
  %v115 = vunpack.c.h.b16 %v21
  %v116 = vpack.c.b16 %v104, %v100
  %v117 = vpack.c.b16 %v105, %v101
  %v118 = vpack.c.b16 %v106, %v102
  %v119 = vpack.c.b16 %v107, %v103
  %v120 = vpack.c.b16 %v112, %v108
  %v121 = vpack.c.b16 %v113, %v109
  %v122 = vpack.c.b16 %v114, %v110
  %v123 = vpack.c.b16 %v115, %v111
  %v196 = vunpack.c.l.b16 %v22
  %v197 = vunpack.c.h.b16 %v22
  %v198 = vunpack.c.l.b16 %v23
  %v199 = vunpack.c.h.b16 %v23
  %v200 = vunpack.c.l.b16 %v24
  %v201 = vunpack.c.h.b16 %v24
  %v202 = vunpack.c.l.b16 %v25
  %v203 = vunpack.c.h.b16 %v25
  %v204 = vunpack.c.l.b16 %v26
  %v205 = vunpack.c.h.b16 %v26
  %v206 = vunpack.c.l.b16 %v27
  %v207 = vunpack.c.h.b16 %v27
  %v208 = vunpack.c.l.b16 %v28
  %v209 = vunpack.c.h.b16 %v28
  %v210 = vunpack.c.l.b16 %v29
  %v211 = vunpack.c.h.b16 %v29
  %v212 = vunpack.c.l.b16 %v30
  %v213 = vunpack.c.h.b16 %v30
  %v214 = vunpack.c.l.b16 %v31
  %v215 = vunpack.c.h.b16 %v31
  %v216 = vunpack.c.l.b16 %v32
  %v217 = vunpack.c.h.b16 %v32
  %v218 = vunpack.c.l.b16 %v33
  %v219 = vunpack.c.h.b16 %v33
  %v220 = vunpack.c.l.b16 %v34
  %v221 = vunpack.c.h.b16 %v34
  %v222 = vunpack.c.l.b16 %v35
  %v223 = vunpack.c.h.b16 %v35
  %v224 = vunpack.c.l.b16 %v36
  %v225 = vunpack.c.h.b16 %v36
  %v226 = vunpack.c.l.b16 %v37
  %v227 = vunpack.c.h.b16 %v37
  %v228 = vunpack.c.l.b16 %v38
  %v229 = vunpack.c.h.b16 %v38
  %v230 = vunpack.c.l.b16 %v39
  %v231 = vunpack.c.h.b16 %v39
  %v232 = vunpack.c.l.b16 %v40
  %v233 = vunpack.c.h.b16 %v40
  %v234 = vunpack.c.l.b16 %v41
  %v235 = vunpack.c.h.b16 %v41
  %v236 = vunpack.c.l.b16 %v42
  %v237 = vunpack.c.h.b16 %v42
  %v238 = vunpack.c.l.b16 %v43
  %v239 = vunpack.c.h.b16 %v43
  %v240 = vunpack.c.l.b16 %v44
  %v241 = vunpack.c.h.b16 %v44
  %v242 = vunpack.c.l.b16 %v45
  %v243 = vunpack.c.h.b16 %v45
  %v244 = vunpack.c.l.b16 %v46
  %v245 = vunpack.c.h.b16 %v46
  %v246 = vunpack.c.l.b16 %v47
  %v247 = vunpack.c.h.b16 %v47
  %v248 = vunpack.c.l.b16 %v48
  %v249 = vunpack.c.h.b16 %v48
  %v250 = vunpack.c.l.b16 %v49
  %v251 = vunpack.c.h.b16 %v49
  %v252 = vunpack.c.l.b16 %v50
  %v253 = vunpack.c.h.b16 %v50
  %v254 = vunpack.c.l.b16 %v51
  %v255 = vunpack.c.h.b16 %v51
  %v256 = vunpack.c.l.b16 %v52
  %v257 = vunpack.c.h.b16 %v52
  %v258 = vunpack.c.l.b16 %v53
  %v259 = vunpack.c.h.b16 %v53
  %v260 = vunpack.c.l.b16 %v54
  %v261 = vunpack.c.h.b16 %v54
  %v262 = vunpack.c.l.b16 %v55
  %v263 = vunpack.c.h.b16 %v55
  %v264 = vunpack.c.l.b16 %v56
  %v265 = vunpack.c.h.b16 %v56
  %v266 = vunpack.c.l.b16 %v57
  %v267 = vunpack.c.h.b16 %v57
  %v268 = vunpack.c.l.b16 %v58
  %v269 = vunpack.c.h.b16 %v58
  %v270 = vunpack.c.l.b16 %v59
  %v271 = vunpack.c.h.b16 %v59
  %v272 = vunpack.c.l.b16 %v60
  %v273 = vunpack.c.h.b16 %v60
  %v274 = vunpack.c.l.b16 %v61
  %v275 = vunpack.c.h.b16 %v61
  %v276 = vunpack.c.l.b16 %v62
  %v277 = vunpack.c.h.b16 %v62
  %v278 = vunpack.c.l.b16 %v63
  %v279 = vunpack.c.h.b16 %v63
  %v280 = vunpack.c.l.b16 %v64
  %v281 = vunpack.c.h.b16 %v64
  %v282 = vunpack.c.l.b16 %v65
  %v283 = vunpack.c.h.b16 %v65
  %v284 = vunpack.c.l.b16 %v66
  %v285 = vunpack.c.h.b16 %v66
  %v286 = vunpack.c.l.b16 %v67
  %v287 = vunpack.c.h.b16 %v67
  %v288 = vunpack.c.l.b16 %v68
  %v289 = vunpack.c.h.b16 %v68
  %v290 = vunpack.c.l.b16 %v69
  %v291 = vunpack.c.h.b16 %v69
  %v292 = vunpack.c.l.b16 %v70
  %v293 = vunpack.c.h.b16 %v70
  %v294 = vunpack.c.l.b16 %v71
  %v295 = vunpack.c.h.b16 %v71
  %v296 = vunpack.c.l.b16 %v72
  %v297 = vunpack.c.h.b16 %v72
  %v298 = vunpack.c.l.b16 %v73
  %v299 = vunpack.c.h.b16 %v73
  %v300 = vunpack.c.l.b16 %v74
  %v301 = vunpack.c.h.b16 %v74
  %v302 = vunpack.c.l.b16 %v75
  %v303 = vunpack.c.h.b16 %v75
  %v304 = vunpack.c.l.b16 %v76
  %v305 = vunpack.c.h.b16 %v76
  %v306 = vunpack.c.l.b16 %v77
  %v307 = vunpack.c.h.b16 %v77
  %v308 = vunpack.c.l.b16 %v78
  %v309 = vunpack.c.h.b16 %v78
  %v310 = vunpack.c.l.b16 %v79
  %v311 = vunpack.c.h.b16 %v79
  %v312 = vunpack.c.l.b16 %v80
  %v313 = vunpack.c.h.b16 %v80
  %v314 = vunpack.c.l.b16 %v81
  %v315 = vunpack.c.h.b16 %v81
  %v316 = vunpack.c.l.b16 %v82
  %v317 = vunpack.c.h.b16 %v82
  %v318 = vunpack.c.l.b16 %v83
  %v319 = vunpack.c.h.b16 %v83
  %v320 = vunpack.c.l.b16 %v84
  %v321 = vunpack.c.h.b16 %v84
  %v322 = vunpack.c.l.b16 %v85
  %v323 = vunpack.c.h.b16 %v85
  %v324 = vpack.c.b16 %v198, %v196
  %v325 = vpack.c.b16 %v199, %v197
  %v326 = vpack.c.b16 %v202, %v200
  %v327 = vpack.c.b16 %v203, %v201
  %v328 = vpack.c.b16 %v206, %v204
  %v329 = vpack.c.b16 %v207, %v205
  %v330 = vpack.c.b16 %v210, %v208
  %v331 = vpack.c.b16 %v211, %v209
  %v332 = vpack.c.b16 %v214, %v212
  %v333 = vpack.c.b16 %v215, %v213
  %v334 = vpack.c.b16 %v218, %v216
  %v335 = vpack.c.b16 %v219, %v217
  %v336 = vpack.c.b16 %v222, %v220
  %v337 = vpack.c.b16 %v223, %v221
  %v338 = vpack.c.b16 %v226, %v224
  %v339 = vpack.c.b16 %v227, %v225
  %v340 = vpack.c.b16 %v230, %v228
  %v341 = vpack.c.b16 %v231, %v229
  %v342 = vpack.c.b16 %v234, %v232
  %v343 = vpack.c.b16 %v235, %v233
  %v344 = vpack.c.b16 %v238, %v236
  %v345 = vpack.c.b16 %v239, %v237
  %v346 = vpack.c.b16 %v242, %v240
  %v347 = vpack.c.b16 %v243, %v241
  %v348 = vpack.c.b16 %v246, %v244
  %v349 = vpack.c.b16 %v247, %v245
  %v350 = vpack.c.b16 %v250, %v248
  %v351 = vpack.c.b16 %v251, %v249
  %v352 = vpack.c.b16 %v254, %v252
  %v353 = vpack.c.b16 %v255, %v253
  %v354 = vpack.c.b16 %v258, %v256
  %v355 = vpack.c.b16 %v259, %v257
  %v356 = vpack.c.b16 %v262, %v260
  %v357 = vpack.c.b16 %v263, %v261
  %v358 = vpack.c.b16 %v266, %v264
  %v359 = vpack.c.b16 %v267, %v265
  %v360 = vpack.c.b16 %v270, %v268
  %v361 = vpack.c.b16 %v271, %v269
  %v362 = vpack.c.b16 %v274, %v272
  %v363 = vpack.c.b16 %v275, %v273
  %v364 = vpack.c.b16 %v278, %v276
  %v365 = vpack.c.b16 %v279, %v277
  %v366 = vpack.c.b16 %v282, %v280
  %v367 = vpack.c.b16 %v283, %v281
  %v368 = vpack.c.b16 %v286, %v284
  %v369 = vpack.c.b16 %v287, %v285
  %v370 = vpack.c.b16 %v290, %v288
  %v371 = vpack.c.b16 %v291, %v289
  %v372 = vpack.c.b16 %v294, %v292
  %v373 = vpack.c.b16 %v295, %v293
  %v374 = vpack.c.b16 %v298, %v296
  %v375 = vpack.c.b16 %v299, %v297
  %v376 = vpack.c.b16 %v302, %v300
  %v377 = vpack.c.b16 %v303, %v301
  %v378 = vpack.c.b16 %v306, %v304
  %v379 = vpack.c.b16 %v307, %v305
  %v380 = vpack.c.b16 %v310, %v308
  %v381 = vpack.c.b16 %v311, %v309
  %v382 = vpack.c.b16 %v314, %v312
  %v383 = vpack.c.b16 %v315, %v313
  %v384 = vpack.c.b16 %v318, %v316
  %v385 = vpack.c.b16 %v319, %v317
  %v386 = vpack.c.b16 %v322, %v320
  %v387 = vpack.c.b16 %v323, %v321
  %452 = vmatpush.bf16.msra.mxu0 %v338
  %453 = vmatpush.bf16.msra.mxu0 %v336
  %454 = vmatpush.bf16.msra.mxu0 %v334
  %455 = vmatpush.bf16.msra.mxu0 %v332
  %456 = vmatpush.bf16.msra.mxu0 %v330
  %457 = vmatpush.bf16.msra.mxu0 %v328
  %458 = vmatpush.bf16.msra.mxu0 %v326
  %459 = vmatpush.bf16.msra.mxu0 %v324
  %460 = vmatmul.bf16.gmra.mxu0 %v116
  %v461 = vpop.f32.mrf.mxu0
  %v462 = vadd.f32 %v88, %v461
  %v463 = vpop.f32.mrf.mxu0
  %v464 = vadd.f32 %v88, %v463
  %465 = vmatmul.bf16.gmra.mxu0 %v120
  %v466 = vpop.f32.mrf.mxu0
  %v467 = vadd.f32 %v88, %v466
  %v468 = vpop.f32.mrf.mxu0
  %v469 = vadd.f32 %v88, %v468
  %470 = vdwg.mxu0
  %471 = vmatpush.bf16.msra.mxu0 %v354
  %472 = vmatpush.bf16.msra.mxu0 %v352
  %473 = vmatpush.bf16.msra.mxu0 %v350
  %474 = vmatpush.bf16.msra.mxu0 %v348
  %475 = vmatpush.bf16.msra.mxu0 %v346
  %476 = vmatpush.bf16.msra.mxu0 %v344
  %477 = vmatpush.bf16.msra.mxu0 %v342
  %478 = vmatpush.bf16.msra.mxu0 %v340
  %479 = vmatmul.bf16.gmra.mxu0 %v117
  %v480 = vpop.f32.mrf.mxu0
  %v481 = vadd.f32 %v462, %v480
  %v482 = vpop.f32.mrf.mxu0
  %v483 = vadd.f32 %v464, %v482
  %484 = vmatmul.bf16.gmra.mxu0 %v121
  %v485 = vpop.f32.mrf.mxu0
  %v486 = vadd.f32 %v467, %v485
  %v487 = vpop.f32.mrf.mxu0
  %v488 = vadd.f32 %v469, %v487
  %489 = vdwg.mxu0
  %490 = vmatpush.bf16.msra.mxu0 %v370
  %491 = vmatpush.bf16.msra.mxu0 %v368
  %492 = vmatpush.bf16.msra.mxu0 %v366
  %493 = vmatpush.bf16.msra.mxu0 %v364
  %494 = vmatpush.bf16.msra.mxu0 %v362
  %495 = vmatpush.bf16.msra.mxu0 %v360
  %496 = vmatpush.bf16.msra.mxu0 %v358
  %497 = vmatpush.bf16.msra.mxu0 %v356
  %498 = vmatmul.bf16.gmra.mxu0 %v118
  %v499 = vpop.f32.mrf.mxu0
  %v500 = vadd.f32 %v481, %v499
  %v501 = vpop.f32.mrf.mxu0
  %v502 = vadd.f32 %v483, %v501
  %503 = vmatmul.bf16.gmra.mxu0 %v122
  %v504 = vpop.f32.mrf.mxu0
  %v505 = vadd.f32 %v486, %v504
  %v506 = vpop.f32.mrf.mxu0
  %v507 = vadd.f32 %v488, %v506
  %508 = vdwg.mxu0
  %509 = vmatpush.bf16.msra.mxu0 %v386
  %510 = vmatpush.bf16.msra.mxu0 %v384
  %511 = vmatpush.bf16.msra.mxu0 %v382
  %512 = vmatpush.bf16.msra.mxu0 %v380
  %513 = vmatpush.bf16.msra.mxu0 %v378
  %514 = vmatpush.bf16.msra.mxu0 %v376
  %515 = vmatpush.bf16.msra.mxu0 %v374
  %516 = vmatpush.bf16.msra.mxu0 %v372
  %517 = vmatmul.bf16.gmra.mxu0 %v119
  %v518 = vpop.f32.mrf.mxu0
  %v519 = vadd.f32 %v500, %v518
  %v520 = vpop.f32.mrf.mxu0
  %v521 = vadd.f32 %v502, %v520
  %522 = vmatmul.bf16.gmra.mxu0 %v123
  %v523 = vpop.f32.mrf.mxu0
  %v524 = vadd.f32 %v505, %v523
  %v525 = vpop.f32.mrf.mxu0
  %v526 = vadd.f32 %v507, %v525
  %527 = vdwg.mxu0
  %528 = vmatpush.bf16.msra.mxu0 %v339
  %529 = vmatpush.bf16.msra.mxu0 %v337
  %530 = vmatpush.bf16.msra.mxu0 %v335
  %531 = vmatpush.bf16.msra.mxu0 %v333
  %532 = vmatpush.bf16.msra.mxu0 %v331
  %533 = vmatpush.bf16.msra.mxu0 %v329
  %534 = vmatpush.bf16.msra.mxu0 %v327
  %535 = vmatpush.bf16.msra.mxu0 %v325
  %536 = vmatmul.bf16.gmra.mxu0 %v116
  %v537 = vpop.f32.mrf.mxu0
  %v538 = vadd.f32 %v89, %v537
  %v539 = vpop.f32.mrf.mxu0
  %v540 = vadd.f32 %v89, %v539
  %541 = vmatmul.bf16.gmra.mxu0 %v120
  %v542 = vpop.f32.mrf.mxu0
  %v543 = vadd.f32 %v89, %v542
  %v544 = vpop.f32.mrf.mxu0
  %v545 = vadd.f32 %v89, %v544
  %546 = vdwg.mxu0
  %547 = vmatpush.bf16.msra.mxu0 %v355
  %548 = vmatpush.bf16.msra.mxu0 %v353
  %549 = vmatpush.bf16.msra.mxu0 %v351
  %550 = vmatpush.bf16.msra.mxu0 %v349
  %551 = vmatpush.bf16.msra.mxu0 %v347
  %552 = vmatpush.bf16.msra.mxu0 %v345
  %553 = vmatpush.bf16.msra.mxu0 %v343
  %554 = vmatpush.bf16.msra.mxu0 %v341
  %555 = vmatmul.bf16.gmra.mxu0 %v117
  %v556 = vpop.f32.mrf.mxu0
  %v557 = vadd.f32 %v538, %v556
  %v558 = vpop.f32.mrf.mxu0
  %v559 = vadd.f32 %v540, %v558
  %560 = vmatmul.bf16.gmra.mxu0 %v121
  %v561 = vpop.f32.mrf.mxu0
  %v562 = vadd.f32 %v543, %v561
  %v563 = vpop.f32.mrf.mxu0
  %v564 = vadd.f32 %v545, %v563
  %565 = vdwg.mxu0
  %566 = vmatpush.bf16.msra.mxu0 %v371
  %567 = vmatpush.bf16.msra.mxu0 %v369
  %568 = vmatpush.bf16.msra.mxu0 %v367
  %569 = vmatpush.bf16.msra.mxu0 %v365
  %570 = vmatpush.bf16.msra.mxu0 %v363
  %571 = vmatpush.bf16.msra.mxu0 %v361
  %572 = vmatpush.bf16.msra.mxu0 %v359
  %573 = vmatpush.bf16.msra.mxu0 %v357
  %574 = vmatmul.bf16.gmra.mxu0 %v118
  %v575 = vpop.f32.mrf.mxu0
  %v576 = vadd.f32 %v557, %v575
  %v577 = vpop.f32.mrf.mxu0
  %v578 = vadd.f32 %v559, %v577
  %579 = vmatmul.bf16.gmra.mxu0 %v122
  %v580 = vpop.f32.mrf.mxu0
  %v581 = vadd.f32 %v562, %v580
  %v582 = vpop.f32.mrf.mxu0
  %v583 = vadd.f32 %v564, %v582
  %584 = vdwg.mxu0
  %585 = vmatpush.bf16.msra.mxu0 %v387
  %586 = vmatpush.bf16.msra.mxu0 %v385
  %587 = vmatpush.bf16.msra.mxu0 %v383
  %588 = vmatpush.bf16.msra.mxu0 %v381
  %589 = vmatpush.bf16.msra.mxu0 %v379
  %590 = vmatpush.bf16.msra.mxu0 %v377
  %591 = vmatpush.bf16.msra.mxu0 %v375
  %592 = vmatpush.bf16.msra.mxu0 %v373
  %593 = vmatmul.bf16.gmra.mxu0 %v119
  %v594 = vpop.f32.mrf.mxu0
  %v595 = vadd.f32 %v576, %v594
  %v596 = vpop.f32.mrf.mxu0
  %v597 = vadd.f32 %v578, %v596
  %598 = vmatmul.bf16.gmra.mxu0 %v123
  %v599 = vpop.f32.mrf.mxu0
  %v600 = vadd.f32 %v581, %v599
  %v601 = vpop.f32.mrf.mxu0
  %v602 = vadd.f32 %v583, %v601
  %603 = vdwg.mxu0
  %v604 = vmax.f32 %v519, 0.0
  %v605 = vmax.f32 %v595, 0.0
  %v606 = vmax.f32 %v521, 0.0
  %v607 = vmax.f32 %v597, 0.0
  %v608 = vmax.f32 %v524, 0.0
  %v609 = vmax.f32 %v600, 0.0
  %v610 = vmax.f32 %v526, 0.0
  %v611 = vmax.f32 %v602, 0.0
  %v612 = vpack.c.bf16 %v605, %v604
  %v613 = vpack.c.bf16 %v607, %v606
  %v614 = vpack.c.bf16 %v609, %v608
  %v615 = vpack.c.bf16 %v611, %v610
  %616 = vst [vmem:[%s3] sm:$0xff] %v612
  %617 = vst [vmem:[%s3 + $0x8] sm:$0xff] %v613
  %618 = vst [vmem:[%s3 + $0x10] sm:$0xff] %v614
  %619 = vst [vmem:[%s3 + $0x18] sm:$0xff] %v615
  // Predicated region
  $region14: #{autoencoder_forward.11} parent=0 // pred_check
    _
  $region15: #{autoencoder_forward.11} parent=0 // pred_check_branch
    %621 = sbr.rel (0) target = $region17
  $region16: #{autoencoder_forward.11} parent=0 // pred_region
    _
  $region17: #{autoencoder_forward.11} parent=0 // pred_fallthru
    _
  // Predicated region
  $region18: #{autoencoder_forward.11} parent=0 // pred_check
    _
  $region19: #{autoencoder_forward.11} parent=0 // pred_check_branch
    %623 = sbr.rel (0) target = $region21
  $region20: #{autoencoder_forward.11} parent=0 // pred_region
    _
  $region21: #{autoencoder_forward.11} parent=0 // pred_fallthru
    _

// kernel: autoencoder_forward.10
$region0: #{autoencoder_forward.10}
  #allocation0 [shape = 'u32[]', space=smem, size = 0x4, offset = 0x4, fixed_abs, tag = 'smem constant byte address 0x4 - core index']
  #allocation1 [shape = 'u32[72,128]{1,0:T(1,128)}', space=vmem, size = 0x9000, scoped, tag = 'internal scratch']
  %s0 = inlined_call_operand.vmem [shape: bf16[2,2048], index: 0, kind: input, shape index: {}]
  %s1 = inlined_call_operand.vmem [shape: bf16[2048,2], index: 1, kind: input, shape index: {}]
  %s2 = inlined_call_operand.vmem [shape: f32[1,2], index: 2, kind: input, shape index: {}]
  %s3 = inlined_call_operand.vmem [shape: bf16[2,2048], index: 3, kind: input, shape index: {}]
  %s4 = inlined_call_operand.vmem [shape: f32[1,2048], index: 4, kind: input, shape index: {}]
  %s5 = inlined_call_operand.vmem [shape: bf16[2,2048], index: 5, kind: output, shape index: {}]
  %s6 = sld [smem:[#allocation0]]
  $region30: #{autoencoder_forward.10} parent=0
    _
  %s8 = ssub.s32 1, %s6
  %s9 = scalar_select 0, %s8, %s6
  // Predicated region
  $region2: #{autoencoder_forward.10} parent=0 // pred_check
    _
  $region3: #{autoencoder_forward.10} parent=0 // pred_check_branch
    %11 = sbr.rel (0) target = $region5
  $region4: #{autoencoder_forward.10} parent=0 // pred_region
    _
  $region5: #{autoencoder_forward.10} parent=0 // pred_fallthru
    _
  // Predicated region
  $region6: #{autoencoder_forward.10} parent=0 // pred_check
    _
  $region7: #{autoencoder_forward.10} parent=0 // pred_check_branch
    %13 = sbr.rel (0) target = $region9
  $region8: #{autoencoder_forward.10} parent=0 // pred_region
    _
  $region9: #{autoencoder_forward.10} parent=0 // pred_fallthru
    _
  // Predicated region
  $region10: #{autoencoder_forward.10} parent=0 // pred_check
    _
  $region11: #{autoencoder_forward.10} parent=0 // pred_check_branch
    %15 = sbr.rel (0) target = $region13
  $region12: #{autoencoder_forward.10} parent=0 // pred_region
    _
  $region13: #{autoencoder_forward.10} parent=0 // pred_fallthru
    _
  // Predicated region
  $region14: #{autoencoder_forward.10} parent=0 // pred_check
    _
  $region15: #{autoencoder_forward.10} parent=0 // pred_check_branch
    %17 = sbr.rel (0) target = $region17
  $region16: #{autoencoder_forward.10} parent=0 // pred_region
    _
  $region17: #{autoencoder_forward.10} parent=0 // pred_fallthru
    _
  // Predicated region
  $region18: #{autoencoder_forward.10} parent=0 // pred_check
    _
  $region19: #{autoencoder_forward.10} parent=0 // pred_check_branch
    %19 = sbr.rel (0) target = $region21
  $region20: #{autoencoder_forward.10} parent=0 // pred_region
    _
  $region21: #{autoencoder_forward.10} parent=0 // pred_fallthru
    _
  %v21 = vld [vmem:[%s0] sm:$0xff]
  %v22 = vld [vmem:[%s0 + $0x8] sm:$0xff]
  %v23 = vld [vmem:[%s1] sm:$0xf]
  %v24 = vld [vmem:[%s1 + $0x4] sm:$0xf]
  %v25 = vld [vmem:[%s1 + $0x8] sm:$0xf]
  %v26 = vld [vmem:[%s1 + $0xc] sm:$0xf]
  %v27 = vld [vmem:[%s1 + $0x10] sm:$0xf]
  %v28 = vld [vmem:[%s1 + $0x14] sm:$0xf]
  %v29 = vld [vmem:[%s1 + $0x18] sm:$0xf]
  %v30 = vld [vmem:[%s1 + $0x1c] sm:$0xf]
  %v31 = vld [vmem:[%s1 + $0x20] sm:$0xf]
  %v32 = vld [vmem:[%s1 + $0x24] sm:$0xf]
  %v33 = vld [vmem:[%s1 + $0x28] sm:$0xf]
  %v34 = vld [vmem:[%s1 + $0x2c] sm:$0xf]
  %v35 = vld [vmem:[%s1 + $0x30] sm:$0xf]
  %v36 = vld [vmem:[%s1 + $0x34] sm:$0xf]
  %v37 = vld [vmem:[%s1 + $0x38] sm:$0xf]
  %v38 = vld [vmem:[%s1 + $0x3c] sm:$0xf]
  %v39 = vld [vmem:[%s1 + $0x40] sm:$0xf]
  %v40 = vld [vmem:[%s1 + $0x44] sm:$0xf]
  %v41 = vld [vmem:[%s1 + $0x48] sm:$0xf]
  %v42 = vld [vmem:[%s1 + $0x4c] sm:$0xf]
  %v43 = vld [vmem:[%s1 + $0x50] sm:$0xf]
  %v44 = vld [vmem:[%s1 + $0x54] sm:$0xf]
  %v45 = vld [vmem:[%s1 + $0x58] sm:$0xf]
  %v46 = vld [vmem:[%s1 + $0x5c] sm:$0xf]
  %v47 = vld [vmem:[%s1 + $0x60] sm:$0xf]
  %v48 = vld [vmem:[%s1 + $0x64] sm:$0xf]
  %v49 = vld [vmem:[%s1 + $0x68] sm:$0xf]
  %v50 = vld [vmem:[%s1 + $0x6c] sm:$0xf]
  %v51 = vld [vmem:[%s1 + $0x70] sm:$0xf]
  %v52 = vld [vmem:[%s1 + $0x74] sm:$0xf]
  %v53 = vld [vmem:[%s1 + $0x78] sm:$0xf]
  %v54 = vld [vmem:[%s1 + $0x7c] sm:$0xf]
  %v55 = vld [vmem:[%s1 + $0x80] sm:$0xf]
  %v56 = vld [vmem:[%s1 + $0x84] sm:$0xf]
  %v57 = vld [vmem:[%s1 + $0x88] sm:$0xf]
  %v58 = vld [vmem:[%s1 + $0x8c] sm:$0xf]
  %v59 = vld [vmem:[%s1 + $0x90] sm:$0xf]
  %v60 = vld [vmem:[%s1 + $0x94] sm:$0xf]
  %v61 = vld [vmem:[%s1 + $0x98] sm:$0xf]
  %v62 = vld [vmem:[%s1 + $0x9c] sm:$0xf]
  %v63 = vld [vmem:[%s1 + $0xa0] sm:$0xf]
  %v64 = vld [vmem:[%s1 + $0xa4] sm:$0xf]
  %v65 = vld [vmem:[%s1 + $0xa8] sm:$0xf]
  %v66 = vld [vmem:[%s1 + $0xac] sm:$0xf]
  %v67 = vld [vmem:[%s1 + $0xb0] sm:$0xf]
  %v68 = vld [vmem:[%s1 + $0xb4] sm:$0xf]
  %v69 = vld [vmem:[%s1 + $0xb8] sm:$0xf]
  %v70 = vld [vmem:[%s1 + $0xbc] sm:$0xf]
  %v71 = vld [vmem:[%s1 + $0xc0] sm:$0xf]
  %v72 = vld [vmem:[%s1 + $0xc4] sm:$0xf]
  %v73 = vld [vmem:[%s1 + $0xc8] sm:$0xf]
  %v74 = vld [vmem:[%s1 + $0xcc] sm:$0xf]
  %v75 = vld [vmem:[%s1 + $0xd0] sm:$0xf]
  %v76 = vld [vmem:[%s1 + $0xd4] sm:$0xf]
  %v77 = vld [vmem:[%s1 + $0xd8] sm:$0xf]
  %v78 = vld [vmem:[%s1 + $0xdc] sm:$0xf]
  %v79 = vld [vmem:[%s1 + $0xe0] sm:$0xf]
  %v80 = vld [vmem:[%s1 + $0xe4] sm:$0xf]
  %v81 = vld [vmem:[%s1 + $0xe8] sm:$0xf]
  %v82 = vld [vmem:[%s1 + $0xec] sm:$0xf]
  %v83 = vld [vmem:[%s1 + $0xf0] sm:$0xf]
  %v84 = vld [vmem:[%s1 + $0xf4] sm:$0xf]
  %v85 = vld [vmem:[%s1 + $0xf8] sm:$0xf]
  %v86 = vld [vmem:[%s1 + $0xfc] sm:$0xf]
  %v87 = vld [vmem:[%s1 + $0x100] sm:$0xf]
  %v88 = vld [vmem:[%s1 + $0x104] sm:$0xf]
  %v89 = vld [vmem:[%s1 + $0x108] sm:$0xf]
  %v90 = vld [vmem:[%s1 + $0x10c] sm:$0xf]
  %v91 = vld [vmem:[%s1 + $0x110] sm:$0xf]
  %v92 = vld [vmem:[%s1 + $0x114] sm:$0xf]
  %v93 = vld [vmem:[%s1 + $0x118] sm:$0xf]
  %v94 = vld [vmem:[%s1 + $0x11c] sm:$0xf]
  %v95 = vld [vmem:[%s1 + $0x120] sm:$0xf]
  %v96 = vld [vmem:[%s1 + $0x124] sm:$0xf]
  %v97 = vld [vmem:[%s1 + $0x128] sm:$0xf]
  %v98 = vld [vmem:[%s1 + $0x12c] sm:$0xf]
  %v99 = vld [vmem:[%s1 + $0x130] sm:$0xf]
  %v100 = vld [vmem:[%s1 + $0x134] sm:$0xf]
  %v101 = vld [vmem:[%s1 + $0x138] sm:$0xf]
  %v102 = vld [vmem:[%s1 + $0x13c] sm:$0xf]
  %v103 = vld [vmem:[%s1 + $0x140] sm:$0xf]
  %v104 = vld [vmem:[%s1 + $0x144] sm:$0xf]
  %v105 = vld [vmem:[%s1 + $0x148] sm:$0xf]
  %v106 = vld [vmem:[%s1 + $0x14c] sm:$0xf]
  %v107 = vld [vmem:[%s1 + $0x150] sm:$0xf]
  %v108 = vld [vmem:[%s1 + $0x154] sm:$0xf]
  %v109 = vld [vmem:[%s1 + $0x158] sm:$0xf]
  %v110 = vld [vmem:[%s1 + $0x15c] sm:$0xf]
  %v111 = vld [vmem:[%s1 + $0x160] sm:$0xf]
  %v112 = vld [vmem:[%s1 + $0x164] sm:$0xf]
  %v113 = vld [vmem:[%s1 + $0x168] sm:$0xf]
  %v114 = vld [vmem:[%s1 + $0x16c] sm:$0xf]
  %v115 = vld [vmem:[%s1 + $0x170] sm:$0xf]
  %v116 = vld [vmem:[%s1 + $0x174] sm:$0xf]
  %v117 = vld [vmem:[%s1 + $0x178] sm:$0xf]
  %v118 = vld [vmem:[%s1 + $0x17c] sm:$0xf]
  %v119 = vld [vmem:[%s1 + $0x180] sm:$0xf]
  %v120 = vld [vmem:[%s1 + $0x184] sm:$0xf]
  %v121 = vld [vmem:[%s1 + $0x188] sm:$0xf]
  %v122 = vld [vmem:[%s1 + $0x18c] sm:$0xf]
  %v123 = vld [vmem:[%s1 + $0x190] sm:$0xf]
  %v124 = vld [vmem:[%s1 + $0x194] sm:$0xf]
  %v125 = vld [vmem:[%s1 + $0x198] sm:$0xf]
  %v126 = vld [vmem:[%s1 + $0x19c] sm:$0xf]
  %v127 = vld [vmem:[%s1 + $0x1a0] sm:$0xf]
  %v128 = vld [vmem:[%s1 + $0x1a4] sm:$0xf]
  %v129 = vld [vmem:[%s1 + $0x1a8] sm:$0xf]
  %v130 = vld [vmem:[%s1 + $0x1ac] sm:$0xf]
  %v131 = vld [vmem:[%s1 + $0x1b0] sm:$0xf]
  %v132 = vld [vmem:[%s1 + $0x1b4] sm:$0xf]
  %v133 = vld [vmem:[%s1 + $0x1b8] sm:$0xf]
  %v134 = vld [vmem:[%s1 + $0x1bc] sm:$0xf]
  %v135 = vld [vmem:[%s1 + $0x1c0] sm:$0xf]
  %v136 = vld [vmem:[%s1 + $0x1c4] sm:$0xf]
  %v137 = vld [vmem:[%s1 + $0x1c8] sm:$0xf]
  %v138 = vld [vmem:[%s1 + $0x1cc] sm:$0xf]
  %v139 = vld [vmem:[%s1 + $0x1d0] sm:$0xf]
  %v140 = vld [vmem:[%s1 + $0x1d4] sm:$0xf]
  %v141 = vld [vmem:[%s1 + $0x1d8] sm:$0xf]
  %v142 = vld [vmem:[%s1 + $0x1dc] sm:$0xf]
  %v143 = vld [vmem:[%s1 + $0x1e0] sm:$0xf]
  %v144 = vld [vmem:[%s1 + $0x1e4] sm:$0xf]
  %v145 = vld [vmem:[%s1 + $0x1e8] sm:$0xf]
  %v146 = vld [vmem:[%s1 + $0x1ec] sm:$0xf]
  %v147 = vld [vmem:[%s1 + $0x1f0] sm:$0xf]
  %v148 = vld [vmem:[%s1 + $0x1f4] sm:$0xf]
  %v149 = vld [vmem:[%s1 + $0x1f8] sm:$0xf]
  %v150 = vld [vmem:[%s1 + $0x1fc] sm:$0xf]
  %v151 = vld [vmem:[%s1 + $0x200] sm:$0xf]
  %v152 = vld [vmem:[%s1 + $0x204] sm:$0xf]
  %v153 = vld [vmem:[%s1 + $0x208] sm:$0xf]
  %v154 = vld [vmem:[%s1 + $0x20c] sm:$0xf]
  %v155 = vld [vmem:[%s1 + $0x210] sm:$0xf]
  %v156 = vld [vmem:[%s1 + $0x214] sm:$0xf]
  %v157 = vld [vmem:[%s1 + $0x218] sm:$0xf]
  %v158 = vld [vmem:[%s1 + $0x21c] sm:$0xf]
  %v159 = vld [vmem:[%s1 + $0x220] sm:$0xf]
  %v160 = vld [vmem:[%s1 + $0x224] sm:$0xf]
  %v161 = vld [vmem:[%s1 + $0x228] sm:$0xf]
  %v162 = vld [vmem:[%s1 + $0x22c] sm:$0xf]
  %v163 = vld [vmem:[%s1 + $0x230] sm:$0xf]
  %v164 = vld [vmem:[%s1 + $0x234] sm:$0xf]
  %v165 = vld [vmem:[%s1 + $0x238] sm:$0xf]
  %v166 = vld [vmem:[%s1 + $0x23c] sm:$0xf]
  %v167 = vld [vmem:[%s1 + $0x240] sm:$0xf]
  %v168 = vld [vmem:[%s1 + $0x244] sm:$0xf]
  %v169 = vld [vmem:[%s1 + $0x248] sm:$0xf]
  %v170 = vld [vmem:[%s1 + $0x24c] sm:$0xf]
  %v171 = vld [vmem:[%s1 + $0x250] sm:$0xf]
  %v172 = vld [vmem:[%s1 + $0x254] sm:$0xf]
  %v173 = vld [vmem:[%s1 + $0x258] sm:$0xf]
  %v174 = vld [vmem:[%s1 + $0x25c] sm:$0xf]
  %v175 = vld [vmem:[%s1 + $0x260] sm:$0xf]
  %v176 = vld [vmem:[%s1 + $0x264] sm:$0xf]
  %v177 = vld [vmem:[%s1 + $0x268] sm:$0xf]
  %v178 = vld [vmem:[%s1 + $0x26c] sm:$0xf]
  %v179 = vld [vmem:[%s1 + $0x270] sm:$0xf]
  %v180 = vld [vmem:[%s1 + $0x274] sm:$0xf]
  %v181 = vld [vmem:[%s1 + $0x278] sm:$0xf]
  %v182 = vld [vmem:[%s1 + $0x27c] sm:$0xf]
  %v183 = vld [vmem:[%s1 + $0x280] sm:$0xf]
  %v184 = vld [vmem:[%s1 + $0x284] sm:$0xf]
  %v185 = vld [vmem:[%s1 + $0x288] sm:$0xf]
  %v186 = vld [vmem:[%s1 + $0x28c] sm:$0xf]
  %v187 = vld [vmem:[%s1 + $0x290] sm:$0xf]
  %v188 = vld [vmem:[%s1 + $0x294] sm:$0xf]
  %v189 = vld [vmem:[%s1 + $0x298] sm:$0xf]
  %v190 = vld [vmem:[%s1 + $0x29c] sm:$0xf]
  %v191 = vld [vmem:[%s1 + $0x2a0] sm:$0xf]
  %v192 = vld [vmem:[%s1 + $0x2a4] sm:$0xf]
  %v193 = vld [vmem:[%s1 + $0x2a8] sm:$0xf]
  %v194 = vld [vmem:[%s1 + $0x2ac] sm:$0xf]
  %v195 = vld [vmem:[%s1 + $0x2b0] sm:$0xf]
  %v196 = vld [vmem:[%s1 + $0x2b4] sm:$0xf]
  %v197 = vld [vmem:[%s1 + $0x2b8] sm:$0xf]
  %v198 = vld [vmem:[%s1 + $0x2bc] sm:$0xf]
  %v199 = vld [vmem:[%s1 + $0x2c0] sm:$0xf]
  %v200 = vld [vmem:[%s1 + $0x2c4] sm:$0xf]
  %v201 = vld [vmem:[%s1 + $0x2c8] sm:$0xf]
  %v202 = vld [vmem:[%s1 + $0x2cc] sm:$0xf]
  %v203 = vld [vmem:[%s1 + $0x2d0] sm:$0xf]
  %v204 = vld [vmem:[%s1 + $0x2d4] sm:$0xf]
  %v205 = vld [vmem:[%s1 + $0x2d8] sm:$0xf]
  %v206 = vld [vmem:[%s1 + $0x2dc] sm:$0xf]
  %v207 = vld [vmem:[%s1 + $0x2e0] sm:$0xf]
  %v208 = vld [vmem:[%s1 + $0x2e4] sm:$0xf]
  %v209 = vld [vmem:[%s1 + $0x2e8] sm:$0xf]
  %v210 = vld [vmem:[%s1 + $0x2ec] sm:$0xf]
  %v211 = vld [vmem:[%s1 + $0x2f0] sm:$0xf]
  %v212 = vld [vmem:[%s1 + $0x2f4] sm:$0xf]
  %v213 = vld [vmem:[%s1 + $0x2f8] sm:$0xf]
  %v214 = vld [vmem:[%s1 + $0x2fc] sm:$0xf]
  %v215 = vld [vmem:[%s1 + $0x300] sm:$0xf]
  %v216 = vld [vmem:[%s1 + $0x304] sm:$0xf]
  %v217 = vld [vmem:[%s1 + $0x308] sm:$0xf]
  %v218 = vld [vmem:[%s1 + $0x30c] sm:$0xf]
  %v219 = vld [vmem:[%s1 + $0x310] sm:$0xf]
  %v220 = vld [vmem:[%s1 + $0x314] sm:$0xf]
  %v221 = vld [vmem:[%s1 + $0x318] sm:$0xf]
  %v222 = vld [vmem:[%s1 + $0x31c] sm:$0xf]
  %v223 = vld [vmem:[%s1 + $0x320] sm:$0xf]
  %v224 = vld [vmem:[%s1 + $0x324] sm:$0xf]
  %v225 = vld [vmem:[%s1 + $0x328] sm:$0xf]
  %v226 = vld [vmem:[%s1 + $0x32c] sm:$0xf]
  %v227 = vld [vmem:[%s1 + $0x330] sm:$0xf]
  %v228 = vld [vmem:[%s1 + $0x334] sm:$0xf]
  %v229 = vld [vmem:[%s1 + $0x338] sm:$0xf]
  %v230 = vld [vmem:[%s1 + $0x33c] sm:$0xf]
  %v231 = vld [vmem:[%s1 + $0x340] sm:$0xf]
  %v232 = vld [vmem:[%s1 + $0x344] sm:$0xf]
  %v233 = vld [vmem:[%s1 + $0x348] sm:$0xf]
  %v234 = vld [vmem:[%s1 + $0x34c] sm:$0xf]
  %v235 = vld [vmem:[%s1 + $0x350] sm:$0xf]
  %v236 = vld [vmem:[%s1 + $0x354] sm:$0xf]
  %v237 = vld [vmem:[%s1 + $0x358] sm:$0xf]
  %v238 = vld [vmem:[%s1 + $0x35c] sm:$0xf]
  %v239 = vld [vmem:[%s1 + $0x360] sm:$0xf]
  %v240 = vld [vmem:[%s1 + $0x364] sm:$0xf]
  %v241 = vld [vmem:[%s1 + $0x368] sm:$0xf]
  %v242 = vld [vmem:[%s1 + $0x36c] sm:$0xf]
  %v243 = vld [vmem:[%s1 + $0x370] sm:$0xf]
  %v244 = vld [vmem:[%s1 + $0x374] sm:$0xf]
  %v245 = vld [vmem:[%s1 + $0x378] sm:$0xf]
  %v246 = vld [vmem:[%s1 + $0x37c] sm:$0xf]
  %v247 = vld [vmem:[%s1 + $0x380] sm:$0xf]
  %v248 = vld [vmem:[%s1 + $0x384] sm:$0xf]
  %v249 = vld [vmem:[%s1 + $0x388] sm:$0xf]
  %v250 = vld [vmem:[%s1 + $0x38c] sm:$0xf]
  %v251 = vld [vmem:[%s1 + $0x390] sm:$0xf]
  %v252 = vld [vmem:[%s1 + $0x394] sm:$0xf]
  %v253 = vld [vmem:[%s1 + $0x398] sm:$0xf]
  %v254 = vld [vmem:[%s1 + $0x39c] sm:$0xf]
  %v255 = vld [vmem:[%s1 + $0x3a0] sm:$0xf]
  %v256 = vld [vmem:[%s1 + $0x3a4] sm:$0xf]
  %v257 = vld [vmem:[%s1 + $0x3a8] sm:$0xf]
  %v258 = vld [vmem:[%s1 + $0x3ac] sm:$0xf]
  %v259 = vld [vmem:[%s1 + $0x3b0] sm:$0xf]
  %v260 = vld [vmem:[%s1 + $0x3b4] sm:$0xf]
  %v261 = vld [vmem:[%s1 + $0x3b8] sm:$0xf]
  %v262 = vld [vmem:[%s1 + $0x3bc] sm:$0xf]
  %v263 = vld [vmem:[%s1 + $0x3c0] sm:$0xf]
  %v264 = vld [vmem:[%s1 + $0x3c4] sm:$0xf]
  %v265 = vld [vmem:[%s1 + $0x3c8] sm:$0xf]
  %v266 = vld [vmem:[%s1 + $0x3cc] sm:$0xf]
  %v267 = vld [vmem:[%s1 + $0x3d0] sm:$0xf]
  %v268 = vld [vmem:[%s1 + $0x3d4] sm:$0xf]
  %v269 = vld [vmem:[%s1 + $0x3d8] sm:$0xf]
  %v270 = vld [vmem:[%s1 + $0x3dc] sm:$0xf]
  %v271 = vld [vmem:[%s1 + $0x3e0] sm:$0xf]
  %v272 = vld [vmem:[%s1 + $0x3e4] sm:$0xf]
  %v273 = vld [vmem:[%s1 + $0x3e8] sm:$0xf]
  %v274 = vld [vmem:[%s1 + $0x3ec] sm:$0xf]
  %v275 = vld [vmem:[%s1 + $0x3f0] sm:$0xf]
  %v276 = vld [vmem:[%s1 + $0x3f4] sm:$0xf]
  %v277 = vld [vmem:[%s1 + $0x3f8] sm:$0xf]
  %v278 = vld [vmem:[%s1 + $0x3fc] sm:$0xf]
  %v279 = vld [vmem:[%s2] sm:$0x1]
  %v281 = vperm.slane %v279, 0
  %284 = vst [vmem:[#allocation1] ss:$9 sm:$0xff] %v21
  %v285 = vld [vmem:[#allocation1] sm:$0xff]
  %v286 = vld [vmem:[#allocation1 + $0x9] sm:$0xff]
  %v287 = vld [vmem:[#allocation1 + $0x12] sm:$0xff]
  %v288 = vld [vmem:[#allocation1 + $0x1b] sm:$0xff]
  %v289 = vld [vmem:[#allocation1 + $0x24] sm:$0xff]
  %v290 = vld [vmem:[#allocation1 + $0x2d] sm:$0xff]
  %v291 = vld [vmem:[#allocation1 + $0x36] sm:$0xff]
  %v292 = vld [vmem:[#allocation1 + $0x3f] sm:$0xff]
  %294 = vst [vmem:[#allocation1] ss:$9 sm:$0xff] %v22
  %v295 = vld [vmem:[#allocation1] sm:$0xff]
  %v296 = vld [vmem:[#allocation1 + $0x9] sm:$0xff]
  %v297 = vld [vmem:[#allocation1 + $0x12] sm:$0xff]
  %v298 = vld [vmem:[#allocation1 + $0x1b] sm:$0xff]
  %v299 = vld [vmem:[#allocation1 + $0x24] sm:$0xff]
  %v300 = vld [vmem:[#allocation1 + $0x2d] sm:$0xff]
  %v301 = vld [vmem:[#allocation1 + $0x36] sm:$0xff]
  %v302 = vld [vmem:[#allocation1 + $0x3f] sm:$0xff]
  %v575 = vunpack.c.l.b16 %v23
  %v576 = vunpack.c.l.b16 %v24
  %v577 = vunpack.c.l.b16 %v25
  %v578 = vunpack.c.l.b16 %v26
  %v579 = vunpack.c.l.b16 %v27
  %v580 = vunpack.c.l.b16 %v28
  %v581 = vunpack.c.l.b16 %v29
  %v582 = vunpack.c.l.b16 %v30
  %v583 = vunpack.c.l.b16 %v31
  %v584 = vunpack.c.l.b16 %v32
  %v585 = vunpack.c.l.b16 %v33
  %v586 = vunpack.c.l.b16 %v34
  %v587 = vunpack.c.l.b16 %v35
  %v588 = vunpack.c.l.b16 %v36
  %v589 = vunpack.c.l.b16 %v37
  %v590 = vunpack.c.l.b16 %v38
  %v591 = vunpack.c.l.b16 %v39
  %v592 = vunpack.c.l.b16 %v40
  %v593 = vunpack.c.l.b16 %v41
  %v594 = vunpack.c.l.b16 %v42
  %v595 = vunpack.c.l.b16 %v43
  %v596 = vunpack.c.l.b16 %v44
  %v597 = vunpack.c.l.b16 %v45
  %v598 = vunpack.c.l.b16 %v46
  %v599 = vunpack.c.l.b16 %v47
  %v600 = vunpack.c.l.b16 %v48
  %v601 = vunpack.c.l.b16 %v49
  %v602 = vunpack.c.l.b16 %v50
  %v603 = vunpack.c.l.b16 %v51
  %v604 = vunpack.c.l.b16 %v52
  %v605 = vunpack.c.l.b16 %v53
  %v606 = vunpack.c.l.b16 %v54
  %v607 = vunpack.c.l.b16 %v55
  %v608 = vunpack.c.l.b16 %v56
  %v609 = vunpack.c.l.b16 %v57
  %v610 = vunpack.c.l.b16 %v58
  %v611 = vunpack.c.l.b16 %v59
  %v612 = vunpack.c.l.b16 %v60
  %v613 = vunpack.c.l.b16 %v61
  %v614 = vunpack.c.l.b16 %v62
  %v615 = vunpack.c.l.b16 %v63
  %v616 = vunpack.c.l.b16 %v64
  %v617 = vunpack.c.l.b16 %v65
  %v618 = vunpack.c.l.b16 %v66
  %v619 = vunpack.c.l.b16 %v67
  %v620 = vunpack.c.l.b16 %v68
  %v621 = vunpack.c.l.b16 %v69
  %v622 = vunpack.c.l.b16 %v70
  %v623 = vunpack.c.l.b16 %v71
  %v624 = vunpack.c.l.b16 %v72
  %v625 = vunpack.c.l.b16 %v73
  %v626 = vunpack.c.l.b16 %v74
  %v627 = vunpack.c.l.b16 %v75
  %v628 = vunpack.c.l.b16 %v76
  %v629 = vunpack.c.l.b16 %v77
  %v630 = vunpack.c.l.b16 %v78
  %v631 = vunpack.c.l.b16 %v79
  %v632 = vunpack.c.l.b16 %v80
  %v633 = vunpack.c.l.b16 %v81
  %v634 = vunpack.c.l.b16 %v82
  %v635 = vunpack.c.l.b16 %v83
  %v636 = vunpack.c.l.b16 %v84
  %v637 = vunpack.c.l.b16 %v85
  %v638 = vunpack.c.l.b16 %v86
  %v639 = vunpack.c.l.b16 %v87
  %v640 = vunpack.c.l.b16 %v88
  %v641 = vunpack.c.l.b16 %v89
  %v642 = vunpack.c.l.b16 %v90
  %v643 = vunpack.c.l.b16 %v91
  %v644 = vunpack.c.l.b16 %v92
  %v645 = vunpack.c.l.b16 %v93
  %v646 = vunpack.c.l.b16 %v94
  %v647 = vunpack.c.l.b16 %v95
  %v648 = vunpack.c.l.b16 %v96
  %v649 = vunpack.c.l.b16 %v97
  %v650 = vunpack.c.l.b16 %v98
  %v651 = vunpack.c.l.b16 %v99
  %v652 = vunpack.c.l.b16 %v100
  %v653 = vunpack.c.l.b16 %v101
  %v654 = vunpack.c.l.b16 %v102
  %v655 = vunpack.c.l.b16 %v103
  %v656 = vunpack.c.l.b16 %v104
  %v657 = vunpack.c.l.b16 %v105
  %v658 = vunpack.c.l.b16 %v106
  %v659 = vunpack.c.l.b16 %v107
  %v660 = vunpack.c.l.b16 %v108
  %v661 = vunpack.c.l.b16 %v109
  %v662 = vunpack.c.l.b16 %v110
  %v663 = vunpack.c.l.b16 %v111
  %v664 = vunpack.c.l.b16 %v112
  %v665 = vunpack.c.l.b16 %v113
  %v666 = vunpack.c.l.b16 %v114
  %v667 = vunpack.c.l.b16 %v115
  %v668 = vunpack.c.l.b16 %v116
  %v669 = vunpack.c.l.b16 %v117
  %v670 = vunpack.c.l.b16 %v118
  %v671 = vunpack.c.l.b16 %v119
  %v672 = vunpack.c.l.b16 %v120
  %v673 = vunpack.c.l.b16 %v121
  %v674 = vunpack.c.l.b16 %v122
  %v675 = vunpack.c.l.b16 %v123
  %v676 = vunpack.c.l.b16 %v124
  %v677 = vunpack.c.l.b16 %v125
  %v678 = vunpack.c.l.b16 %v126
  %v679 = vunpack.c.l.b16 %v127
  %v680 = vunpack.c.l.b16 %v128
  %v681 = vunpack.c.l.b16 %v129
  %v682 = vunpack.c.l.b16 %v130
  %v683 = vunpack.c.l.b16 %v131
  %v684 = vunpack.c.l.b16 %v132
  %v685 = vunpack.c.l.b16 %v133
  %v686 = vunpack.c.l.b16 %v134
  %v687 = vunpack.c.l.b16 %v135
  %v688 = vunpack.c.l.b16 %v136
  %v689 = vunpack.c.l.b16 %v137
  %v690 = vunpack.c.l.b16 %v138
  %v691 = vunpack.c.l.b16 %v139
  %v692 = vunpack.c.l.b16 %v140
  %v693 = vunpack.c.l.b16 %v141
  %v694 = vunpack.c.l.b16 %v142
  %v695 = vunpack.c.l.b16 %v143
  %v696 = vunpack.c.l.b16 %v144
  %v697 = vunpack.c.l.b16 %v145
  %v698 = vunpack.c.l.b16 %v146
  %v699 = vunpack.c.l.b16 %v147
  %v700 = vunpack.c.l.b16 %v148
  %v701 = vunpack.c.l.b16 %v149
  %v702 = vunpack.c.l.b16 %v150
  %v703 = vunpack.c.l.b16 %v151
  %v704 = vunpack.c.l.b16 %v152
  %v705 = vunpack.c.l.b16 %v153
  %v706 = vunpack.c.l.b16 %v154
  %v707 = vunpack.c.l.b16 %v155
  %v708 = vunpack.c.l.b16 %v156
  %v709 = vunpack.c.l.b16 %v157
  %v710 = vunpack.c.l.b16 %v158
  %v711 = vunpack.c.l.b16 %v159
  %v712 = vunpack.c.l.b16 %v160
  %v713 = vunpack.c.l.b16 %v161
  %v714 = vunpack.c.l.b16 %v162
  %v715 = vunpack.c.l.b16 %v163
  %v716 = vunpack.c.l.b16 %v164
  %v717 = vunpack.c.l.b16 %v165
  %v718 = vunpack.c.l.b16 %v166
  %v719 = vunpack.c.l.b16 %v167
  %v720 = vunpack.c.l.b16 %v168
  %v721 = vunpack.c.l.b16 %v169
  %v722 = vunpack.c.l.b16 %v170
  %v723 = vunpack.c.l.b16 %v171
  %v724 = vunpack.c.l.b16 %v172
  %v725 = vunpack.c.l.b16 %v173
  %v726 = vunpack.c.l.b16 %v174
  %v727 = vunpack.c.l.b16 %v175
  %v728 = vunpack.c.l.b16 %v176
  %v729 = vunpack.c.l.b16 %v177
  %v730 = vunpack.c.l.b16 %v178
  %v731 = vunpack.c.l.b16 %v179
  %v732 = vunpack.c.l.b16 %v180
  %v733 = vunpack.c.l.b16 %v181
  %v734 = vunpack.c.l.b16 %v182
  %v735 = vunpack.c.l.b16 %v183
  %v736 = vunpack.c.l.b16 %v184
  %v737 = vunpack.c.l.b16 %v185
  %v738 = vunpack.c.l.b16 %v186
  %v739 = vunpack.c.l.b16 %v187
  %v740 = vunpack.c.l.b16 %v188
  %v741 = vunpack.c.l.b16 %v189
  %v742 = vunpack.c.l.b16 %v190
  %v743 = vunpack.c.l.b16 %v191
  %v744 = vunpack.c.l.b16 %v192
  %v745 = vunpack.c.l.b16 %v193
  %v746 = vunpack.c.l.b16 %v194
  %v747 = vunpack.c.l.b16 %v195
  %v748 = vunpack.c.l.b16 %v196
  %v749 = vunpack.c.l.b16 %v197
  %v750 = vunpack.c.l.b16 %v198
  %v751 = vunpack.c.l.b16 %v199
  %v752 = vunpack.c.l.b16 %v200
  %v753 = vunpack.c.l.b16 %v201
  %v754 = vunpack.c.l.b16 %v202
  %v755 = vunpack.c.l.b16 %v203
  %v756 = vunpack.c.l.b16 %v204
  %v757 = vunpack.c.l.b16 %v205
  %v758 = vunpack.c.l.b16 %v206
  %v759 = vunpack.c.l.b16 %v207
  %v760 = vunpack.c.l.b16 %v208
  %v761 = vunpack.c.l.b16 %v209
  %v762 = vunpack.c.l.b16 %v210
  %v763 = vunpack.c.l.b16 %v211
  %v764 = vunpack.c.l.b16 %v212
  %v765 = vunpack.c.l.b16 %v213
  %v766 = vunpack.c.l.b16 %v214
  %v767 = vunpack.c.l.b16 %v215
  %v768 = vunpack.c.l.b16 %v216
  %v769 = vunpack.c.l.b16 %v217
  %v770 = vunpack.c.l.b16 %v218
  %v771 = vunpack.c.l.b16 %v219
  %v772 = vunpack.c.l.b16 %v220
  %v773 = vunpack.c.l.b16 %v221
  %v774 = vunpack.c.l.b16 %v222
  %v775 = vunpack.c.l.b16 %v223
  %v776 = vunpack.c.l.b16 %v224
  %v777 = vunpack.c.l.b16 %v225
  %v778 = vunpack.c.l.b16 %v226
  %v779 = vunpack.c.l.b16 %v227
  %v780 = vunpack.c.l.b16 %v228
  %v781 = vunpack.c.l.b16 %v229
  %v782 = vunpack.c.l.b16 %v230
  %v783 = vunpack.c.l.b16 %v231
  %v784 = vunpack.c.l.b16 %v232
  %v785 = vunpack.c.l.b16 %v233
  %v786 = vunpack.c.l.b16 %v234
  %v787 = vunpack.c.l.b16 %v235
  %v788 = vunpack.c.l.b16 %v236
  %v789 = vunpack.c.l.b16 %v237
  %v790 = vunpack.c.l.b16 %v238
  %v791 = vunpack.c.l.b16 %v239
  %v792 = vunpack.c.l.b16 %v240
  %v793 = vunpack.c.l.b16 %v241
  %v794 = vunpack.c.l.b16 %v242
  %v795 = vunpack.c.l.b16 %v243
  %v796 = vunpack.c.l.b16 %v244
  %v797 = vunpack.c.l.b16 %v245
  %v798 = vunpack.c.l.b16 %v246
  %v799 = vunpack.c.l.b16 %v247
  %v800 = vunpack.c.l.b16 %v248
  %v801 = vunpack.c.l.b16 %v249
  %v802 = vunpack.c.l.b16 %v250
  %v803 = vunpack.c.l.b16 %v251
  %v804 = vunpack.c.l.b16 %v252
  %v805 = vunpack.c.l.b16 %v253
  %v806 = vunpack.c.l.b16 %v254
  %v807 = vunpack.c.l.b16 %v255
  %v808 = vunpack.c.l.b16 %v256
  %v809 = vunpack.c.l.b16 %v257
  %v810 = vunpack.c.l.b16 %v258
  %v811 = vunpack.c.l.b16 %v259
  %v812 = vunpack.c.l.b16 %v260
  %v813 = vunpack.c.l.b16 %v261
  %v814 = vunpack.c.l.b16 %v262
  %v815 = vunpack.c.l.b16 %v263
  %v816 = vunpack.c.l.b16 %v264
  %v817 = vunpack.c.l.b16 %v265
  %v818 = vunpack.c.l.b16 %v266
  %v819 = vunpack.c.l.b16 %v267
  %v820 = vunpack.c.l.b16 %v268
  %v821 = vunpack.c.l.b16 %v269
  %v822 = vunpack.c.l.b16 %v270
  %v823 = vunpack.c.l.b16 %v271
  %v824 = vunpack.c.l.b16 %v272
  %v825 = vunpack.c.l.b16 %v273
  %v826 = vunpack.c.l.b16 %v274
  %v827 = vunpack.c.l.b16 %v275
  %v828 = vunpack.c.l.b16 %v276
  %v829 = vunpack.c.l.b16 %v277
  %v830 = vunpack.c.l.b16 %v278
  %v831 = vpack.c.b16 %v576, %v575
  %v832 = vpack.c.b16 %v578, %v577
  %v833 = vpack.c.b16 %v580, %v579
  %v834 = vpack.c.b16 %v582, %v581
  %v835 = vpack.c.b16 %v584, %v583
  %v836 = vpack.c.b16 %v586, %v585
  %v837 = vpack.c.b16 %v588, %v587
  %v838 = vpack.c.b16 %v590, %v589
  %v839 = vpack.c.b16 %v592, %v591
  %v840 = vpack.c.b16 %v594, %v593
  %v841 = vpack.c.b16 %v596, %v595
  %v842 = vpack.c.b16 %v598, %v597
  %v843 = vpack.c.b16 %v600, %v599
  %v844 = vpack.c.b16 %v602, %v601
  %v845 = vpack.c.b16 %v604, %v603
  %v846 = vpack.c.b16 %v606, %v605
  %v847 = vpack.c.b16 %v608, %v607
  %v848 = vpack.c.b16 %v610, %v609
  %v849 = vpack.c.b16 %v612, %v611
  %v850 = vpack.c.b16 %v614, %v613
  %v851 = vpack.c.b16 %v616, %v615
  %v852 = vpack.c.b16 %v618, %v617
  %v853 = vpack.c.b16 %v620, %v619
  %v854 = vpack.c.b16 %v622, %v621
  %v855 = vpack.c.b16 %v624, %v623
  %v856 = vpack.c.b16 %v626, %v625
  %v857 = vpack.c.b16 %v628, %v627
  %v858 = vpack.c.b16 %v630, %v629
  %v859 = vpack.c.b16 %v632, %v631
  %v860 = vpack.c.b16 %v634, %v633
  %v861 = vpack.c.b16 %v636, %v635
  %v862 = vpack.c.b16 %v638, %v637
  %v863 = vpack.c.b16 %v640, %v639
  %v864 = vpack.c.b16 %v642, %v641
  %v865 = vpack.c.b16 %v644, %v643
  %v866 = vpack.c.b16 %v646, %v645
  %v867 = vpack.c.b16 %v648, %v647
  %v868 = vpack.c.b16 %v650, %v649
  %v869 = vpack.c.b16 %v652, %v651
  %v870 = vpack.c.b16 %v654, %v653
  %v871 = vpack.c.b16 %v656, %v655
  %v872 = vpack.c.b16 %v658, %v657
  %v873 = vpack.c.b16 %v660, %v659
  %v874 = vpack.c.b16 %v662, %v661
  %v875 = vpack.c.b16 %v664, %v663
  %v876 = vpack.c.b16 %v666, %v665
  %v877 = vpack.c.b16 %v668, %v667
  %v878 = vpack.c.b16 %v670, %v669
  %v879 = vpack.c.b16 %v672, %v671
  %v880 = vpack.c.b16 %v674, %v673
  %v881 = vpack.c.b16 %v676, %v675
  %v882 = vpack.c.b16 %v678, %v677
  %v883 = vpack.c.b16 %v680, %v679
  %v884 = vpack.c.b16 %v682, %v681
  %v885 = vpack.c.b16 %v684, %v683
  %v886 = vpack.c.b16 %v686, %v685
  %v887 = vpack.c.b16 %v688, %v687
  %v888 = vpack.c.b16 %v690, %v689
  %v889 = vpack.c.b16 %v692, %v691
  %v890 = vpack.c.b16 %v694, %v693
  %v891 = vpack.c.b16 %v696, %v695
  %v892 = vpack.c.b16 %v698, %v697
  %v893 = vpack.c.b16 %v700, %v699
  %v894 = vpack.c.b16 %v702, %v701
  %v895 = vpack.c.b16 %v704, %v703
  %v896 = vpack.c.b16 %v706, %v705
  %v897 = vpack.c.b16 %v708, %v707
  %v898 = vpack.c.b16 %v710, %v709
  %v899 = vpack.c.b16 %v712, %v711
  %v900 = vpack.c.b16 %v714, %v713
  %v901 = vpack.c.b16 %v716, %v715
  %v902 = vpack.c.b16 %v718, %v717
  %v903 = vpack.c.b16 %v720, %v719
  %v904 = vpack.c.b16 %v722, %v721
  %v905 = vpack.c.b16 %v724, %v723
  %v906 = vpack.c.b16 %v726, %v725
  %v907 = vpack.c.b16 %v728, %v727
  %v908 = vpack.c.b16 %v730, %v729
  %v909 = vpack.c.b16 %v732, %v731
  %v910 = vpack.c.b16 %v734, %v733
  %v911 = vpack.c.b16 %v736, %v735
  %v912 = vpack.c.b16 %v738, %v737
  %v913 = vpack.c.b16 %v740, %v739
  %v914 = vpack.c.b16 %v742, %v741
  %v915 = vpack.c.b16 %v744, %v743
  %v916 = vpack.c.b16 %v746, %v745
  %v917 = vpack.c.b16 %v748, %v747
  %v918 = vpack.c.b16 %v750, %v749
  %v919 = vpack.c.b16 %v752, %v751
  %v920 = vpack.c.b16 %v754, %v753
  %v921 = vpack.c.b16 %v756, %v755
  %v922 = vpack.c.b16 %v758, %v757
  %v923 = vpack.c.b16 %v760, %v759
  %v924 = vpack.c.b16 %v762, %v761
  %v925 = vpack.c.b16 %v764, %v763
  %v926 = vpack.c.b16 %v766, %v765
  %v927 = vpack.c.b16 %v768, %v767
  %v928 = vpack.c.b16 %v770, %v769
  %v929 = vpack.c.b16 %v772, %v771
  %v930 = vpack.c.b16 %v774, %v773
  %v931 = vpack.c.b16 %v776, %v775
  %v932 = vpack.c.b16 %v778, %v777
  %v933 = vpack.c.b16 %v780, %v779
  %v934 = vpack.c.b16 %v782, %v781
  %v935 = vpack.c.b16 %v784, %v783
  %v936 = vpack.c.b16 %v786, %v785
  %v937 = vpack.c.b16 %v788, %v787
  %v938 = vpack.c.b16 %v790, %v789
  %v939 = vpack.c.b16 %v792, %v791
  %v940 = vpack.c.b16 %v794, %v793
  %v941 = vpack.c.b16 %v796, %v795
  %v942 = vpack.c.b16 %v798, %v797
  %v943 = vpack.c.b16 %v800, %v799
  %v944 = vpack.c.b16 %v802, %v801
  %v945 = vpack.c.b16 %v804, %v803
  %v946 = vpack.c.b16 %v806, %v805
  %v947 = vpack.c.b16 %v808, %v807
  %v948 = vpack.c.b16 %v810, %v809
  %v949 = vpack.c.b16 %v812, %v811
  %v950 = vpack.c.b16 %v814, %v813
  %v951 = vpack.c.b16 %v816, %v815
  %v952 = vpack.c.b16 %v818, %v817
  %v953 = vpack.c.b16 %v820, %v819
  %v954 = vpack.c.b16 %v822, %v821
  %v955 = vpack.c.b16 %v824, %v823
  %v956 = vpack.c.b16 %v826, %v825
  %v957 = vpack.c.b16 %v828, %v827
  %v958 = vpack.c.b16 %v830, %v829
  %1087 = vmatpush.bf16.msra.mxu0 %v838
  %1088 = vmatpush.bf16.msra.mxu0 %v837
  %1089 = vmatpush.bf16.msra.mxu0 %v836
  %1090 = vmatpush.bf16.msra.mxu0 %v835
  %1091 = vmatpush.bf16.msra.mxu0 %v834
  %1092 = vmatpush.bf16.msra.mxu0 %v833
  %1093 = vmatpush.bf16.msra.mxu0 %v832
  %1094 = vmatpush.bf16.msra.mxu0 %v831
  %1095 = vmatmul.bf16.gmra.mxu0 %v285
  %v1096 = vpop.f32.mrf.mxu0
  %v1097 = vadd.f32 %v281, %v1096
  %v1098 = vpop.f32.mrf.mxu0
  %1099 = vdwg.mxu0
  %1100 = vmatpush.bf16.msra.mxu0 %v846
  %1101 = vmatpush.bf16.msra.mxu0 %v845
  %1102 = vmatpush.bf16.msra.mxu0 %v844
  %1103 = vmatpush.bf16.msra.mxu0 %v843
  %1104 = vmatpush.bf16.msra.mxu0 %v842
  %1105 = vmatpush.bf16.msra.mxu0 %v841
  %1106 = vmatpush.bf16.msra.mxu0 %v840
  %1107 = vmatpush.bf16.msra.mxu0 %v839
  %1108 = vmatmul.bf16.gmra.mxu0 %v286
  %v1109 = vpop.f32.mrf.mxu0
  %v1110 = vadd.f32 %v1097, %v1109
  %v1111 = vpop.f32.mrf.mxu0
  %1112 = vdwg.mxu0
  %1113 = vmatpush.bf16.msra.mxu0 %v854
  %1114 = vmatpush.bf16.msra.mxu0 %v853
  %1115 = vmatpush.bf16.msra.mxu0 %v852
  %1116 = vmatpush.bf16.msra.mxu0 %v851
  %1117 = vmatpush.bf16.msra.mxu0 %v850
  %1118 = vmatpush.bf16.msra.mxu0 %v849
  %1119 = vmatpush.bf16.msra.mxu0 %v848
  %1120 = vmatpush.bf16.msra.mxu0 %v847
  %1121 = vmatmul.bf16.gmra.mxu0 %v287
  %v1122 = vpop.f32.mrf.mxu0
  %v1123 = vadd.f32 %v1110, %v1122
  %v1124 = vpop.f32.mrf.mxu0
  %1125 = vdwg.mxu0
  %1126 = vmatpush.bf16.msra.mxu0 %v862
  %1127 = vmatpush.bf16.msra.mxu0 %v861
  %1128 = vmatpush.bf16.msra.mxu0 %v860
  %1129 = vmatpush.bf16.msra.mxu0 %v859
  %1130 = vmatpush.bf16.msra.mxu0 %v858
  %1131 = vmatpush.bf16.msra.mxu0 %v857
  %1132 = vmatpush.bf16.msra.mxu0 %v856
  %1133 = vmatpush.bf16.msra.mxu0 %v855
  %1134 = vmatmul.bf16.gmra.mxu0 %v288
  %v1135 = vpop.f32.mrf.mxu0
  %v1136 = vadd.f32 %v1123, %v1135
  %v1137 = vpop.f32.mrf.mxu0
  %1138 = vdwg.mxu0
  %1139 = vmatpush.bf16.msra.mxu0 %v870
  %1140 = vmatpush.bf16.msra.mxu0 %v869
  %1141 = vmatpush.bf16.msra.mxu0 %v868
  %1142 = vmatpush.bf16.msra.mxu0 %v867
  %1143 = vmatpush.bf16.msra.mxu0 %v866
  %1144 = vmatpush.bf16.msra.mxu0 %v865
  %1145 = vmatpush.bf16.msra.mxu0 %v864
  %1146 = vmatpush.bf16.msra.mxu0 %v863
  %1147 = vmatmul.bf16.gmra.mxu0 %v289
  %v1148 = vpop.f32.mrf.mxu0
  %v1149 = vadd.f32 %v1136, %v1148
  %v1150 = vpop.f32.mrf.mxu0
  %1151 = vdwg.mxu0
  %1152 = vmatpush.bf16.msra.mxu0 %v878
  %1153 = vmatpush.bf16.msra.mxu0 %v877
  %1154 = vmatpush.bf16.msra.mxu0 %v876
  %1155 = vmatpush.bf16.msra.mxu0 %v875
  %1156 = vmatpush.bf16.msra.mxu0 %v874
  %1157 = vmatpush.bf16.msra.mxu0 %v873
  %1158 = vmatpush.bf16.msra.mxu0 %v872
  %1159 = vmatpush.bf16.msra.mxu0 %v871
  %1160 = vmatmul.bf16.gmra.mxu0 %v290
  %v1161 = vpop.f32.mrf.mxu0
  %v1162 = vadd.f32 %v1149, %v1161
  %v1163 = vpop.f32.mrf.mxu0
  %1164 = vdwg.mxu0
  %1165 = vmatpush.bf16.msra.mxu0 %v886
  %1166 = vmatpush.bf16.msra.mxu0 %v885
  %1167 = vmatpush.bf16.msra.mxu0 %v884
  %1168 = vmatpush.bf16.msra.mxu0 %v883
  %1169 = vmatpush.bf16.msra.mxu0 %v882
  %1170 = vmatpush.bf16.msra.mxu0 %v881
  %1171 = vmatpush.bf16.msra.mxu0 %v880
  %1172 = vmatpush.bf16.msra.mxu0 %v879
  %1173 = vmatmul.bf16.gmra.mxu0 %v291
  %v1174 = vpop.f32.mrf.mxu0
  %v1175 = vadd.f32 %v1162, %v1174
  %v1176 = vpop.f32.mrf.mxu0
  %1177 = vdwg.mxu0
  %1178 = vmatpush.bf16.msra.mxu0 %v894
  %1179 = vmatpush.bf16.msra.mxu0 %v893
  %1180 = vmatpush.bf16.msra.mxu0 %v892
  %1181 = vmatpush.bf16.msra.mxu0 %v891
  %1182 = vmatpush.bf16.msra.mxu0 %v890
  %1183 = vmatpush.bf16.msra.mxu0 %v889
  %1184 = vmatpush.bf16.msra.mxu0 %v888
  %1185 = vmatpush.bf16.msra.mxu0 %v887
  %1186 = vmatmul.bf16.gmra.mxu0 %v292
  %v1187 = vpop.f32.mrf.mxu0
  %v1188 = vadd.f32 %v1175, %v1187
  %v1189 = vpop.f32.mrf.mxu0
  %1190 = vdwg.mxu0
  %1191 = vmatpush.bf16.msra.mxu0 %v902
  %1192 = vmatpush.bf16.msra.mxu0 %v901
  %1193 = vmatpush.bf16.msra.mxu0 %v900
  %1194 = vmatpush.bf16.msra.mxu0 %v899
  %1195 = vmatpush.bf16.msra.mxu0 %v898
  %1196 = vmatpush.bf16.msra.mxu0 %v897
  %1197 = vmatpush.bf16.msra.mxu0 %v896
  %1198 = vmatpush.bf16.msra.mxu0 %v895
  %1199 = vmatmul.bf16.gmra.mxu0 %v295
  %v1200 = vpop.f32.mrf.mxu0
  %v1201 = vadd.f32 %v1188, %v1200
  %v1202 = vpop.f32.mrf.mxu0
  %1203 = vdwg.mxu0
  %1204 = vmatpush.bf16.msra.mxu0 %v910
  %1205 = vmatpush.bf16.msra.mxu0 %v909
  %1206 = vmatpush.bf16.msra.mxu0 %v908
  %1207 = vmatpush.bf16.msra.mxu0 %v907
  %1208 = vmatpush.bf16.msra.mxu0 %v906
  %1209 = vmatpush.bf16.msra.mxu0 %v905
  %1210 = vmatpush.bf16.msra.mxu0 %v904
  %1211 = vmatpush.bf16.msra.mxu0 %v903
  %1212 = vmatmul.bf16.gmra.mxu0 %v296
  %v1213 = vpop.f32.mrf.mxu0
  %v1214 = vadd.f32 %v1201, %v1213
  %v1215 = vpop.f32.mrf.mxu0
  %1216 = vdwg.mxu0
  %1217 = vmatpush.bf16.msra.mxu0 %v918
  %1218 = vmatpush.bf16.msra.mxu0 %v917
  %1219 = vmatpush.bf16.msra.mxu0 %v916
  %1220 = vmatpush.bf16.msra.mxu0 %v915
  %1221 = vmatpush.bf16.msra.mxu0 %v914
  %1222 = vmatpush.bf16.msra.mxu0 %v913
  %1223 = vmatpush.bf16.msra.mxu0 %v912
  %1224 = vmatpush.bf16.msra.mxu0 %v911
  %1225 = vmatmul.bf16.gmra.mxu0 %v297
  %v1226 = vpop.f32.mrf.mxu0
  %v1227 = vadd.f32 %v1214, %v1226
  %v1228 = vpop.f32.mrf.mxu0
  %1229 = vdwg.mxu0
  %1230 = vmatpush.bf16.msra.mxu0 %v926
  %1231 = vmatpush.bf16.msra.mxu0 %v925
  %1232 = vmatpush.bf16.msra.mxu0 %v924
  %1233 = vmatpush.bf16.msra.mxu0 %v923
  %1234 = vmatpush.bf16.msra.mxu0 %v922
  %1235 = vmatpush.bf16.msra.mxu0 %v921
  %1236 = vmatpush.bf16.msra.mxu0 %v920
  %1237 = vmatpush.bf16.msra.mxu0 %v919
  %1238 = vmatmul.bf16.gmra.mxu0 %v298
  %v1239 = vpop.f32.mrf.mxu0
  %v1240 = vadd.f32 %v1227, %v1239
  %v1241 = vpop.f32.mrf.mxu0
  %1242 = vdwg.mxu0
  %1243 = vmatpush.bf16.msra.mxu0 %v934
  %1244 = vmatpush.bf16.msra.mxu0 %v933
  %1245 = vmatpush.bf16.msra.mxu0 %v932
  %1246 = vmatpush.bf16.msra.mxu0 %v931
  %1247 = vmatpush.bf16.msra.mxu0 %v930
  %1248 = vmatpush.bf16.msra.mxu0 %v929
  %1249 = vmatpush.bf16.msra.mxu0 %v928
  %1250 = vmatpush.bf16.msra.mxu0 %v927
  %1251 = vmatmul.bf16.gmra.mxu0 %v299
  %v1252 = vpop.f32.mrf.mxu0
  %v1253 = vadd.f32 %v1240, %v1252
  %v1254 = vpop.f32.mrf.mxu0
  %1255 = vdwg.mxu0
  %1256 = vmatpush.bf16.msra.mxu0 %v942
  %1257 = vmatpush.bf16.msra.mxu0 %v941
  %1258 = vmatpush.bf16.msra.mxu0 %v940
  %1259 = vmatpush.bf16.msra.mxu0 %v939
  %1260 = vmatpush.bf16.msra.mxu0 %v938
  %1261 = vmatpush.bf16.msra.mxu0 %v937
  %1262 = vmatpush.bf16.msra.mxu0 %v936
  %1263 = vmatpush.bf16.msra.mxu0 %v935
  %1264 = vmatmul.bf16.gmra.mxu0 %v300
  %v1265 = vpop.f32.mrf.mxu0
  %v1266 = vadd.f32 %v1253, %v1265
  %v1267 = vpop.f32.mrf.mxu0
  %1268 = vdwg.mxu0
  %1269 = vmatpush.bf16.msra.mxu0 %v950
  %1270 = vmatpush.bf16.msra.mxu0 %v949
  %1271 = vmatpush.bf16.msra.mxu0 %v948
  %1272 = vmatpush.bf16.msra.mxu0 %v947
  %1273 = vmatpush.bf16.msra.mxu0 %v946
  %1274 = vmatpush.bf16.msra.mxu0 %v945
  %1275 = vmatpush.bf16.msra.mxu0 %v944
  %1276 = vmatpush.bf16.msra.mxu0 %v943
  %1277 = vmatmul.bf16.gmra.mxu0 %v301
  %v1278 = vpop.f32.mrf.mxu0
  %v1279 = vadd.f32 %v1266, %v1278
  %v1280 = vpop.f32.mrf.mxu0
  %1281 = vdwg.mxu0
  %1282 = vmatpush.bf16.msra.mxu0 %v958
  %1283 = vmatpush.bf16.msra.mxu0 %v957
  %1284 = vmatpush.bf16.msra.mxu0 %v956
  %1285 = vmatpush.bf16.msra.mxu0 %v955
  %1286 = vmatpush.bf16.msra.mxu0 %v954
  %1287 = vmatpush.bf16.msra.mxu0 %v953
  %1288 = vmatpush.bf16.msra.mxu0 %v952
  %1289 = vmatpush.bf16.msra.mxu0 %v951
  %1290 = vmatmul.bf16.gmra.mxu0 %v302
  %v1291 = vpop.f32.mrf.mxu0
  %v1292 = vadd.f32 %v1279, %v1291
  %v1293 = vpop.f32.mrf.mxu0
  %1294 = vdwg.mxu0
  %v1295 = vpack.c.bf16 %v1292, %v1292
  %v1296 = vld [vmem:[%s3] sm:$0xff]
  %v1297 = vld [vmem:[%s3 + $0x8] sm:$0xff]
  %v1298 = vld [vmem:[%s4] sm:$0xff]
  %v1299 = vld [vmem:[%s4 + $0x8] sm:$0xff]
  %v1302 = vperm.slane %v1298, 0
  %v1303 = vperm.slane %v1298, 1
  %v1304 = vperm.slane %v1298, 2
  %v1305 = vperm.slane %v1298, 3
  %v1306 = vperm.slane %v1298, 4
  %v1307 = vperm.slane %v1298, 5
  %v1308 = vperm.slane %v1298, 6
  %v1309 = vperm.slane %v1298, 7
  %v1310 = vperm.slane %v1299, 0
  %v1311 = vperm.slane %v1299, 1
  %v1312 = vperm.slane %v1299, 2
  %v1313 = vperm.slane %v1299, 3
  %v1314 = vperm.slane %v1299, 4
  %v1315 = vperm.slane %v1299, 5
  %v1316 = vperm.slane %v1299, 6
  %v1317 = vperm.slane %v1299, 7
  %1335 = vst [vmem:[#allocation1] ss:$9 sm:$0xff] %v1296
  %v1336 = vld [vmem:[#allocation1] sm:$0xff]
  %v1337 = vld [vmem:[#allocation1 + $0x9] sm:$0xff]
  %v1338 = vld [vmem:[#allocation1 + $0x12] sm:$0xff]
  %v1339 = vld [vmem:[#allocation1 + $0x1b] sm:$0xff]
  %v1340 = vld [vmem:[#allocation1 + $0x24] sm:$0xff]
  %v1341 = vld [vmem:[#allocation1 + $0x2d] sm:$0xff]
  %v1342 = vld [vmem:[#allocation1 + $0x36] sm:$0xff]
  %v1343 = vld [vmem:[#allocation1 + $0x3f] sm:$0xff]
  %1345 = vst [vmem:[#allocation1] ss:$9 sm:$0xff] %v1297
  %v1346 = vld [vmem:[#allocation1] sm:$0xff]
  %v1347 = vld [vmem:[#allocation1 + $0x9] sm:$0xff]
  %v1348 = vld [vmem:[#allocation1 + $0x12] sm:$0xff]
  %v1349 = vld [vmem:[#allocation1 + $0x1b] sm:$0xff]
  %v1350 = vld [vmem:[#allocation1 + $0x24] sm:$0xff]
  %v1351 = vld [vmem:[#allocation1 + $0x2d] sm:$0xff]
  %v1352 = vld [vmem:[#allocation1 + $0x36] sm:$0xff]
  %v1353 = vld [vmem:[#allocation1 + $0x3f] sm:$0xff]
  %vm1354 = vcmask 15360
  %v1356 = vsel %vm1354, %v1295, 0
  %vm1358 = vcmask 1040384
  %v1359 = vsel %vm1358, %v1336, 0
  %v1361 = vsel %vm1358, %v1337, 0
  %v1363 = vsel %vm1358, %v1338, 0
  %v1365 = vsel %vm1358, %v1339, 0
  %v1367 = vsel %vm1358, %v1340, 0
  %v1369 = vsel %vm1358, %v1341, 0
  %v1371 = vsel %vm1358, %v1342, 0
  %v1373 = vsel %vm1358, %v1343, 0
  %v1375 = vsel %vm1358, %v1346, 0
  %v1377 = vsel %vm1358, %v1347, 0
  %v1379 = vsel %vm1358, %v1348, 0
  %v1381 = vsel %vm1358, %v1349, 0
  %v1383 = vsel %vm1358, %v1350, 0
  %v1385 = vsel %vm1358, %v1351, 0
  %v1387 = vsel %vm1358, %v1352, 0
  %v1389 = vsel %vm1358, %v1353, 0
  %1391 = vmatpush.bf16.msra.mxu0 0
  %1392 = vmatpush.bf16.msra.mxu0 0
  %1393 = vmatpush.bf16.msra.mxu0 0
  %1394 = vmatpush.bf16.msra.mxu0 0
  %1395 = vmatpush.bf16.msra.mxu0 0
  %1396 = vmatpush.bf16.msra.mxu0 0
  %1397 = vmatpush.bf16.msra.mxu0 0
  %1398 = vmatpush.bf16.msra.mxu0 %v1359
  %1399 = vmatmul.bf16.gmra.mxu0 %v1356
  %v1400 = vpop.f32.mrf.mxu0
  %v1401 = vadd.f32 %v1302, %v1400
  %v1402 = vpop.f32.mrf.mxu0
  %1403 = vdwg.mxu0
  %1404 = vmatpush.bf16.msra.mxu0 0
  %1405 = vmatpush.bf16.msra.mxu0 0
  %1406 = vmatpush.bf16.msra.mxu0 0
  %1407 = vmatpush.bf16.msra.mxu0 0
  %1408 = vmatpush.bf16.msra.mxu0 0
  %1409 = vmatpush.bf16.msra.mxu0 0
  %1410 = vmatpush.bf16.msra.mxu0 0
  %1411 = vmatpush.bf16.msra.mxu0 %v1361
  %1412 = vmatmul.bf16.gmra.mxu0 %v1356
  %v1413 = vpop.f32.mrf.mxu0
  %v1414 = vadd.f32 %v1303, %v1413
  %v1415 = vpop.f32.mrf.mxu0
  %1416 = vdwg.mxu0
  %1417 = vmatpush.bf16.msra.mxu0 0
  %1418 = vmatpush.bf16.msra.mxu0 0
  %1419 = vmatpush.bf16.msra.mxu0 0
  %1420 = vmatpush.bf16.msra.mxu0 0
  %1421 = vmatpush.bf16.msra.mxu0 0
  %1422 = vmatpush.bf16.msra.mxu0 0
  %1423 = vmatpush.bf16.msra.mxu0 0
  %1424 = vmatpush.bf16.msra.mxu0 %v1363
  %1425 = vmatmul.bf16.gmra.mxu0 %v1356
  %v1426 = vpop.f32.mrf.mxu0
  %v1427 = vadd.f32 %v1304, %v1426
  %v1428 = vpop.f32.mrf.mxu0
  %1429 = vdwg.mxu0
  %1430 = vmatpush.bf16.msra.mxu0 0
  %1431 = vmatpush.bf16.msra.mxu0 0
  %1432 = vmatpush.bf16.msra.mxu0 0
  %1433 = vmatpush.bf16.msra.mxu0 0
  %1434 = vmatpush.bf16.msra.mxu0 0
  %1435 = vmatpush.bf16.msra.mxu0 0
  %1436 = vmatpush.bf16.msra.mxu0 0
  %1437 = vmatpush.bf16.msra.mxu0 %v1365
  %1438 = vmatmul.bf16.gmra.mxu0 %v1356
  %v1439 = vpop.f32.mrf.mxu0
  %v1440 = vadd.f32 %v1305, %v1439
  %v1441 = vpop.f32.mrf.mxu0
  %1442 = vdwg.mxu0
  %1443 = vmatpush.bf16.msra.mxu0 0
  %1444 = vmatpush.bf16.msra.mxu0 0
  %1445 = vmatpush.bf16.msra.mxu0 0
  %1446 = vmatpush.bf16.msra.mxu0 0
  %1447 = vmatpush.bf16.msra.mxu0 0
  %1448 = vmatpush.bf16.msra.mxu0 0
  %1449 = vmatpush.bf16.msra.mxu0 0
  %1450 = vmatpush.bf16.msra.mxu0 %v1367
  %1451 = vmatmul.bf16.gmra.mxu0 %v1356
  %v1452 = vpop.f32.mrf.mxu0
  %v1453 = vadd.f32 %v1306, %v1452
  %v1454 = vpop.f32.mrf.mxu0
  %1455 = vdwg.mxu0
  %1456 = vmatpush.bf16.msra.mxu0 0
  %1457 = vmatpush.bf16.msra.mxu0 0
  %1458 = vmatpush.bf16.msra.mxu0 0
  %1459 = vmatpush.bf16.msra.mxu0 0
  %1460 = vmatpush.bf16.msra.mxu0 0
  %1461 = vmatpush.bf16.msra.mxu0 0
  %1462 = vmatpush.bf16.msra.mxu0 0
  %1463 = vmatpush.bf16.msra.mxu0 %v1369
  %1464 = vmatmul.bf16.gmra.mxu0 %v1356
  %v1465 = vpop.f32.mrf.mxu0
  %v1466 = vadd.f32 %v1307, %v1465
  %v1467 = vpop.f32.mrf.mxu0
  %1468 = vdwg.mxu0
  %1469 = vmatpush.bf16.msra.mxu0 0
  %1470 = vmatpush.bf16.msra.mxu0 0
  %1471 = vmatpush.bf16.msra.mxu0 0
  %1472 = vmatpush.bf16.msra.mxu0 0
  %1473 = vmatpush.bf16.msra.mxu0 0
  %1474 = vmatpush.bf16.msra.mxu0 0
  %1475 = vmatpush.bf16.msra.mxu0 0
  %1476 = vmatpush.bf16.msra.mxu0 %v1371
  %1477 = vmatmul.bf16.gmra.mxu0 %v1356
  %v1478 = vpop.f32.mrf.mxu0
  %v1479 = vadd.f32 %v1308, %v1478
  %v1480 = vpop.f32.mrf.mxu0
  %1481 = vdwg.mxu0
  %1482 = vmatpush.bf16.msra.mxu0 0
  %1483 = vmatpush.bf16.msra.mxu0 0
  %1484 = vmatpush.bf16.msra.mxu0 0
  %1485 = vmatpush.bf16.msra.mxu0 0
  %1486 = vmatpush.bf16.msra.mxu0 0
  %1487 = vmatpush.bf16.msra.mxu0 0
  %1488 = vmatpush.bf16.msra.mxu0 0
  %1489 = vmatpush.bf16.msra.mxu0 %v1373
  %1490 = vmatmul.bf16.gmra.mxu0 %v1356
  %v1491 = vpop.f32.mrf.mxu0
  %v1492 = vadd.f32 %v1309, %v1491
  %v1493 = vpop.f32.mrf.mxu0
  %1494 = vdwg.mxu0
  %1495 = vmatpush.bf16.msra.mxu0 0
  %1496 = vmatpush.bf16.msra.mxu0 0
  %1497 = vmatpush.bf16.msra.mxu0 0
  %1498 = vmatpush.bf16.msra.mxu0 0
  %1499 = vmatpush.bf16.msra.mxu0 0
  %1500 = vmatpush.bf16.msra.mxu0 0
  %1501 = vmatpush.bf16.msra.mxu0 0
  %1502 = vmatpush.bf16.msra.mxu0 %v1375
  %1503 = vmatmul.bf16.gmra.mxu0 %v1356
  %v1504 = vpop.f32.mrf.mxu0
  %v1505 = vadd.f32 %v1310, %v1504
  %v1506 = vpop.f32.mrf.mxu0
  %1507 = vdwg.mxu0
  %1508 = vmatpush.bf16.msra.mxu0 0
  %1509 = vmatpush.bf16.msra.mxu0 0
  %1510 = vmatpush.bf16.msra.mxu0 0
  %1511 = vmatpush.bf16.msra.mxu0 0
  %1512 = vmatpush.bf16.msra.mxu0 0
  %1513 = vmatpush.bf16.msra.mxu0 0
  %1514 = vmatpush.bf16.msra.mxu0 0
  %1515 = vmatpush.bf16.msra.mxu0 %v1377
  %1516 = vmatmul.bf16.gmra.mxu0 %v1356
  %v1517 = vpop.f32.mrf.mxu0
  %v1518 = vadd.f32 %v1311, %v1517
  %v1519 = vpop.f32.mrf.mxu0
  %1520 = vdwg.mxu0
  %1521 = vmatpush.bf16.msra.mxu0 0
  %1522 = vmatpush.bf16.msra.mxu0 0
  %1523 = vmatpush.bf16.msra.mxu0 0
  %1524 = vmatpush.bf16.msra.mxu0 0
  %1525 = vmatpush.bf16.msra.mxu0 0
  %1526 = vmatpush.bf16.msra.mxu0 0
  %1527 = vmatpush.bf16.msra.mxu0 0
  %1528 = vmatpush.bf16.msra.mxu0 %v1379
  %1529 = vmatmul.bf16.gmra.mxu0 %v1356
  %v1530 = vpop.f32.mrf.mxu0
  %v1531 = vadd.f32 %v1312, %v1530
  %v1532 = vpop.f32.mrf.mxu0
  %1533 = vdwg.mxu0
  %1534 = vmatpush.bf16.msra.mxu0 0
  %1535 = vmatpush.bf16.msra.mxu0 0
  %1536 = vmatpush.bf16.msra.mxu0 0
  %1537 = vmatpush.bf16.msra.mxu0 0
  %1538 = vmatpush.bf16.msra.mxu0 0
  %1539 = vmatpush.bf16.msra.mxu0 0
  %1540 = vmatpush.bf16.msra.mxu0 0
  %1541 = vmatpush.bf16.msra.mxu0 %v1381
  %1542 = vmatmul.bf16.gmra.mxu0 %v1356
  %v1543 = vpop.f32.mrf.mxu0
  %v1544 = vadd.f32 %v1313, %v1543
  %v1545 = vpop.f32.mrf.mxu0
  %1546 = vdwg.mxu0
  %1547 = vmatpush.bf16.msra.mxu0 0
  %1548 = vmatpush.bf16.msra.mxu0 0
  %1549 = vmatpush.bf16.msra.mxu0 0
  %1550 = vmatpush.bf16.msra.mxu0 0
  %1551 = vmatpush.bf16.msra.mxu0 0
  %1552 = vmatpush.bf16.msra.mxu0 0
  %1553 = vmatpush.bf16.msra.mxu0 0
  %1554 = vmatpush.bf16.msra.mxu0 %v1383
  %1555 = vmatmul.bf16.gmra.mxu0 %v1356
  %v1556 = vpop.f32.mrf.mxu0
  %v1557 = vadd.f32 %v1314, %v1556
  %v1558 = vpop.f32.mrf.mxu0
  %1559 = vdwg.mxu0
  %1560 = vmatpush.bf16.msra.mxu0 0
  %1561 = vmatpush.bf16.msra.mxu0 0
  %1562 = vmatpush.bf16.msra.mxu0 0
  %1563 = vmatpush.bf16.msra.mxu0 0
  %1564 = vmatpush.bf16.msra.mxu0 0
  %1565 = vmatpush.bf16.msra.mxu0 0
  %1566 = vmatpush.bf16.msra.mxu0 0
  %1567 = vmatpush.bf16.msra.mxu0 %v1385
  %1568 = vmatmul.bf16.gmra.mxu0 %v1356
  %v1569 = vpop.f32.mrf.mxu0
  %v1570 = vadd.f32 %v1315, %v1569
  %v1571 = vpop.f32.mrf.mxu0
  %1572 = vdwg.mxu0
  %1573 = vmatpush.bf16.msra.mxu0 0
  %1574 = vmatpush.bf16.msra.mxu0 0
  %1575 = vmatpush.bf16.msra.mxu0 0
  %1576 = vmatpush.bf16.msra.mxu0 0
  %1577 = vmatpush.bf16.msra.mxu0 0
  %1578 = vmatpush.bf16.msra.mxu0 0
  %1579 = vmatpush.bf16.msra.mxu0 0
  %1580 = vmatpush.bf16.msra.mxu0 %v1387
  %1581 = vmatmul.bf16.gmra.mxu0 %v1356
  %v1582 = vpop.f32.mrf.mxu0
  %v1583 = vadd.f32 %v1316, %v1582
  %v1584 = vpop.f32.mrf.mxu0
  %1585 = vdwg.mxu0
  %1586 = vmatpush.bf16.msra.mxu0 0
  %1587 = vmatpush.bf16.msra.mxu0 0
  %1588 = vmatpush.bf16.msra.mxu0 0
  %1589 = vmatpush.bf16.msra.mxu0 0
  %1590 = vmatpush.bf16.msra.mxu0 0
  %1591 = vmatpush.bf16.msra.mxu0 0
  %1592 = vmatpush.bf16.msra.mxu0 0
  %1593 = vmatpush.bf16.msra.mxu0 %v1389
  %1594 = vmatmul.bf16.gmra.mxu0 %v1356
  %v1595 = vpop.f32.mrf.mxu0
  %v1596 = vadd.f32 %v1317, %v1595
  %v1597 = vpop.f32.mrf.mxu0
  %1598 = vdwg.mxu0
  %v1599 = vpack.c.bf16 %v1414, %v1401
  %v1600 = vpack.c.bf16 %v1440, %v1427
  %v1601 = vpack.c.bf16 %v1466, %v1453
  %v1602 = vpack.c.bf16 %v1492, %v1479
  %v1603 = vpack.c.bf16 %v1518, %v1505
  %v1604 = vpack.c.bf16 %v1544, %v1531
  %v1605 = vpack.c.bf16 %v1570, %v1557
  %v1606 = vpack.c.bf16 %v1596, %v1583
  %v1615 = vrot.slane %v1599, 3
  %v1616 = vrot.slane %v1600, 6
  %v1617 = vrot.slane %v1600, 1
  %v1618 = vrot.slane %v1601, 4
  %v1619 = vrot.slane %v1601, 7
  %v1620 = vrot.slane %v1602, 2
  %v1621 = vrot.slane %v1602, 5
  %v1622 = vrot.slane %v1603, 3
  %v1623 = vrot.slane %v1604, 6
  %v1624 = vrot.slane %v1604, 1
  %v1625 = vrot.slane %v1605, 4
  %v1626 = vrot.slane %v1605, 7
  %v1627 = vrot.slane %v1606, 2
  %v1628 = vrot.slane %v1606, 5
  %v1631 = vsel %vm1358, %v1599, %v1615
  %vm1632 = vcmask 1042434
  %v1635 = vsel %vm1632, %v1616, %v1617
  %vm1636 = vcmask 1041408
  %v1637 = vsel %vm1636, %v1631, %v1635
  %vm1638 = vcmask 1044484
  %v1641 = vsel %vm1638, %v1618, %v1619
  %vm1642 = vcmask 1046534
  %v1645 = vsel %vm1642, %v1620, %v1621
  %vm1646 = vcmask 1045508
  %v1647 = vsel %vm1646, %v1641, %v1645
  %vm1648 = vcmask 1043456
  %v1649 = vsel %vm1648, %v1637, %v1647
  %v1652 = vsel %vm1358, %v1603, %v1622
  %v1655 = vsel %vm1632, %v1623, %v1624
  %v1656 = vsel %vm1636, %v1652, %v1655
  %v1659 = vsel %vm1638, %v1625, %v1626
  %v1662 = vsel %vm1642, %v1627, %v1628
  %v1663 = vsel %vm1646, %v1659, %v1662
  %v1664 = vsel %vm1648, %v1656, %v1663
  %1667 = vst [vmem:[%s5] sm:$0xff] %v1649
  %1668 = vst [vmem:[%s5 + $0x8] sm:$0xff] %v1664
  // Predicated region
  $region22: #{autoencoder_forward.10} parent=0 // pred_check
    _
  $region23: #{autoencoder_forward.10} parent=0 // pred_check_branch
    %1670 = sbr.rel (0) target = $region25
  $region24: #{autoencoder_forward.10} parent=0 // pred_region
    _
  $region25: #{autoencoder_forward.10} parent=0 // pred_fallthru
    _
  // Predicated region
  $region26: #{autoencoder_forward.10} parent=0 // pred_check
    _
  $region27: #{autoencoder_forward.10} parent=0 // pred_check_branch
    %1672 = sbr.rel (0) target = $region29
  $region28: #{autoencoder_forward.10} parent=0 // pred_region
    _
  $region29: #{autoencoder_forward.10} parent=0 // pred_fallthru
    _

// kernel: autoencoder_forward.12
$region0: #{autoencoder_forward.12}
  #allocation0 [shape = 'u32[]', space=smem, size = 0x4, offset = 0x4, fixed_abs, tag = 'smem constant byte address 0x4 - core index']
  #allocation1 [shape = 'u32[72,128]{1,0:T(1,128)}', space=vmem, size = 0x9000, scoped, tag = 'internal scratch']
  %s0 = inlined_call_operand.vmem [shape: bf16[128,256], index: 0, kind: input, shape index: {}]
  %s1 = inlined_call_operand.vmem [shape: bf16[256,128], index: 1, kind: input, shape index: {}]
  %s2 = inlined_call_operand.vmem [shape: f32[1,128], index: 2, kind: input, shape index: {}]
  %s3 = inlined_call_operand.vmem [shape: bf16[128,128], index: 3, kind: output, shape index: {}]
  %s4 = sld [smem:[#allocation0]]
  $region22: #{autoencoder_forward.12} parent=0
    _
  %s6 = ssub.s32 1, %s4
  %s7 = scalar_select 0, %s6, %s4
  // Predicated region
  $region2: #{autoencoder_forward.12} parent=0 // pred_check
    _
  $region3: #{autoencoder_forward.12} parent=0 // pred_check_branch
    %9 = sbr.rel (0) target = $region5
  $region4: #{autoencoder_forward.12} parent=0 // pred_region
    _
  $region5: #{autoencoder_forward.12} parent=0 // pred_fallthru
    _
  // Predicated region
  $region6: #{autoencoder_forward.12} parent=0 // pred_check
    _
  $region7: #{autoencoder_forward.12} parent=0 // pred_check_branch
    %11 = sbr.rel (0) target = $region9
  $region8: #{autoencoder_forward.12} parent=0 // pred_region
    _
  $region9: #{autoencoder_forward.12} parent=0 // pred_fallthru
    _
  // Predicated region
  $region10: #{autoencoder_forward.12} parent=0 // pred_check
    _
  $region11: #{autoencoder_forward.12} parent=0 // pred_check_branch
    %13 = sbr.rel (0) target = $region13
  $region12: #{autoencoder_forward.12} parent=0 // pred_region
    _
  $region13: #{autoencoder_forward.12} parent=0 // pred_fallthru
    _
  %v14 = vld [vmem:[%s0] sm:$0xff]
  %v15 = vld [vmem:[%s0 + $0x8] sm:$0xff]
  %v16 = vld [vmem:[%s0 + $0x10] sm:$0xff]
  %v17 = vld [vmem:[%s0 + $0x18] sm:$0xff]
  %v18 = vld [vmem:[%s0 + $0x20] sm:$0xff]
  %v19 = vld [vmem:[%s0 + $0x28] sm:$0xff]
  %v20 = vld [vmem:[%s0 + $0x30] sm:$0xff]
  %v21 = vld [vmem:[%s0 + $0x38] sm:$0xff]
  %v22 = vld [vmem:[%s0 + $0x40] sm:$0xff]
  %v23 = vld [vmem:[%s0 + $0x48] sm:$0xff]
  %v24 = vld [vmem:[%s0 + $0x50] sm:$0xff]
  %v25 = vld [vmem:[%s0 + $0x58] sm:$0xff]
  %v26 = vld [vmem:[%s0 + $0x60] sm:$0xff]
  %v27 = vld [vmem:[%s0 + $0x68] sm:$0xff]
  %v28 = vld [vmem:[%s0 + $0x70] sm:$0xff]
  %v29 = vld [vmem:[%s0 + $0x78] sm:$0xff]
  %v30 = vld [vmem:[%s1] sm:$0xf]
  %v31 = vld [vmem:[%s1 + $0x4] sm:$0xf]
  %v32 = vld [vmem:[%s1 + $0x8] sm:$0xf]
  %v33 = vld [vmem:[%s1 + $0xc] sm:$0xf]
  %v34 = vld [vmem:[%s1 + $0x10] sm:$0xf]
  %v35 = vld [vmem:[%s1 + $0x14] sm:$0xf]
  %v36 = vld [vmem:[%s1 + $0x18] sm:$0xf]
  %v37 = vld [vmem:[%s1 + $0x1c] sm:$0xf]
  %v38 = vld [vmem:[%s1 + $0x20] sm:$0xf]
  %v39 = vld [vmem:[%s1 + $0x24] sm:$0xf]
  %v40 = vld [vmem:[%s1 + $0x28] sm:$0xf]
  %v41 = vld [vmem:[%s1 + $0x2c] sm:$0xf]
  %v42 = vld [vmem:[%s1 + $0x30] sm:$0xf]
  %v43 = vld [vmem:[%s1 + $0x34] sm:$0xf]
  %v44 = vld [vmem:[%s1 + $0x38] sm:$0xf]
  %v45 = vld [vmem:[%s1 + $0x3c] sm:$0xf]
  %v46 = vld [vmem:[%s1 + $0x40] sm:$0xf]
  %v47 = vld [vmem:[%s1 + $0x44] sm:$0xf]
  %v48 = vld [vmem:[%s1 + $0x48] sm:$0xf]
  %v49 = vld [vmem:[%s1 + $0x4c] sm:$0xf]
  %v50 = vld [vmem:[%s1 + $0x50] sm:$0xf]
  %v51 = vld [vmem:[%s1 + $0x54] sm:$0xf]
  %v52 = vld [vmem:[%s1 + $0x58] sm:$0xf]
  %v53 = vld [vmem:[%s1 + $0x5c] sm:$0xf]
  %v54 = vld [vmem:[%s1 + $0x60] sm:$0xf]
  %v55 = vld [vmem:[%s1 + $0x64] sm:$0xf]
  %v56 = vld [vmem:[%s1 + $0x68] sm:$0xf]
  %v57 = vld [vmem:[%s1 + $0x6c] sm:$0xf]
  %v58 = vld [vmem:[%s1 + $0x70] sm:$0xf]
  %v59 = vld [vmem:[%s1 + $0x74] sm:$0xf]
  %v60 = vld [vmem:[%s1 + $0x78] sm:$0xf]
  %v61 = vld [vmem:[%s1 + $0x7c] sm:$0xf]
  %v62 = vld [vmem:[%s2] sm:$0x1]
  %v64 = vperm.slane %v62, 0
  %v82 = vunpack.c.l.b16 %v14
  %v83 = vunpack.c.h.b16 %v14
  %v84 = vunpack.c.l.b16 %v15
  %v85 = vunpack.c.h.b16 %v15
  %v86 = vunpack.c.l.b16 %v16
  %v87 = vunpack.c.h.b16 %v16
  %v88 = vunpack.c.l.b16 %v17
  %v89 = vunpack.c.h.b16 %v17
  %v90 = vunpack.c.l.b16 %v18
  %v91 = vunpack.c.h.b16 %v18
  %v92 = vunpack.c.l.b16 %v19
  %v93 = vunpack.c.h.b16 %v19
  %v94 = vunpack.c.l.b16 %v20
  %v95 = vunpack.c.h.b16 %v20
  %v96 = vunpack.c.l.b16 %v21
  %v97 = vunpack.c.h.b16 %v21
  %v98 = vunpack.c.l.b16 %v22
  %v99 = vunpack.c.h.b16 %v22
  %v100 = vunpack.c.l.b16 %v23
  %v101 = vunpack.c.h.b16 %v23
  %v102 = vunpack.c.l.b16 %v24
  %v103 = vunpack.c.h.b16 %v24
  %v104 = vunpack.c.l.b16 %v25
  %v105 = vunpack.c.h.b16 %v25
  %v106 = vunpack.c.l.b16 %v26
  %v107 = vunpack.c.h.b16 %v26
  %v108 = vunpack.c.l.b16 %v27
  %v109 = vunpack.c.h.b16 %v27
  %v110 = vunpack.c.l.b16 %v28
  %v111 = vunpack.c.h.b16 %v28
  %v112 = vunpack.c.l.b16 %v29
  %v113 = vunpack.c.h.b16 %v29
  %v114 = vpack.c.b16 %v84, %v82
  %v115 = vpack.c.b16 %v85, %v83
  %v116 = vpack.c.b16 %v88, %v86
  %v117 = vpack.c.b16 %v89, %v87
  %v118 = vpack.c.b16 %v92, %v90
  %v119 = vpack.c.b16 %v93, %v91
  %v120 = vpack.c.b16 %v96, %v94
  %v121 = vpack.c.b16 %v97, %v95
  %v122 = vpack.c.b16 %v100, %v98
  %v123 = vpack.c.b16 %v101, %v99
  %v124 = vpack.c.b16 %v104, %v102
  %v125 = vpack.c.b16 %v105, %v103
  %v126 = vpack.c.b16 %v108, %v106
  %v127 = vpack.c.b16 %v109, %v107
  %v128 = vpack.c.b16 %v112, %v110
  %v129 = vpack.c.b16 %v113, %v111
  %v178 = vunpack.c.l.b16 %v30
  %v179 = vunpack.c.l.b16 %v31
  %v180 = vunpack.c.l.b16 %v32
  %v181 = vunpack.c.l.b16 %v33
  %v182 = vunpack.c.l.b16 %v34
  %v183 = vunpack.c.l.b16 %v35
  %v184 = vunpack.c.l.b16 %v36
  %v185 = vunpack.c.l.b16 %v37
  %v186 = vunpack.c.l.b16 %v38
  %v187 = vunpack.c.l.b16 %v39
  %v188 = vunpack.c.l.b16 %v40
  %v189 = vunpack.c.l.b16 %v41
  %v190 = vunpack.c.l.b16 %v42
  %v191 = vunpack.c.l.b16 %v43
  %v192 = vunpack.c.l.b16 %v44
  %v193 = vunpack.c.l.b16 %v45
  %v194 = vunpack.c.l.b16 %v46
  %v195 = vunpack.c.l.b16 %v47
  %v196 = vunpack.c.l.b16 %v48
  %v197 = vunpack.c.l.b16 %v49
  %v198 = vunpack.c.l.b16 %v50
  %v199 = vunpack.c.l.b16 %v51
  %v200 = vunpack.c.l.b16 %v52
  %v201 = vunpack.c.l.b16 %v53
  %v202 = vunpack.c.l.b16 %v54
  %v203 = vunpack.c.l.b16 %v55
  %v204 = vunpack.c.l.b16 %v56
  %v205 = vunpack.c.l.b16 %v57
  %v206 = vunpack.c.l.b16 %v58
  %v207 = vunpack.c.l.b16 %v59
  %v208 = vunpack.c.l.b16 %v60
  %v209 = vunpack.c.l.b16 %v61
  %v210 = vpack.c.b16 %v179, %v178
  %v211 = vpack.c.b16 %v181, %v180
  %v212 = vpack.c.b16 %v183, %v182
  %v213 = vpack.c.b16 %v185, %v184
  %v214 = vpack.c.b16 %v187, %v186
  %v215 = vpack.c.b16 %v189, %v188
  %v216 = vpack.c.b16 %v191, %v190
  %v217 = vpack.c.b16 %v193, %v192
  %v218 = vpack.c.b16 %v195, %v194
  %v219 = vpack.c.b16 %v197, %v196
  %v220 = vpack.c.b16 %v199, %v198
  %v221 = vpack.c.b16 %v201, %v200
  %v222 = vpack.c.b16 %v203, %v202
  %v223 = vpack.c.b16 %v205, %v204
  %v224 = vpack.c.b16 %v207, %v206
  %v225 = vpack.c.b16 %v209, %v208
  %242 = vmatpush.bf16.msra.mxu0 %v217
  %243 = vmatpush.bf16.msra.mxu0 %v216
  %244 = vmatpush.bf16.msra.mxu0 %v215
  %245 = vmatpush.bf16.msra.mxu0 %v214
  %246 = vmatpush.bf16.msra.mxu0 %v213
  %247 = vmatpush.bf16.msra.mxu0 %v212
  %248 = vmatpush.bf16.msra.mxu0 %v211
  %249 = vmatpush.bf16.msra.mxu0 %v210
  %250 = vmatmul.bf16.gmra.mxu0 %v114
  %v251 = vpop.f32.mrf.mxu0
  %v252 = vadd.f32 %v64, %v251
  %v253 = vpop.f32.mrf.mxu0
  %v254 = vadd.f32 %v64, %v253
  %255 = vmatmul.bf16.gmra.mxu0 %v116
  %v256 = vpop.f32.mrf.mxu0
  %v257 = vadd.f32 %v64, %v256
  %v258 = vpop.f32.mrf.mxu0
  %v259 = vadd.f32 %v64, %v258
  %260 = vmatmul.bf16.gmra.mxu0 %v118
  %v261 = vpop.f32.mrf.mxu0
  %v262 = vadd.f32 %v64, %v261
  %v263 = vpop.f32.mrf.mxu0
  %v264 = vadd.f32 %v64, %v263
  %265 = vmatmul.bf16.gmra.mxu0 %v120
  %v266 = vpop.f32.mrf.mxu0
  %v267 = vadd.f32 %v64, %v266
  %v268 = vpop.f32.mrf.mxu0
  %v269 = vadd.f32 %v64, %v268
  %270 = vmatmul.bf16.gmra.mxu0 %v122
  %v271 = vpop.f32.mrf.mxu0
  %v272 = vadd.f32 %v64, %v271
  %v273 = vpop.f32.mrf.mxu0
  %v274 = vadd.f32 %v64, %v273
  %275 = vmatmul.bf16.gmra.mxu0 %v124
  %v276 = vpop.f32.mrf.mxu0
  %v277 = vadd.f32 %v64, %v276
  %v278 = vpop.f32.mrf.mxu0
  %v279 = vadd.f32 %v64, %v278
  %280 = vmatmul.bf16.gmra.mxu0 %v126
  %v281 = vpop.f32.mrf.mxu0
  %v282 = vadd.f32 %v64, %v281
  %v283 = vpop.f32.mrf.mxu0
  %v284 = vadd.f32 %v64, %v283
  %285 = vmatmul.bf16.gmra.mxu0 %v128
  %v286 = vpop.f32.mrf.mxu0
  %v287 = vadd.f32 %v64, %v286
  %v288 = vpop.f32.mrf.mxu0
  %v289 = vadd.f32 %v64, %v288
  %290 = vdwg.mxu0
  %291 = vmatpush.bf16.msra.mxu0 %v225
  %292 = vmatpush.bf16.msra.mxu0 %v224
  %293 = vmatpush.bf16.msra.mxu0 %v223
  %294 = vmatpush.bf16.msra.mxu0 %v222
  %295 = vmatpush.bf16.msra.mxu0 %v221
  %296 = vmatpush.bf16.msra.mxu0 %v220
  %297 = vmatpush.bf16.msra.mxu0 %v219
  %298 = vmatpush.bf16.msra.mxu0 %v218
  %299 = vmatmul.bf16.gmra.mxu0 %v115
  %v300 = vpop.f32.mrf.mxu0
  %v301 = vadd.f32 %v252, %v300
  %v302 = vpop.f32.mrf.mxu0
  %v303 = vadd.f32 %v254, %v302
  %304 = vmatmul.bf16.gmra.mxu0 %v117
  %v305 = vpop.f32.mrf.mxu0
  %v306 = vadd.f32 %v257, %v305
  %v307 = vpop.f32.mrf.mxu0
  %v308 = vadd.f32 %v259, %v307
  %309 = vmatmul.bf16.gmra.mxu0 %v119
  %v310 = vpop.f32.mrf.mxu0
  %v311 = vadd.f32 %v262, %v310
  %v312 = vpop.f32.mrf.mxu0
  %v313 = vadd.f32 %v264, %v312
  %314 = vmatmul.bf16.gmra.mxu0 %v121
  %v315 = vpop.f32.mrf.mxu0
  %v316 = vadd.f32 %v267, %v315
  %v317 = vpop.f32.mrf.mxu0
  %v318 = vadd.f32 %v269, %v317
  %319 = vmatmul.bf16.gmra.mxu0 %v123
  %v320 = vpop.f32.mrf.mxu0
  %v321 = vadd.f32 %v272, %v320
  %v322 = vpop.f32.mrf.mxu0
  %v323 = vadd.f32 %v274, %v322
  %324 = vmatmul.bf16.gmra.mxu0 %v125
  %v325 = vpop.f32.mrf.mxu0
  %v326 = vadd.f32 %v277, %v325
  %v327 = vpop.f32.mrf.mxu0
  %v328 = vadd.f32 %v279, %v327
  %329 = vmatmul.bf16.gmra.mxu0 %v127
  %v330 = vpop.f32.mrf.mxu0
  %v331 = vadd.f32 %v282, %v330
  %v332 = vpop.f32.mrf.mxu0
  %v333 = vadd.f32 %v284, %v332
  %334 = vmatmul.bf16.gmra.mxu0 %v129
  %v335 = vpop.f32.mrf.mxu0
  %v336 = vadd.f32 %v287, %v335
  %v337 = vpop.f32.mrf.mxu0
  %v338 = vadd.f32 %v289, %v337
  %339 = vdwg.mxu0
  %v340 = vmax.f32 %v301, 0.0
  %v341 = vmax.f32 %v303, 0.0
  %v342 = vmax.f32 %v306, 0.0
  %v343 = vmax.f32 %v308, 0.0
  %v344 = vmax.f32 %v311, 0.0
  %v345 = vmax.f32 %v313, 0.0
  %v346 = vmax.f32 %v316, 0.0
  %v347 = vmax.f32 %v318, 0.0
  %v348 = vmax.f32 %v321, 0.0
  %v349 = vmax.f32 %v323, 0.0
  %v350 = vmax.f32 %v326, 0.0
  %v351 = vmax.f32 %v328, 0.0
  %v352 = vmax.f32 %v331, 0.0
  %v353 = vmax.f32 %v333, 0.0
  %v354 = vmax.f32 %v336, 0.0
  %v355 = vmax.f32 %v338, 0.0
  %v356 = vpack.c.bf16 %v340, %v340
  %v357 = vpack.c.bf16 %v341, %v341
  %v358 = vpack.c.bf16 %v342, %v342
  %v359 = vpack.c.bf16 %v343, %v343
  %v360 = vpack.c.bf16 %v344, %v344
  %v361 = vpack.c.bf16 %v345, %v345
  %v362 = vpack.c.bf16 %v346, %v346
  %v363 = vpack.c.bf16 %v347, %v347
  %v364 = vpack.c.bf16 %v348, %v348
  %v365 = vpack.c.bf16 %v349, %v349
  %v366 = vpack.c.bf16 %v350, %v350
  %v367 = vpack.c.bf16 %v351, %v351
  %v368 = vpack.c.bf16 %v352, %v352
  %v369 = vpack.c.bf16 %v353, %v353
  %v370 = vpack.c.bf16 %v354, %v354
  %v371 = vpack.c.bf16 %v355, %v355
  %372 = vst [vmem:[%s3] sm:$0xf] %v356
  %373 = vst [vmem:[%s3 + $0x4] sm:$0xf] %v357
  %374 = vst [vmem:[%s3 + $0x8] sm:$0xf] %v358
  %375 = vst [vmem:[%s3 + $0xc] sm:$0xf] %v359
  %376 = vst [vmem:[%s3 + $0x10] sm:$0xf] %v360
  %377 = vst [vmem:[%s3 + $0x14] sm:$0xf] %v361
  %378 = vst [vmem:[%s3 + $0x18] sm:$0xf] %v362
  %379 = vst [vmem:[%s3 + $0x1c] sm:$0xf] %v363
  %380 = vst [vmem:[%s3 + $0x20] sm:$0xf] %v364
  %381 = vst [vmem:[%s3 + $0x24] sm:$0xf] %v365
  %382 = vst [vmem:[%s3 + $0x28] sm:$0xf] %v366
  %383 = vst [vmem:[%s3 + $0x2c] sm:$0xf] %v367
  %384 = vst [vmem:[%s3 + $0x30] sm:$0xf] %v368
  %385 = vst [vmem:[%s3 + $0x34] sm:$0xf] %v369
  %386 = vst [vmem:[%s3 + $0x38] sm:$0xf] %v370
  %387 = vst [vmem:[%s3 + $0x3c] sm:$0xf] %v371
  // Predicated region
  $region14: #{autoencoder_forward.12} parent=0 // pred_check
    _
  $region15: #{autoencoder_forward.12} parent=0 // pred_check_branch
    %389 = sbr.rel (0) target = $region17
  $region16: #{autoencoder_forward.12} parent=0 // pred_region
    _
  $region17: #{autoencoder_forward.12} parent=0 // pred_fallthru
    _
  // Predicated region
  $region18: #{autoencoder_forward.12} parent=0 // pred_check
    _
  $region19: #{autoencoder_forward.12} parent=0 // pred_check_branch
    %391 = sbr.rel (0) target = $region21
  $region20: #{autoencoder_forward.12} parent=0 // pred_region
    _
  $region21: #{autoencoder_forward.12} parent=0 // pred_fallthru
    _

// kernel: autoencoder_forward.13
$region0: #{autoencoder_forward.13}
  #allocation0 [shape = 'u32[]', space=smem, size = 0x4, offset = 0x4, fixed_abs, tag = 'smem constant byte address 0x4 - core index']
  #allocation1 [shape = 'u32[72,128]{1,0:T(1,128)}', space=vmem, size = 0x9000, scoped, tag = 'internal scratch']
  %s0 = inlined_call_operand.vmem [shape: bf16[512,128], index: 0, kind: input, shape index: {}]
  %s1 = inlined_call_operand.vmem [shape: bf16[128,512], index: 1, kind: input, shape index: {}]
  %s2 = inlined_call_operand.vmem [shape: f32[1,512], index: 2, kind: input, shape index: {}]
  %s3 = inlined_call_operand.vmem [shape: bf16[512,36], index: 3, kind: input, shape index: {}]
  %s4 = inlined_call_operand.vmem [shape: f32[1,36], index: 4, kind: input, shape index: {}]
  %s5 = inlined_call_operand.vmem [shape: f32[512,36], index: 5, kind: output, shape index: {}]
  %s6 = sld [smem:[#allocation0]]
  $region53: #{autoencoder_forward.13} parent=0
    _
  %s8 = ssub.s32 1, %s6
  %s9 = scalar_select 0, %s8, %s6
  loop: start=0, step=1, limit=4
  $region2: #{autoencoder_forward.13} parent=0 // loop_pre_header
    _
  $region3: #{autoencoder_forward.13} parent=0 // loop_header
    %s11 = sphi 0, %s15
    %p12 = scmp.ge.s32.totalorder %s11, 4
    %s21 = sphi 0, %s23
    %s24 = sphi 0, %s21
    %s25 = sphi 0, %s24
    %s41 = sphi 0, %s25
    %s45 = sphi 0, %s45
    %s47 = sphi 0, %s45
    %s48 = sphi 0, %s47
    %s62 = sphi 0, %s48
    %s66 = sphi 0, %s66
    %s68 = sphi 0, %s66
    %s69 = sphi 0, %s68
    %s83 = sphi 0, %s69
    %s87 = sphi 0, %s87
    %s89 = sphi 0, %s87
    %s90 = sphi 0, %s89
    %s104 = sphi 0, %s90
    %s108 = sphi 0, %s108
    %s110 = sphi 0, %s108
    %s111 = sphi 0, %s110
    %s125 = sphi 0, %s111
    %s131 = sphi 0, %s133
    %s134 = sphi 0, %s131
    %s135 = sphi 0, %s134
    %s151 = sphi 0, %s135
  $region4: #{autoencoder_forward.13} parent=0 // loop_header_branch
    %14 = sbr.rel (%p12) target = $region8
  $region5: #{autoencoder_forward.13} parent=0 // loop_body
    %s16 = ssub.s32 %s11, 1
    %s17 = ssub.s32 %s11, 2
    %s18 = sadd.s32 %s11, 1
    %s19 = ssub.s32 %s11, %s18
    %p20 = scmp.eq.s32.totalorder %s19, 0
    %s22 = sadd.s32 %s21, 1
    %s23 = scalar_select %p20, %s21, %s22
    %p26 = pneg %p20
    %p27 = scmp.eq.s32.totalorder %s11, 1
    %p28 = por %p26, %p27
    %p29 = scmp.ne.s32.totalorder %s21, %s24
    %p30 = scmp.eq.s32.totalorder %s11, 0
    %p31 = por %p29, %p30
    %p32 = scmp.ne.s32.totalorder %s21, %s24
    %p33 = scmp.eq.s32.totalorder %s16, 1
    %p34 = por %p32, %p33
    %p35 = scmp.ne.s32.totalorder %s24, %s25
    %p36 = scmp.eq.s32.totalorder %s16, 0
    %p37 = por %p35, %p36
    %p38 = scmp.ne.s32.totalorder %s24, %s25
    %p39 = scmp.eq.s32.totalorder %s17, 1
    %p40 = por %p38, %p39
    %p42 = scmp.ne.s32.totalorder %s25, %s41
    %p43 = scmp.eq.s32.totalorder %s17, 0
    %p44 = por %p42, %p43
    %s46 = sadd.s32 %s45, 1
    %p49 = scmp.eq.s32.totalorder %s11, 1
    %p50 = scmp.ne.s32.totalorder %s45, %s47
    %p51 = scmp.eq.s32.totalorder %s11, 0
    %p52 = por %p50, %p51
    %p53 = scmp.ne.s32.totalorder %s45, %s47
    %p54 = scmp.eq.s32.totalorder %s16, 1
    %p55 = por %p53, %p54
    %p56 = scmp.ne.s32.totalorder %s47, %s48
    %p57 = scmp.eq.s32.totalorder %s16, 0
    %p58 = por %p56, %p57
    %p59 = scmp.ne.s32.totalorder %s47, %s48
    %p60 = scmp.eq.s32.totalorder %s17, 1
    %p61 = por %p59, %p60
    %p63 = scmp.ne.s32.totalorder %s48, %s62
    %p64 = scmp.eq.s32.totalorder %s17, 0
    %p65 = por %p63, %p64
    %s67 = sadd.s32 %s66, 1
    %p70 = scmp.eq.s32.totalorder %s11, 1
    %p71 = scmp.ne.s32.totalorder %s66, %s68
    %p72 = scmp.eq.s32.totalorder %s11, 0
    %p73 = por %p71, %p72
    %p74 = scmp.ne.s32.totalorder %s66, %s68
    %p75 = scmp.eq.s32.totalorder %s16, 1
    %p76 = por %p74, %p75
    %p77 = scmp.ne.s32.totalorder %s68, %s69
    %p78 = scmp.eq.s32.totalorder %s16, 0
    %p79 = por %p77, %p78
    %p80 = scmp.ne.s32.totalorder %s68, %s69
    %p81 = scmp.eq.s32.totalorder %s17, 1
    %p82 = por %p80, %p81
    %p84 = scmp.ne.s32.totalorder %s69, %s83
    %p85 = scmp.eq.s32.totalorder %s17, 0
    %p86 = por %p84, %p85
    %s88 = sadd.s32 %s87, 1
    %p91 = scmp.eq.s32.totalorder %s11, 1
    %p92 = scmp.ne.s32.totalorder %s87, %s89
    %p93 = scmp.eq.s32.totalorder %s11, 0
    %p94 = por %p92, %p93
    %p95 = scmp.ne.s32.totalorder %s87, %s89
    %p96 = scmp.eq.s32.totalorder %s16, 1
    %p97 = por %p95, %p96
    %p98 = scmp.ne.s32.totalorder %s89, %s90
    %p99 = scmp.eq.s32.totalorder %s16, 0
    %p100 = por %p98, %p99
    %p101 = scmp.ne.s32.totalorder %s89, %s90
    %p102 = scmp.eq.s32.totalorder %s17, 1
    %p103 = por %p101, %p102
    %p105 = scmp.ne.s32.totalorder %s90, %s104
    %p106 = scmp.eq.s32.totalorder %s17, 0
    %p107 = por %p105, %p106
    %s109 = sadd.s32 %s108, 1
    %p112 = scmp.eq.s32.totalorder %s11, 1
    %p113 = scmp.ne.s32.totalorder %s108, %s110
    %p114 = scmp.eq.s32.totalorder %s11, 0
    %p115 = por %p113, %p114
    %p116 = scmp.ne.s32.totalorder %s108, %s110
    %p117 = scmp.eq.s32.totalorder %s16, 1
    %p118 = por %p116, %p117
    %p119 = scmp.ne.s32.totalorder %s110, %s111
    %p120 = scmp.eq.s32.totalorder %s16, 0
    %p121 = por %p119, %p120
    %p122 = scmp.ne.s32.totalorder %s110, %s111
    %p123 = scmp.eq.s32.totalorder %s17, 1
    %p124 = por %p122, %p123
    %p126 = scmp.ne.s32.totalorder %s111, %s125
    %p127 = scmp.eq.s32.totalorder %s17, 0
    %p128 = por %p126, %p127
    %s129 = ssub.s32 %s11, %s18
    %p130 = scmp.eq.s32.totalorder %s129, 0
    %s132 = sadd.s32 %s131, 1
    %s133 = scalar_select %p130, %s131, %s132
    %p136 = pneg %p130
    %p137 = scmp.eq.s32.totalorder %s11, 1
    %p138 = por %p136, %p137
    %p139 = scmp.ne.s32.totalorder %s131, %s134
    %p140 = scmp.eq.s32.totalorder %s11, 0
    %p141 = por %p139, %p140
    %p142 = scmp.ne.s32.totalorder %s131, %s134
    %p143 = scmp.eq.s32.totalorder %s16, 1
    %p144 = por %p142, %p143
    %p145 = scmp.ne.s32.totalorder %s134, %s135
    %p146 = scmp.eq.s32.totalorder %s16, 0
    %p147 = por %p145, %p146
    %p148 = scmp.ne.s32.totalorder %s134, %s135
    %p149 = scmp.eq.s32.totalorder %s17, 1
    %p150 = por %p148, %p149
    %p152 = scmp.ne.s32.totalorder %s135, %s151
    %p153 = scmp.eq.s32.totalorder %s17, 0
    %p154 = por %p152, %p153
    %p155 = scmp.le.s32.totalorder 1, %s11
    %p156 = scmp.lt.s32.totalorder %s11, 3
    %p157 = pnand %p155, %p156
    %p158 = pneg %p157
    // Predicated region
    $region9: #{autoencoder_forward.13} parent=5 // pred_check
      _
    $region10: #{autoencoder_forward.13} parent=5 // pred_check_branch
      %160 = sbr.rel (%p157) target = $region12
    $region11: #{autoencoder_forward.13} parent=5 // pred_region
      %s161 = ssub.s32 %s11, 1
      // Predicated region
      $region13: #{autoencoder_forward.13} parent=11 // pred_check
        %p162 = pneg %p58
      $region14: #{autoencoder_forward.13} parent=11 // pred_check_branch
        %164 = sbr.rel (%p162) target = $region16
      $region15: #{autoencoder_forward.13} parent=11 // pred_region
        _
      $region16: #{autoencoder_forward.13} parent=11 // pred_fallthru
        _
      // Predicated region
      $region17: #{autoencoder_forward.13} parent=11 // pred_check
        %p165 = pneg %p79
      $region18: #{autoencoder_forward.13} parent=11 // pred_check_branch
        %167 = sbr.rel (%p165) target = $region20
      $region19: #{autoencoder_forward.13} parent=11 // pred_region
        _
      $region20: #{autoencoder_forward.13} parent=11 // pred_fallthru
        _
      // Predicated region
      $region21: #{autoencoder_forward.13} parent=11 // pred_check
        %p168 = pneg %p100
      $region22: #{autoencoder_forward.13} parent=11 // pred_check_branch
        %170 = sbr.rel (%p168) target = $region24
      $region23: #{autoencoder_forward.13} parent=11 // pred_region
        _
      $region24: #{autoencoder_forward.13} parent=11 // pred_fallthru
        _
      // Predicated region
      $region25: #{autoencoder_forward.13} parent=11 // pred_check
        %p171 = pneg %p121
      $region26: #{autoencoder_forward.13} parent=11 // pred_check_branch
        %173 = sbr.rel (%p171) target = $region28
      $region27: #{autoencoder_forward.13} parent=11 // pred_region
        _
      $region28: #{autoencoder_forward.13} parent=11 // pred_fallthru
        _
    $region12: #{autoencoder_forward.13} parent=5 // pred_fallthru
      _
    %p174 = scmp.lt.s32.totalorder %s11, 2
    // Predicated region
    $region29: #{autoencoder_forward.13} parent=5 // pred_check
      %p175 = pneg %p174
    $region30: #{autoencoder_forward.13} parent=5 // pred_check_branch
      %177 = sbr.rel (%p175) target = $region32
    $region31: #{autoencoder_forward.13} parent=5 // pred_region
      // Predicated region
      $region33: #{autoencoder_forward.13} parent=31 // pred_check
        %p178 = pneg %p31
      $region34: #{autoencoder_forward.13} parent=31 // pred_check_branch
        %180 = sbr.rel (%p178) target = $region36
      $region35: #{autoencoder_forward.13} parent=31 // pred_region
        %s181 = smul.u32 32, %s11
        %p182 = scmp.lt.s32.totalorder %s181, 63
        %s183 = scalar_select %p182, %s181, 63
        %s184 = smul.addr %s183, 4
        %s185 = scalar_lea.vmem %s0, %s184
        %s186 = smul.u32 32, %s11
      $region36: #{autoencoder_forward.13} parent=31 // pred_fallthru
        _
    $region32: #{autoencoder_forward.13} parent=5 // pred_fallthru
      _
    %p187 = scmp.le.s32.totalorder 1, %s11
    %p188 = scmp.lt.s32.totalorder %s11, 3
    %p189 = pnand %p187, %p188
    %p190 = pneg %p189
    // Predicated region
    $region37: #{autoencoder_forward.13} parent=5 // pred_check
      _
    $region38: #{autoencoder_forward.13} parent=5 // pred_check_branch
      %192 = sbr.rel (%p189) target = $region40
    $region39: #{autoencoder_forward.13} parent=5 // pred_region
      %s193 = ssub.s32 %s11, 1
      %s194 = smul.u32 32, %s16
      %p195 = scmp.lt.s32.totalorder %s194, 63
      %s196 = scalar_select %p195, %s194, 63
      %s197 = smul.addr %s196, 4
      %s198 = scalar_lea.vmem %s0, %s197
      %p199 = pneg %p37
      %p200 = pneg %p34
      %p201 = pneg %p58
      %p202 = pneg %p55
      %p203 = pneg %p79
      %p204 = pneg %p76
      %p205 = pneg %p100
      %p206 = pneg %p97
      %p207 = pneg %p121
      %p208 = pneg %p118
      %p209 = pneg %p147
      %p210 = pneg %p144
      %s211 = smul.u32 32, %s16
      %p212 = scmp.lt.s32.totalorder %s211, 63
      %s213 = scalar_select %p212, %s211, 63
      %s214 = smul.addr %s213, 8
      %s215 = scalar_lea.vmem %s5, %s214
      %s216 = smul.u32 32, %s16
      %p217 = scmp.lt.s32.totalorder %s216, 63
      %s218 = scalar_select %p217, %s216, 63
      %s219 = smul.addr %s218, 4
      %s220 = scalar_lea.vmem %s0, %s219
      %s221 = smul.u32 32, %s16
      %s222 = smul.u32 32, %s16
      %p223 = scmp.lt.s32.totalorder %s222, 63
      %s224 = scalar_select %p223, %s222, 63
      %s225 = smul.addr %s224, 8
      %s226 = scalar_lea.vmem %s5, %s225
      %s227 = smul.u32 32, %s16
      %v228 = vld [vmem:[%s220] sm:$0xf]
      %v229 = vld [vmem:[%s220 + $0x4] sm:$0xf]
      %v230 = vld [vmem:[%s220 + $0x8] sm:$0xf]
      %v231 = vld [vmem:[%s220 + $0xc] sm:$0xf]
      %v232 = vld [vmem:[%s220 + $0x10] sm:$0xf]
      %v233 = vld [vmem:[%s220 + $0x14] sm:$0xf]
      %v234 = vld [vmem:[%s220 + $0x18] sm:$0xf]
      %v235 = vld [vmem:[%s220 + $0x1c] sm:$0xf]
      %v236 = vld [vmem:[%s220 + $0x20] sm:$0xf]
      %v237 = vld [vmem:[%s220 + $0x24] sm:$0xf]
      %v238 = vld [vmem:[%s220 + $0x28] sm:$0xf]
      %v239 = vld [vmem:[%s220 + $0x2c] sm:$0xf]
      %v240 = vld [vmem:[%s220 + $0x30] sm:$0xf]
      %v241 = vld [vmem:[%s220 + $0x34] sm:$0xf]
      %v242 = vld [vmem:[%s220 + $0x38] sm:$0xf]
      %v243 = vld [vmem:[%s220 + $0x3c] sm:$0xf]
      %v244 = vld [vmem:[%s220 + $0x40] sm:$0xf]
      %v245 = vld [vmem:[%s220 + $0x44] sm:$0xf]
      %v246 = vld [vmem:[%s220 + $0x48] sm:$0xf]
      %v247 = vld [vmem:[%s220 + $0x4c] sm:$0xf]
      %v248 = vld [vmem:[%s220 + $0x50] sm:$0xf]
      %v249 = vld [vmem:[%s220 + $0x54] sm:$0xf]
      %v250 = vld [vmem:[%s220 + $0x58] sm:$0xf]
      %v251 = vld [vmem:[%s220 + $0x5c] sm:$0xf]
      %v252 = vld [vmem:[%s220 + $0x60] sm:$0xf]
      %v253 = vld [vmem:[%s220 + $0x64] sm:$0xf]
      %v254 = vld [vmem:[%s220 + $0x68] sm:$0xf]
      %v255 = vld [vmem:[%s220 + $0x6c] sm:$0xf]
      %v256 = vld [vmem:[%s220 + $0x70] sm:$0xf]
      %v257 = vld [vmem:[%s220 + $0x74] sm:$0xf]
      %v258 = vld [vmem:[%s220 + $0x78] sm:$0xf]
      %v259 = vld [vmem:[%s220 + $0x7c] sm:$0xf]
      %v260 = vld [vmem:[%s1] sm:$0xff]
      %v261 = vld [vmem:[%s1 + $0x8] sm:$0xff]
      %v262 = vld [vmem:[%s1 + $0x10] sm:$0xff]
      %v263 = vld [vmem:[%s1 + $0x18] sm:$0xff]
      %v264 = vld [vmem:[%s1 + $0x20] sm:$0xff]
      %v265 = vld [vmem:[%s1 + $0x28] sm:$0xff]
      %v266 = vld [vmem:[%s1 + $0x30] sm:$0xff]
      %v267 = vld [vmem:[%s1 + $0x38] sm:$0xff]
      %v268 = vld [vmem:[%s1 + $0x40] sm:$0xff]
      %v269 = vld [vmem:[%s1 + $0x48] sm:$0xff]
      %v270 = vld [vmem:[%s1 + $0x50] sm:$0xff]
      %v271 = vld [vmem:[%s1 + $0x58] sm:$0xff]
      %v272 = vld [vmem:[%s1 + $0x60] sm:$0xff]
      %v273 = vld [vmem:[%s1 + $0x68] sm:$0xff]
      %v274 = vld [vmem:[%s1 + $0x70] sm:$0xff]
      %v275 = vld [vmem:[%s1 + $0x78] sm:$0xff]
      %v276 = vld [vmem:[%s1 + $0x80] sm:$0xff]
      %v277 = vld [vmem:[%s1 + $0x88] sm:$0xff]
      %v278 = vld [vmem:[%s1 + $0x90] sm:$0xff]
      %v279 = vld [vmem:[%s1 + $0x98] sm:$0xff]
      %v280 = vld [vmem:[%s1 + $0xa0] sm:$0xff]
      %v281 = vld [vmem:[%s1 + $0xa8] sm:$0xff]
      %v282 = vld [vmem:[%s1 + $0xb0] sm:$0xff]
      %v283 = vld [vmem:[%s1 + $0xb8] sm:$0xff]
      %v284 = vld [vmem:[%s1 + $0xc0] sm:$0xff]
      %v285 = vld [vmem:[%s1 + $0xc8] sm:$0xff]
      %v286 = vld [vmem:[%s1 + $0xd0] sm:$0xff]
      %v287 = vld [vmem:[%s1 + $0xd8] sm:$0xff]
      %v288 = vld [vmem:[%s1 + $0xe0] sm:$0xff]
      %v289 = vld [vmem:[%s1 + $0xe8] sm:$0xff]
      %v290 = vld [vmem:[%s1 + $0xf0] sm:$0xff]
      %v291 = vld [vmem:[%s1 + $0xf8] sm:$0xff]
      %v292 = vld [vmem:[%s2] sm:$0xf]
      %v294 = vperm.slane %v292, 0
      %v295 = vperm.slane %v292, 1
      %v296 = vperm.slane %v292, 2
      %v297 = vperm.slane %v292, 3
      %v334 = vunpack.c.l.b16 %v228
      %v335 = vunpack.c.l.b16 %v229
      %v336 = vunpack.c.l.b16 %v230
      %v337 = vunpack.c.l.b16 %v231
      %v338 = vunpack.c.l.b16 %v232
      %v339 = vunpack.c.l.b16 %v233
      %v340 = vunpack.c.l.b16 %v234
      %v341 = vunpack.c.l.b16 %v235
      %v342 = vunpack.c.l.b16 %v236
      %v343 = vunpack.c.l.b16 %v237
      %v344 = vunpack.c.l.b16 %v238
      %v345 = vunpack.c.l.b16 %v239
      %v346 = vunpack.c.l.b16 %v240
      %v347 = vunpack.c.l.b16 %v241
      %v348 = vunpack.c.l.b16 %v242
      %v349 = vunpack.c.l.b16 %v243
      %v350 = vunpack.c.l.b16 %v244
      %v351 = vunpack.c.l.b16 %v245
      %v352 = vunpack.c.l.b16 %v246
      %v353 = vunpack.c.l.b16 %v247
      %v354 = vunpack.c.l.b16 %v248
      %v355 = vunpack.c.l.b16 %v249
      %v356 = vunpack.c.l.b16 %v250
      %v357 = vunpack.c.l.b16 %v251
      %v358 = vunpack.c.l.b16 %v252
      %v359 = vunpack.c.l.b16 %v253
      %v360 = vunpack.c.l.b16 %v254
      %v361 = vunpack.c.l.b16 %v255
      %v362 = vunpack.c.l.b16 %v256
      %v363 = vunpack.c.l.b16 %v257
      %v364 = vunpack.c.l.b16 %v258
      %v365 = vunpack.c.l.b16 %v259
      %v366 = vpack.c.b16 %v335, %v334
      %v367 = vpack.c.b16 %v337, %v336
      %v368 = vpack.c.b16 %v339, %v338
      %v369 = vpack.c.b16 %v341, %v340
      %v370 = vpack.c.b16 %v343, %v342
      %v371 = vpack.c.b16 %v345, %v344
      %v372 = vpack.c.b16 %v347, %v346
      %v373 = vpack.c.b16 %v349, %v348
      %v374 = vpack.c.b16 %v351, %v350
      %v375 = vpack.c.b16 %v353, %v352
      %v376 = vpack.c.b16 %v355, %v354
      %v377 = vpack.c.b16 %v357, %v356
      %v378 = vpack.c.b16 %v359, %v358
      %v379 = vpack.c.b16 %v361, %v360
      %v380 = vpack.c.b16 %v363, %v362
      %v381 = vpack.c.b16 %v365, %v364
      %v430 = vunpack.c.l.b16 %v260
      %v431 = vunpack.c.h.b16 %v260
      %v432 = vunpack.c.l.b16 %v261
      %v433 = vunpack.c.h.b16 %v261
      %v434 = vunpack.c.l.b16 %v262
      %v435 = vunpack.c.h.b16 %v262
      %v436 = vunpack.c.l.b16 %v263
      %v437 = vunpack.c.h.b16 %v263
      %v438 = vunpack.c.l.b16 %v264
      %v439 = vunpack.c.h.b16 %v264
      %v440 = vunpack.c.l.b16 %v265
      %v441 = vunpack.c.h.b16 %v265
      %v442 = vunpack.c.l.b16 %v266
      %v443 = vunpack.c.h.b16 %v266
      %v444 = vunpack.c.l.b16 %v267
      %v445 = vunpack.c.h.b16 %v267
      %v446 = vunpack.c.l.b16 %v268
      %v447 = vunpack.c.h.b16 %v268
      %v448 = vunpack.c.l.b16 %v269
      %v449 = vunpack.c.h.b16 %v269
      %v450 = vunpack.c.l.b16 %v270
      %v451 = vunpack.c.h.b16 %v270
      %v452 = vunpack.c.l.b16 %v271
      %v453 = vunpack.c.h.b16 %v271
      %v454 = vunpack.c.l.b16 %v272
      %v455 = vunpack.c.h.b16 %v272
      %v456 = vunpack.c.l.b16 %v273
      %v457 = vunpack.c.h.b16 %v273
      %v458 = vunpack.c.l.b16 %v274
      %v459 = vunpack.c.h.b16 %v274
      %v460 = vunpack.c.l.b16 %v275
      %v461 = vunpack.c.h.b16 %v275
      %v462 = vunpack.c.l.b16 %v276
      %v463 = vunpack.c.h.b16 %v276
      %v464 = vunpack.c.l.b16 %v277
      %v465 = vunpack.c.h.b16 %v277
      %v466 = vunpack.c.l.b16 %v278
      %v467 = vunpack.c.h.b16 %v278
      %v468 = vunpack.c.l.b16 %v279
      %v469 = vunpack.c.h.b16 %v279
      %v470 = vunpack.c.l.b16 %v280
      %v471 = vunpack.c.h.b16 %v280
      %v472 = vunpack.c.l.b16 %v281
      %v473 = vunpack.c.h.b16 %v281
      %v474 = vunpack.c.l.b16 %v282
      %v475 = vunpack.c.h.b16 %v282
      %v476 = vunpack.c.l.b16 %v283
      %v477 = vunpack.c.h.b16 %v283
      %v478 = vunpack.c.l.b16 %v284
      %v479 = vunpack.c.h.b16 %v284
      %v480 = vunpack.c.l.b16 %v285
      %v481 = vunpack.c.h.b16 %v285
      %v482 = vunpack.c.l.b16 %v286
      %v483 = vunpack.c.h.b16 %v286
      %v484 = vunpack.c.l.b16 %v287
      %v485 = vunpack.c.h.b16 %v287
      %v486 = vunpack.c.l.b16 %v288
      %v487 = vunpack.c.h.b16 %v288
      %v488 = vunpack.c.l.b16 %v289
      %v489 = vunpack.c.h.b16 %v289
      %v490 = vunpack.c.l.b16 %v290
      %v491 = vunpack.c.h.b16 %v290
      %v492 = vunpack.c.l.b16 %v291
      %v493 = vunpack.c.h.b16 %v291
      %v494 = vpack.c.b16 %v434, %v430
      %v495 = vpack.c.b16 %v435, %v431
      %v496 = vpack.c.b16 %v436, %v432
      %v497 = vpack.c.b16 %v437, %v433
      %v498 = vpack.c.b16 %v442, %v438
      %v499 = vpack.c.b16 %v443, %v439
      %v500 = vpack.c.b16 %v444, %v440
      %v501 = vpack.c.b16 %v445, %v441
      %v502 = vpack.c.b16 %v450, %v446
      %v503 = vpack.c.b16 %v451, %v447
      %v504 = vpack.c.b16 %v452, %v448
      %v505 = vpack.c.b16 %v453, %v449
      %v506 = vpack.c.b16 %v458, %v454
      %v507 = vpack.c.b16 %v459, %v455
      %v508 = vpack.c.b16 %v460, %v456
      %v509 = vpack.c.b16 %v461, %v457
      %v510 = vpack.c.b16 %v466, %v462
      %v511 = vpack.c.b16 %v467, %v463
      %v512 = vpack.c.b16 %v468, %v464
      %v513 = vpack.c.b16 %v469, %v465
      %v514 = vpack.c.b16 %v474, %v470
      %v515 = vpack.c.b16 %v475, %v471
      %v516 = vpack.c.b16 %v476, %v472
      %v517 = vpack.c.b16 %v477, %v473
      %v518 = vpack.c.b16 %v482, %v478
      %v519 = vpack.c.b16 %v483, %v479
      %v520 = vpack.c.b16 %v484, %v480
      %v521 = vpack.c.b16 %v485, %v481
      %v522 = vpack.c.b16 %v490, %v486
      %v523 = vpack.c.b16 %v491, %v487
      %v524 = vpack.c.b16 %v492, %v488
      %v525 = vpack.c.b16 %v493, %v489
      %558 = vmatpush.bf16.msra.mxu0 %v522
      %559 = vmatpush.bf16.msra.mxu0 %v518
      %560 = vmatpush.bf16.msra.mxu0 %v514
      %561 = vmatpush.bf16.msra.mxu0 %v510
      %562 = vmatpush.bf16.msra.mxu0 %v506
      %563 = vmatpush.bf16.msra.mxu0 %v502
      %564 = vmatpush.bf16.msra.mxu0 %v498
      %565 = vmatpush.bf16.msra.mxu0 %v494
      %566 = vmatmul.bf16.gmra.mxu0 %v366
      %v567 = vpop.f32.mrf.mxu0
      %v568 = vadd.f32 %v294, %v567
      %v569 = vpop.f32.mrf.mxu0
      %v570 = vadd.f32 %v294, %v569
      %571 = vmatmul.bf16.gmra.mxu0 %v367
      %v572 = vpop.f32.mrf.mxu0
      %v573 = vadd.f32 %v294, %v572
      %v574 = vpop.f32.mrf.mxu0
      %v575 = vadd.f32 %v294, %v574
      %576 = vmatmul.bf16.gmra.mxu0 %v368
      %v577 = vpop.f32.mrf.mxu0
      %v578 = vadd.f32 %v294, %v577
      %v579 = vpop.f32.mrf.mxu0
      %v580 = vadd.f32 %v294, %v579
      %581 = vmatmul.bf16.gmra.mxu0 %v369
      %v582 = vpop.f32.mrf.mxu0
      %v583 = vadd.f32 %v294, %v582
      %v584 = vpop.f32.mrf.mxu0
      %v585 = vadd.f32 %v294, %v584
      %586 = vmatmul.bf16.gmra.mxu0 %v370
      %v587 = vpop.f32.mrf.mxu0
      %v588 = vadd.f32 %v294, %v587
      %v589 = vpop.f32.mrf.mxu0
      %v590 = vadd.f32 %v294, %v589
      %591 = vmatmul.bf16.gmra.mxu0 %v371
      %v592 = vpop.f32.mrf.mxu0
      %v593 = vadd.f32 %v294, %v592
      %v594 = vpop.f32.mrf.mxu0
      %v595 = vadd.f32 %v294, %v594
      %596 = vmatmul.bf16.gmra.mxu0 %v372
      %v597 = vpop.f32.mrf.mxu0
      %v598 = vadd.f32 %v294, %v597
      %v599 = vpop.f32.mrf.mxu0
      %v600 = vadd.f32 %v294, %v599
      %601 = vmatmul.bf16.gmra.mxu0 %v373
      %v602 = vpop.f32.mrf.mxu0
      %v603 = vadd.f32 %v294, %v602
      %v604 = vpop.f32.mrf.mxu0
      %v605 = vadd.f32 %v294, %v604
      %606 = vmatmul.bf16.gmra.mxu0 %v374
      %v607 = vpop.f32.mrf.mxu0
      %v608 = vadd.f32 %v294, %v607
      %v609 = vpop.f32.mrf.mxu0
      %v610 = vadd.f32 %v294, %v609
      %611 = vmatmul.bf16.gmra.mxu0 %v375
      %v612 = vpop.f32.mrf.mxu0
      %v613 = vadd.f32 %v294, %v612
      %v614 = vpop.f32.mrf.mxu0
      %v615 = vadd.f32 %v294, %v614
      %616 = vmatmul.bf16.gmra.mxu0 %v376
      %v617 = vpop.f32.mrf.mxu0
      %v618 = vadd.f32 %v294, %v617
      %v619 = vpop.f32.mrf.mxu0
      %v620 = vadd.f32 %v294, %v619
      %621 = vmatmul.bf16.gmra.mxu0 %v377
      %v622 = vpop.f32.mrf.mxu0
      %v623 = vadd.f32 %v294, %v622
      %v624 = vpop.f32.mrf.mxu0
      %v625 = vadd.f32 %v294, %v624
      %626 = vmatmul.bf16.gmra.mxu0 %v378
      %v627 = vpop.f32.mrf.mxu0
      %v628 = vadd.f32 %v294, %v627
      %v629 = vpop.f32.mrf.mxu0
      %v630 = vadd.f32 %v294, %v629
      %631 = vmatmul.bf16.gmra.mxu0 %v379
      %v632 = vpop.f32.mrf.mxu0
      %v633 = vadd.f32 %v294, %v632
      %v634 = vpop.f32.mrf.mxu0
      %v635 = vadd.f32 %v294, %v634
      %636 = vmatmul.bf16.gmra.mxu0 %v380
      %v637 = vpop.f32.mrf.mxu0
      %v638 = vadd.f32 %v294, %v637
      %v639 = vpop.f32.mrf.mxu0
      %v640 = vadd.f32 %v294, %v639
      %641 = vmatmul.bf16.gmra.mxu0 %v381
      %v642 = vpop.f32.mrf.mxu0
      %v643 = vadd.f32 %v294, %v642
      %v644 = vpop.f32.mrf.mxu0
      %v645 = vadd.f32 %v294, %v644
      %646 = vdwg.mxu0
      %647 = vmatpush.bf16.msra.mxu0 %v523
      %648 = vmatpush.bf16.msra.mxu0 %v519
      %649 = vmatpush.bf16.msra.mxu0 %v515
      %650 = vmatpush.bf16.msra.mxu0 %v511
      %651 = vmatpush.bf16.msra.mxu0 %v507
      %652 = vmatpush.bf16.msra.mxu0 %v503
      %653 = vmatpush.bf16.msra.mxu0 %v499
      %654 = vmatpush.bf16.msra.mxu0 %v495
      %655 = vmatmul.bf16.gmra.mxu0 %v366
      %v656 = vpop.f32.mrf.mxu0
      %v657 = vadd.f32 %v295, %v656
      %v658 = vpop.f32.mrf.mxu0
      %v659 = vadd.f32 %v295, %v658
      %660 = vmatmul.bf16.gmra.mxu0 %v367
      %v661 = vpop.f32.mrf.mxu0
      %v662 = vadd.f32 %v295, %v661
      %v663 = vpop.f32.mrf.mxu0
      %v664 = vadd.f32 %v295, %v663
      %665 = vmatmul.bf16.gmra.mxu0 %v368
      %v666 = vpop.f32.mrf.mxu0
      %v667 = vadd.f32 %v295, %v666
      %v668 = vpop.f32.mrf.mxu0
      %v669 = vadd.f32 %v295, %v668
      %670 = vmatmul.bf16.gmra.mxu0 %v369
      %v671 = vpop.f32.mrf.mxu0
      %v672 = vadd.f32 %v295, %v671
      %v673 = vpop.f32.mrf.mxu0
      %v674 = vadd.f32 %v295, %v673
      %675 = vmatmul.bf16.gmra.mxu0 %v370
      %v676 = vpop.f32.mrf.mxu0
      %v677 = vadd.f32 %v295, %v676
      %v678 = vpop.f32.mrf.mxu0
      %v679 = vadd.f32 %v295, %v678
      %680 = vmatmul.bf16.gmra.mxu0 %v371
      %v681 = vpop.f32.mrf.mxu0
      %v682 = vadd.f32 %v295, %v681
      %v683 = vpop.f32.mrf.mxu0
      %v684 = vadd.f32 %v295, %v683
      %685 = vmatmul.bf16.gmra.mxu0 %v372
      %v686 = vpop.f32.mrf.mxu0
      %v687 = vadd.f32 %v295, %v686
      %v688 = vpop.f32.mrf.mxu0
      %v689 = vadd.f32 %v295, %v688
      %690 = vmatmul.bf16.gmra.mxu0 %v373
      %v691 = vpop.f32.mrf.mxu0
      %v692 = vadd.f32 %v295, %v691
      %v693 = vpop.f32.mrf.mxu0
      %v694 = vadd.f32 %v295, %v693
      %695 = vmatmul.bf16.gmra.mxu0 %v374
      %v696 = vpop.f32.mrf.mxu0
      %v697 = vadd.f32 %v295, %v696
      %v698 = vpop.f32.mrf.mxu0
      %v699 = vadd.f32 %v295, %v698
      %700 = vmatmul.bf16.gmra.mxu0 %v375
      %v701 = vpop.f32.mrf.mxu0
      %v702 = vadd.f32 %v295, %v701
      %v703 = vpop.f32.mrf.mxu0
      %v704 = vadd.f32 %v295, %v703
      %705 = vmatmul.bf16.gmra.mxu0 %v376
      %v706 = vpop.f32.mrf.mxu0
      %v707 = vadd.f32 %v295, %v706
      %v708 = vpop.f32.mrf.mxu0
      %v709 = vadd.f32 %v295, %v708
      %710 = vmatmul.bf16.gmra.mxu0 %v377
      %v711 = vpop.f32.mrf.mxu0
      %v712 = vadd.f32 %v295, %v711
      %v713 = vpop.f32.mrf.mxu0
      %v714 = vadd.f32 %v295, %v713
      %715 = vmatmul.bf16.gmra.mxu0 %v378
      %v716 = vpop.f32.mrf.mxu0
      %v717 = vadd.f32 %v295, %v716
      %v718 = vpop.f32.mrf.mxu0
      %v719 = vadd.f32 %v295, %v718
      %720 = vmatmul.bf16.gmra.mxu0 %v379
      %v721 = vpop.f32.mrf.mxu0
      %v722 = vadd.f32 %v295, %v721
      %v723 = vpop.f32.mrf.mxu0
      %v724 = vadd.f32 %v295, %v723
      %725 = vmatmul.bf16.gmra.mxu0 %v380
      %v726 = vpop.f32.mrf.mxu0
      %v727 = vadd.f32 %v295, %v726
      %v728 = vpop.f32.mrf.mxu0
      %v729 = vadd.f32 %v295, %v728
      %730 = vmatmul.bf16.gmra.mxu0 %v381
      %v731 = vpop.f32.mrf.mxu0
      %v732 = vadd.f32 %v295, %v731
      %v733 = vpop.f32.mrf.mxu0
      %v734 = vadd.f32 %v295, %v733
      %735 = vdwg.mxu0
      %736 = vmatpush.bf16.msra.mxu0 %v524
      %737 = vmatpush.bf16.msra.mxu0 %v520
      %738 = vmatpush.bf16.msra.mxu0 %v516
      %739 = vmatpush.bf16.msra.mxu0 %v512
      %740 = vmatpush.bf16.msra.mxu0 %v508
      %741 = vmatpush.bf16.msra.mxu0 %v504
      %742 = vmatpush.bf16.msra.mxu0 %v500
      %743 = vmatpush.bf16.msra.mxu0 %v496
      %744 = vmatmul.bf16.gmra.mxu0 %v366
      %v745 = vpop.f32.mrf.mxu0
      %v746 = vadd.f32 %v296, %v745
      %v747 = vpop.f32.mrf.mxu0
      %v748 = vadd.f32 %v296, %v747
      %749 = vmatmul.bf16.gmra.mxu0 %v367
      %v750 = vpop.f32.mrf.mxu0
      %v751 = vadd.f32 %v296, %v750
      %v752 = vpop.f32.mrf.mxu0
      %v753 = vadd.f32 %v296, %v752
      %754 = vmatmul.bf16.gmra.mxu0 %v368
      %v755 = vpop.f32.mrf.mxu0
      %v756 = vadd.f32 %v296, %v755
      %v757 = vpop.f32.mrf.mxu0
      %v758 = vadd.f32 %v296, %v757
      %759 = vmatmul.bf16.gmra.mxu0 %v369
      %v760 = vpop.f32.mrf.mxu0
      %v761 = vadd.f32 %v296, %v760
      %v762 = vpop.f32.mrf.mxu0
      %v763 = vadd.f32 %v296, %v762
      %764 = vmatmul.bf16.gmra.mxu0 %v370
      %v765 = vpop.f32.mrf.mxu0
      %v766 = vadd.f32 %v296, %v765
      %v767 = vpop.f32.mrf.mxu0
      %v768 = vadd.f32 %v296, %v767
      %769 = vmatmul.bf16.gmra.mxu0 %v371
      %v770 = vpop.f32.mrf.mxu0
      %v771 = vadd.f32 %v296, %v770
      %v772 = vpop.f32.mrf.mxu0
      %v773 = vadd.f32 %v296, %v772
      %774 = vmatmul.bf16.gmra.mxu0 %v372
      %v775 = vpop.f32.mrf.mxu0
      %v776 = vadd.f32 %v296, %v775
      %v777 = vpop.f32.mrf.mxu0
      %v778 = vadd.f32 %v296, %v777
      %779 = vmatmul.bf16.gmra.mxu0 %v373
      %v780 = vpop.f32.mrf.mxu0
      %v781 = vadd.f32 %v296, %v780
      %v782 = vpop.f32.mrf.mxu0
      %v783 = vadd.f32 %v296, %v782
      %784 = vmatmul.bf16.gmra.mxu0 %v374
      %v785 = vpop.f32.mrf.mxu0
      %v786 = vadd.f32 %v296, %v785
      %v787 = vpop.f32.mrf.mxu0
      %v788 = vadd.f32 %v296, %v787
      %789 = vmatmul.bf16.gmra.mxu0 %v375
      %v790 = vpop.f32.mrf.mxu0
      %v791 = vadd.f32 %v296, %v790
      %v792 = vpop.f32.mrf.mxu0
      %v793 = vadd.f32 %v296, %v792
      %794 = vmatmul.bf16.gmra.mxu0 %v376
      %v795 = vpop.f32.mrf.mxu0
      %v796 = vadd.f32 %v296, %v795
      %v797 = vpop.f32.mrf.mxu0
      %v798 = vadd.f32 %v296, %v797
      %799 = vmatmul.bf16.gmra.mxu0 %v377
      %v800 = vpop.f32.mrf.mxu0
      %v801 = vadd.f32 %v296, %v800
      %v802 = vpop.f32.mrf.mxu0
      %v803 = vadd.f32 %v296, %v802
      %804 = vmatmul.bf16.gmra.mxu0 %v378
      %v805 = vpop.f32.mrf.mxu0
      %v806 = vadd.f32 %v296, %v805
      %v807 = vpop.f32.mrf.mxu0
      %v808 = vadd.f32 %v296, %v807
      %809 = vmatmul.bf16.gmra.mxu0 %v379
      %v810 = vpop.f32.mrf.mxu0
      %v811 = vadd.f32 %v296, %v810
      %v812 = vpop.f32.mrf.mxu0
      %v813 = vadd.f32 %v296, %v812
      %814 = vmatmul.bf16.gmra.mxu0 %v380
      %v815 = vpop.f32.mrf.mxu0
      %v816 = vadd.f32 %v296, %v815
      %v817 = vpop.f32.mrf.mxu0
      %v818 = vadd.f32 %v296, %v817
      %819 = vmatmul.bf16.gmra.mxu0 %v381
      %v820 = vpop.f32.mrf.mxu0
      %v821 = vadd.f32 %v296, %v820
      %v822 = vpop.f32.mrf.mxu0
      %v823 = vadd.f32 %v296, %v822
      %824 = vdwg.mxu0
      %825 = vmatpush.bf16.msra.mxu0 %v525
      %826 = vmatpush.bf16.msra.mxu0 %v521
      %827 = vmatpush.bf16.msra.mxu0 %v517
      %828 = vmatpush.bf16.msra.mxu0 %v513
      %829 = vmatpush.bf16.msra.mxu0 %v509
      %830 = vmatpush.bf16.msra.mxu0 %v505
      %831 = vmatpush.bf16.msra.mxu0 %v501
      %832 = vmatpush.bf16.msra.mxu0 %v497
      %833 = vmatmul.bf16.gmra.mxu0 %v366
      %v834 = vpop.f32.mrf.mxu0
      %v835 = vadd.f32 %v297, %v834
      %v836 = vpop.f32.mrf.mxu0
      %v837 = vadd.f32 %v297, %v836
      %838 = vmatmul.bf16.gmra.mxu0 %v367
      %v839 = vpop.f32.mrf.mxu0
      %v840 = vadd.f32 %v297, %v839
      %v841 = vpop.f32.mrf.mxu0
      %v842 = vadd.f32 %v297, %v841
      %843 = vmatmul.bf16.gmra.mxu0 %v368
      %v844 = vpop.f32.mrf.mxu0
      %v845 = vadd.f32 %v297, %v844
      %v846 = vpop.f32.mrf.mxu0
      %v847 = vadd.f32 %v297, %v846
      %848 = vmatmul.bf16.gmra.mxu0 %v369
      %v849 = vpop.f32.mrf.mxu0
      %v850 = vadd.f32 %v297, %v849
      %v851 = vpop.f32.mrf.mxu0
      %v852 = vadd.f32 %v297, %v851
      %853 = vmatmul.bf16.gmra.mxu0 %v370
      %v854 = vpop.f32.mrf.mxu0
      %v855 = vadd.f32 %v297, %v854
      %v856 = vpop.f32.mrf.mxu0
      %v857 = vadd.f32 %v297, %v856
      %858 = vmatmul.bf16.gmra.mxu0 %v371
      %v859 = vpop.f32.mrf.mxu0
      %v860 = vadd.f32 %v297, %v859
      %v861 = vpop.f32.mrf.mxu0
      %v862 = vadd.f32 %v297, %v861
      %863 = vmatmul.bf16.gmra.mxu0 %v372
      %v864 = vpop.f32.mrf.mxu0
      %v865 = vadd.f32 %v297, %v864
      %v866 = vpop.f32.mrf.mxu0
      %v867 = vadd.f32 %v297, %v866
      %868 = vmatmul.bf16.gmra.mxu0 %v373
      %v869 = vpop.f32.mrf.mxu0
      %v870 = vadd.f32 %v297, %v869
      %v871 = vpop.f32.mrf.mxu0
      %v872 = vadd.f32 %v297, %v871
      %873 = vmatmul.bf16.gmra.mxu0 %v374
      %v874 = vpop.f32.mrf.mxu0
      %v875 = vadd.f32 %v297, %v874
      %v876 = vpop.f32.mrf.mxu0
      %v877 = vadd.f32 %v297, %v876
      %878 = vmatmul.bf16.gmra.mxu0 %v375
      %v879 = vpop.f32.mrf.mxu0
      %v880 = vadd.f32 %v297, %v879
      %v881 = vpop.f32.mrf.mxu0
      %v882 = vadd.f32 %v297, %v881
      %883 = vmatmul.bf16.gmra.mxu0 %v376
      %v884 = vpop.f32.mrf.mxu0
      %v885 = vadd.f32 %v297, %v884
      %v886 = vpop.f32.mrf.mxu0
      %v887 = vadd.f32 %v297, %v886
      %888 = vmatmul.bf16.gmra.mxu0 %v377
      %v889 = vpop.f32.mrf.mxu0
      %v890 = vadd.f32 %v297, %v889
      %v891 = vpop.f32.mrf.mxu0
      %v892 = vadd.f32 %v297, %v891
      %893 = vmatmul.bf16.gmra.mxu0 %v378
      %v894 = vpop.f32.mrf.mxu0
      %v895 = vadd.f32 %v297, %v894
      %v896 = vpop.f32.mrf.mxu0
      %v897 = vadd.f32 %v297, %v896
      %898 = vmatmul.bf16.gmra.mxu0 %v379
      %v899 = vpop.f32.mrf.mxu0
      %v900 = vadd.f32 %v297, %v899
      %v901 = vpop.f32.mrf.mxu0
      %v902 = vadd.f32 %v297, %v901
      %903 = vmatmul.bf16.gmra.mxu0 %v380
      %v904 = vpop.f32.mrf.mxu0
      %v905 = vadd.f32 %v297, %v904
      %v906 = vpop.f32.mrf.mxu0
      %v907 = vadd.f32 %v297, %v906
      %908 = vmatmul.bf16.gmra.mxu0 %v381
      %v909 = vpop.f32.mrf.mxu0
      %v910 = vadd.f32 %v297, %v909
      %v911 = vpop.f32.mrf.mxu0
      %v912 = vadd.f32 %v297, %v911
      %913 = vdwg.mxu0
      %v914 = vmax.f32 %v568, 0.0
      %v915 = vmax.f32 %v657, 0.0
      %v916 = vmax.f32 %v746, 0.0
      %v917 = vmax.f32 %v835, 0.0
      %v918 = vmax.f32 %v570, 0.0
      %v919 = vmax.f32 %v659, 0.0
      %v920 = vmax.f32 %v748, 0.0
      %v921 = vmax.f32 %v837, 0.0
      %v922 = vmax.f32 %v573, 0.0
      %v923 = vmax.f32 %v662, 0.0
      %v924 = vmax.f32 %v751, 0.0
      %v925 = vmax.f32 %v840, 0.0
      %v926 = vmax.f32 %v575, 0.0
      %v927 = vmax.f32 %v664, 0.0
      %v928 = vmax.f32 %v753, 0.0
      %v929 = vmax.f32 %v842, 0.0
      %v930 = vmax.f32 %v578, 0.0
      %v931 = vmax.f32 %v667, 0.0
      %v932 = vmax.f32 %v756, 0.0
      %v933 = vmax.f32 %v845, 0.0
      %v934 = vmax.f32 %v580, 0.0
      %v935 = vmax.f32 %v669, 0.0
      %v936 = vmax.f32 %v758, 0.0
      %v937 = vmax.f32 %v847, 0.0
      %v938 = vmax.f32 %v583, 0.0
      %v939 = vmax.f32 %v672, 0.0
      %v940 = vmax.f32 %v761, 0.0
      %v941 = vmax.f32 %v850, 0.0
      %v942 = vmax.f32 %v585, 0.0
      %v943 = vmax.f32 %v674, 0.0
      %v944 = vmax.f32 %v763, 0.0
      %v945 = vmax.f32 %v852, 0.0
      %v946 = vmax.f32 %v588, 0.0
      %v947 = vmax.f32 %v677, 0.0
      %v948 = vmax.f32 %v766, 0.0
      %v949 = vmax.f32 %v855, 0.0
      %v950 = vmax.f32 %v590, 0.0
      %v951 = vmax.f32 %v679, 0.0
      %v952 = vmax.f32 %v768, 0.0
      %v953 = vmax.f32 %v857, 0.0
      %v954 = vmax.f32 %v593, 0.0
      %v955 = vmax.f32 %v682, 0.0
      %v956 = vmax.f32 %v771, 0.0
      %v957 = vmax.f32 %v860, 0.0
      %v958 = vmax.f32 %v595, 0.0
      %v959 = vmax.f32 %v684, 0.0
      %v960 = vmax.f32 %v773, 0.0
      %v961 = vmax.f32 %v862, 0.0
      %v962 = vmax.f32 %v598, 0.0
      %v963 = vmax.f32 %v687, 0.0
      %v964 = vmax.f32 %v776, 0.0
      %v965 = vmax.f32 %v865, 0.0
      %v966 = vmax.f32 %v600, 0.0
      %v967 = vmax.f32 %v689, 0.0
      %v968 = vmax.f32 %v778, 0.0
      %v969 = vmax.f32 %v867, 0.0
      %v970 = vmax.f32 %v603, 0.0
      %v971 = vmax.f32 %v692, 0.0
      %v972 = vmax.f32 %v781, 0.0
      %v973 = vmax.f32 %v870, 0.0
      %v974 = vmax.f32 %v605, 0.0
      %v975 = vmax.f32 %v694, 0.0
      %v976 = vmax.f32 %v783, 0.0
      %v977 = vmax.f32 %v872, 0.0
      %v978 = vmax.f32 %v608, 0.0
      %v979 = vmax.f32 %v697, 0.0
      %v980 = vmax.f32 %v786, 0.0
      %v981 = vmax.f32 %v875, 0.0
      %v982 = vmax.f32 %v610, 0.0
      %v983 = vmax.f32 %v699, 0.0
      %v984 = vmax.f32 %v788, 0.0
      %v985 = vmax.f32 %v877, 0.0
      %v986 = vmax.f32 %v613, 0.0
      %v987 = vmax.f32 %v702, 0.0
      %v988 = vmax.f32 %v791, 0.0
      %v989 = vmax.f32 %v880, 0.0
      %v990 = vmax.f32 %v615, 0.0
      %v991 = vmax.f32 %v704, 0.0
      %v992 = vmax.f32 %v793, 0.0
      %v993 = vmax.f32 %v882, 0.0
      %v994 = vmax.f32 %v618, 0.0
      %v995 = vmax.f32 %v707, 0.0
      %v996 = vmax.f32 %v796, 0.0
      %v997 = vmax.f32 %v885, 0.0
      %v998 = vmax.f32 %v620, 0.0
      %v999 = vmax.f32 %v709, 0.0
      %v1000 = vmax.f32 %v798, 0.0
      %v1001 = vmax.f32 %v887, 0.0
      %v1002 = vmax.f32 %v623, 0.0
      %v1003 = vmax.f32 %v712, 0.0
      %v1004 = vmax.f32 %v801, 0.0
      %v1005 = vmax.f32 %v890, 0.0
      %v1006 = vmax.f32 %v625, 0.0
      %v1007 = vmax.f32 %v714, 0.0
      %v1008 = vmax.f32 %v803, 0.0
      %v1009 = vmax.f32 %v892, 0.0
      %v1010 = vmax.f32 %v628, 0.0
      %v1011 = vmax.f32 %v717, 0.0
      %v1012 = vmax.f32 %v806, 0.0
      %v1013 = vmax.f32 %v895, 0.0
      %v1014 = vmax.f32 %v630, 0.0
      %v1015 = vmax.f32 %v719, 0.0
      %v1016 = vmax.f32 %v808, 0.0
      %v1017 = vmax.f32 %v897, 0.0
      %v1018 = vmax.f32 %v633, 0.0
      %v1019 = vmax.f32 %v722, 0.0
      %v1020 = vmax.f32 %v811, 0.0
      %v1021 = vmax.f32 %v900, 0.0
      %v1022 = vmax.f32 %v635, 0.0
      %v1023 = vmax.f32 %v724, 0.0
      %v1024 = vmax.f32 %v813, 0.0
      %v1025 = vmax.f32 %v902, 0.0
      %v1026 = vmax.f32 %v638, 0.0
      %v1027 = vmax.f32 %v727, 0.0
      %v1028 = vmax.f32 %v816, 0.0
      %v1029 = vmax.f32 %v905, 0.0
      %v1030 = vmax.f32 %v640, 0.0
      %v1031 = vmax.f32 %v729, 0.0
      %v1032 = vmax.f32 %v818, 0.0
      %v1033 = vmax.f32 %v907, 0.0
      %v1034 = vmax.f32 %v643, 0.0
      %v1035 = vmax.f32 %v732, 0.0
      %v1036 = vmax.f32 %v821, 0.0
      %v1037 = vmax.f32 %v910, 0.0
      %v1038 = vmax.f32 %v645, 0.0
      %v1039 = vmax.f32 %v734, 0.0
      %v1040 = vmax.f32 %v823, 0.0
      %v1041 = vmax.f32 %v912, 0.0
      %v1042 = vpack.c.bf16 %v918, %v914
      %v1043 = vpack.c.bf16 %v919, %v915
      %v1044 = vpack.c.bf16 %v920, %v916
      %v1045 = vpack.c.bf16 %v921, %v917
      %v1046 = vpack.c.bf16 %v926, %v922
      %v1047 = vpack.c.bf16 %v927, %v923
      %v1048 = vpack.c.bf16 %v928, %v924
      %v1049 = vpack.c.bf16 %v929, %v925
      %v1050 = vpack.c.bf16 %v934, %v930
      %v1051 = vpack.c.bf16 %v935, %v931
      %v1052 = vpack.c.bf16 %v936, %v932
      %v1053 = vpack.c.bf16 %v937, %v933
      %v1054 = vpack.c.bf16 %v942, %v938
      %v1055 = vpack.c.bf16 %v943, %v939
      %v1056 = vpack.c.bf16 %v944, %v940
      %v1057 = vpack.c.bf16 %v945, %v941
      %v1058 = vpack.c.bf16 %v950, %v946
      %v1059 = vpack.c.bf16 %v951, %v947
      %v1060 = vpack.c.bf16 %v952, %v948
      %v1061 = vpack.c.bf16 %v953, %v949
      %v1062 = vpack.c.bf16 %v958, %v954
      %v1063 = vpack.c.bf16 %v959, %v955
      %v1064 = vpack.c.bf16 %v960, %v956
      %v1065 = vpack.c.bf16 %v961, %v957
      %v1066 = vpack.c.bf16 %v966, %v962
      %v1067 = vpack.c.bf16 %v967, %v963
      %v1068 = vpack.c.bf16 %v968, %v964
      %v1069 = vpack.c.bf16 %v969, %v965
      %v1070 = vpack.c.bf16 %v974, %v970
      %v1071 = vpack.c.bf16 %v975, %v971
      %v1072 = vpack.c.bf16 %v976, %v972
      %v1073 = vpack.c.bf16 %v977, %v973
      %v1074 = vpack.c.bf16 %v982, %v978
      %v1075 = vpack.c.bf16 %v983, %v979
      %v1076 = vpack.c.bf16 %v984, %v980
      %v1077 = vpack.c.bf16 %v985, %v981
      %v1078 = vpack.c.bf16 %v990, %v986
      %v1079 = vpack.c.bf16 %v991, %v987
      %v1080 = vpack.c.bf16 %v992, %v988
      %v1081 = vpack.c.bf16 %v993, %v989
      %v1082 = vpack.c.bf16 %v998, %v994
      %v1083 = vpack.c.bf16 %v999, %v995
      %v1084 = vpack.c.bf16 %v1000, %v996
      %v1085 = vpack.c.bf16 %v1001, %v997
      %v1086 = vpack.c.bf16 %v1006, %v1002
      %v1087 = vpack.c.bf16 %v1007, %v1003
      %v1088 = vpack.c.bf16 %v1008, %v1004
      %v1089 = vpack.c.bf16 %v1009, %v1005
      %v1090 = vpack.c.bf16 %v1014, %v1010
      %v1091 = vpack.c.bf16 %v1015, %v1011
      %v1092 = vpack.c.bf16 %v1016, %v1012
      %v1093 = vpack.c.bf16 %v1017, %v1013
      %v1094 = vpack.c.bf16 %v1022, %v1018
      %v1095 = vpack.c.bf16 %v1023, %v1019
      %v1096 = vpack.c.bf16 %v1024, %v1020
      %v1097 = vpack.c.bf16 %v1025, %v1021
      %v1098 = vpack.c.bf16 %v1030, %v1026
      %v1099 = vpack.c.bf16 %v1031, %v1027
      %v1100 = vpack.c.bf16 %v1032, %v1028
      %v1101 = vpack.c.bf16 %v1033, %v1029
      %v1102 = vpack.c.bf16 %v1038, %v1034
      %v1103 = vpack.c.bf16 %v1039, %v1035
      %v1104 = vpack.c.bf16 %v1040, %v1036
      %v1105 = vpack.c.bf16 %v1041, %v1037
      %v1106 = vld [vmem:[%s3] sm:$0xf]
      %v1107 = vld [vmem:[%s3 + $0x4] sm:$0xf]
      %v1108 = vld [vmem:[%s3 + $0x8] sm:$0xf]
      %v1109 = vld [vmem:[%s3 + $0xc] sm:$0xf]
      %v1110 = vld [vmem:[%s3 + $0x10] sm:$0xf]
      %v1111 = vld [vmem:[%s3 + $0x14] sm:$0xf]
      %v1112 = vld [vmem:[%s3 + $0x18] sm:$0xf]
      %v1113 = vld [vmem:[%s3 + $0x1c] sm:$0xf]
      %v1114 = vld [vmem:[%s3 + $0x20] sm:$0xf]
      %v1115 = vld [vmem:[%s3 + $0x24] sm:$0xf]
      %v1116 = vld [vmem:[%s3 + $0x28] sm:$0xf]
      %v1117 = vld [vmem:[%s3 + $0x2c] sm:$0xf]
      %v1118 = vld [vmem:[%s3 + $0x30] sm:$0xf]
      %v1119 = vld [vmem:[%s3 + $0x34] sm:$0xf]
      %v1120 = vld [vmem:[%s3 + $0x38] sm:$0xf]
      %v1121 = vld [vmem:[%s3 + $0x3c] sm:$0xf]
      %v1122 = vld [vmem:[%s3 + $0x40] sm:$0xf]
      %v1123 = vld [vmem:[%s3 + $0x44] sm:$0xf]
      %v1124 = vld [vmem:[%s3 + $0x48] sm:$0xf]
      %v1125 = vld [vmem:[%s3 + $0x4c] sm:$0xf]
      %v1126 = vld [vmem:[%s3 + $0x50] sm:$0xf]
      %v1127 = vld [vmem:[%s3 + $0x54] sm:$0xf]
      %v1128 = vld [vmem:[%s3 + $0x58] sm:$0xf]
      %v1129 = vld [vmem:[%s3 + $0x5c] sm:$0xf]
      %v1130 = vld [vmem:[%s3 + $0x60] sm:$0xf]
      %v1131 = vld [vmem:[%s3 + $0x64] sm:$0xf]
      %v1132 = vld [vmem:[%s3 + $0x68] sm:$0xf]
      %v1133 = vld [vmem:[%s3 + $0x6c] sm:$0xf]
      %v1134 = vld [vmem:[%s3 + $0x70] sm:$0xf]
      %v1135 = vld [vmem:[%s3 + $0x74] sm:$0xf]
      %v1136 = vld [vmem:[%s3 + $0x78] sm:$0xf]
      %v1137 = vld [vmem:[%s3 + $0x7c] sm:$0xf]
      %v1138 = vld [vmem:[%s3 + $0x80] sm:$0xf]
      %v1139 = vld [vmem:[%s3 + $0x84] sm:$0xf]
      %v1140 = vld [vmem:[%s3 + $0x88] sm:$0xf]
      %v1141 = vld [vmem:[%s3 + $0x8c] sm:$0xf]
      %v1142 = vld [vmem:[%s3 + $0x90] sm:$0xf]
      %v1143 = vld [vmem:[%s3 + $0x94] sm:$0xf]
      %v1144 = vld [vmem:[%s3 + $0x98] sm:$0xf]
      %v1145 = vld [vmem:[%s3 + $0x9c] sm:$0xf]
      %v1146 = vld [vmem:[%s3 + $0xa0] sm:$0xf]
      %v1147 = vld [vmem:[%s3 + $0xa4] sm:$0xf]
      %v1148 = vld [vmem:[%s3 + $0xa8] sm:$0xf]
      %v1149 = vld [vmem:[%s3 + $0xac] sm:$0xf]
      %v1150 = vld [vmem:[%s3 + $0xb0] sm:$0xf]
      %v1151 = vld [vmem:[%s3 + $0xb4] sm:$0xf]
      %v1152 = vld [vmem:[%s3 + $0xb8] sm:$0xf]
      %v1153 = vld [vmem:[%s3 + $0xbc] sm:$0xf]
      %v1154 = vld [vmem:[%s3 + $0xc0] sm:$0xf]
      %v1155 = vld [vmem:[%s3 + $0xc4] sm:$0xf]
      %v1156 = vld [vmem:[%s3 + $0xc8] sm:$0xf]
      %v1157 = vld [vmem:[%s3 + $0xcc] sm:$0xf]
      %v1158 = vld [vmem:[%s3 + $0xd0] sm:$0xf]
      %v1159 = vld [vmem:[%s3 + $0xd4] sm:$0xf]
      %v1160 = vld [vmem:[%s3 + $0xd8] sm:$0xf]
      %v1161 = vld [vmem:[%s3 + $0xdc] sm:$0xf]
      %v1162 = vld [vmem:[%s3 + $0xe0] sm:$0xf]
      %v1163 = vld [vmem:[%s3 + $0xe4] sm:$0xf]
      %v1164 = vld [vmem:[%s3 + $0xe8] sm:$0xf]
      %v1165 = vld [vmem:[%s3 + $0xec] sm:$0xf]
      %v1166 = vld [vmem:[%s3 + $0xf0] sm:$0xf]
      %v1167 = vld [vmem:[%s3 + $0xf4] sm:$0xf]
      %v1168 = vld [vmem:[%s3 + $0xf8] sm:$0xf]
      %v1169 = vld [vmem:[%s3 + $0xfc] sm:$0xf]
      %v1170 = vld [vmem:[%s4] sm:$0x1]
      %v1172 = vperm.slane %v1170, 0
      %v1238 = vunpack.c.l.b16 %v1106
      %v1239 = vunpack.c.l.b16 %v1107
      %v1240 = vunpack.c.l.b16 %v1108
      %v1241 = vunpack.c.l.b16 %v1109
      %v1242 = vunpack.c.l.b16 %v1110
      %v1243 = vunpack.c.l.b16 %v1111
      %v1244 = vunpack.c.l.b16 %v1112
      %v1245 = vunpack.c.l.b16 %v1113
      %v1246 = vunpack.c.l.b16 %v1114
      %v1247 = vunpack.c.l.b16 %v1115
      %v1248 = vunpack.c.l.b16 %v1116
      %v1249 = vunpack.c.l.b16 %v1117
      %v1250 = vunpack.c.l.b16 %v1118
      %v1251 = vunpack.c.l.b16 %v1119
      %v1252 = vunpack.c.l.b16 %v1120
      %v1253 = vunpack.c.l.b16 %v1121
      %v1254 = vunpack.c.l.b16 %v1122
      %v1255 = vunpack.c.l.b16 %v1123
      %v1256 = vunpack.c.l.b16 %v1124
      %v1257 = vunpack.c.l.b16 %v1125
      %v1258 = vunpack.c.l.b16 %v1126
      %v1259 = vunpack.c.l.b16 %v1127
      %v1260 = vunpack.c.l.b16 %v1128
      %v1261 = vunpack.c.l.b16 %v1129
      %v1262 = vunpack.c.l.b16 %v1130
      %v1263 = vunpack.c.l.b16 %v1131
      %v1264 = vunpack.c.l.b16 %v1132
      %v1265 = vunpack.c.l.b16 %v1133
      %v1266 = vunpack.c.l.b16 %v1134
      %v1267 = vunpack.c.l.b16 %v1135
      %v1268 = vunpack.c.l.b16 %v1136
      %v1269 = vunpack.c.l.b16 %v1137
      %v1270 = vunpack.c.l.b16 %v1138
      %v1271 = vunpack.c.l.b16 %v1139
      %v1272 = vunpack.c.l.b16 %v1140
      %v1273 = vunpack.c.l.b16 %v1141
      %v1274 = vunpack.c.l.b16 %v1142
      %v1275 = vunpack.c.l.b16 %v1143
      %v1276 = vunpack.c.l.b16 %v1144
      %v1277 = vunpack.c.l.b16 %v1145
      %v1278 = vunpack.c.l.b16 %v1146
      %v1279 = vunpack.c.l.b16 %v1147
      %v1280 = vunpack.c.l.b16 %v1148
      %v1281 = vunpack.c.l.b16 %v1149
      %v1282 = vunpack.c.l.b16 %v1150
      %v1283 = vunpack.c.l.b16 %v1151
      %v1284 = vunpack.c.l.b16 %v1152
      %v1285 = vunpack.c.l.b16 %v1153
      %v1286 = vunpack.c.l.b16 %v1154
      %v1287 = vunpack.c.l.b16 %v1155
      %v1288 = vunpack.c.l.b16 %v1156
      %v1289 = vunpack.c.l.b16 %v1157
      %v1290 = vunpack.c.l.b16 %v1158
      %v1291 = vunpack.c.l.b16 %v1159
      %v1292 = vunpack.c.l.b16 %v1160
      %v1293 = vunpack.c.l.b16 %v1161
      %v1294 = vunpack.c.l.b16 %v1162
      %v1295 = vunpack.c.l.b16 %v1163
      %v1296 = vunpack.c.l.b16 %v1164
      %v1297 = vunpack.c.l.b16 %v1165
      %v1298 = vunpack.c.l.b16 %v1166
      %v1299 = vunpack.c.l.b16 %v1167
      %v1300 = vunpack.c.l.b16 %v1168
      %v1301 = vunpack.c.l.b16 %v1169
      %v1302 = vpack.c.b16 %v1239, %v1238
      %v1303 = vpack.c.b16 %v1241, %v1240
      %v1304 = vpack.c.b16 %v1243, %v1242
      %v1305 = vpack.c.b16 %v1245, %v1244
      %v1306 = vpack.c.b16 %v1247, %v1246
      %v1307 = vpack.c.b16 %v1249, %v1248
      %v1308 = vpack.c.b16 %v1251, %v1250
      %v1309 = vpack.c.b16 %v1253, %v1252
      %v1310 = vpack.c.b16 %v1255, %v1254
      %v1311 = vpack.c.b16 %v1257, %v1256
      %v1312 = vpack.c.b16 %v1259, %v1258
      %v1313 = vpack.c.b16 %v1261, %v1260
      %v1314 = vpack.c.b16 %v1263, %v1262
      %v1315 = vpack.c.b16 %v1265, %v1264
      %v1316 = vpack.c.b16 %v1267, %v1266
      %v1317 = vpack.c.b16 %v1269, %v1268
      %v1318 = vpack.c.b16 %v1271, %v1270
      %v1319 = vpack.c.b16 %v1273, %v1272
      %v1320 = vpack.c.b16 %v1275, %v1274
      %v1321 = vpack.c.b16 %v1277, %v1276
      %v1322 = vpack.c.b16 %v1279, %v1278
      %v1323 = vpack.c.b16 %v1281, %v1280
      %v1324 = vpack.c.b16 %v1283, %v1282
      %v1325 = vpack.c.b16 %v1285, %v1284
      %v1326 = vpack.c.b16 %v1287, %v1286
      %v1327 = vpack.c.b16 %v1289, %v1288
      %v1328 = vpack.c.b16 %v1291, %v1290
      %v1329 = vpack.c.b16 %v1293, %v1292
      %v1330 = vpack.c.b16 %v1295, %v1294
      %v1331 = vpack.c.b16 %v1297, %v1296
      %v1332 = vpack.c.b16 %v1299, %v1298
      %v1333 = vpack.c.b16 %v1301, %v1300
      %1366 = vmatpush.bf16.msra.mxu0 %v1309
      %1367 = vmatpush.bf16.msra.mxu0 %v1308
      %1368 = vmatpush.bf16.msra.mxu0 %v1307
      %1369 = vmatpush.bf16.msra.mxu0 %v1306
      %1370 = vmatpush.bf16.msra.mxu0 %v1305
      %1371 = vmatpush.bf16.msra.mxu0 %v1304
      %1372 = vmatpush.bf16.msra.mxu0 %v1303
      %1373 = vmatpush.bf16.msra.mxu0 %v1302
      %1374 = vmatmul.bf16.gmra.mxu0 %v1042
      %v1375 = vpop.f32.mrf.mxu0
      %v1376 = vadd.f32 %v1172, %v1375
      %v1377 = vpop.f32.mrf.mxu0
      %v1378 = vadd.f32 %v1172, %v1377
      %1379 = vmatmul.bf16.gmra.mxu0 %v1046
      %v1380 = vpop.f32.mrf.mxu0
      %v1381 = vadd.f32 %v1172, %v1380
      %v1382 = vpop.f32.mrf.mxu0
      %v1383 = vadd.f32 %v1172, %v1382
      %1384 = vmatmul.bf16.gmra.mxu0 %v1050
      %v1385 = vpop.f32.mrf.mxu0
      %v1386 = vadd.f32 %v1172, %v1385
      %v1387 = vpop.f32.mrf.mxu0
      %v1388 = vadd.f32 %v1172, %v1387
      %1389 = vmatmul.bf16.gmra.mxu0 %v1054
      %v1390 = vpop.f32.mrf.mxu0
      %v1391 = vadd.f32 %v1172, %v1390
      %v1392 = vpop.f32.mrf.mxu0
      %v1393 = vadd.f32 %v1172, %v1392
      %1394 = vmatmul.bf16.gmra.mxu0 %v1058
      %v1395 = vpop.f32.mrf.mxu0
      %v1396 = vadd.f32 %v1172, %v1395
      %v1397 = vpop.f32.mrf.mxu0
      %v1398 = vadd.f32 %v1172, %v1397
      %1399 = vmatmul.bf16.gmra.mxu0 %v1062
      %v1400 = vpop.f32.mrf.mxu0
      %v1401 = vadd.f32 %v1172, %v1400
      %v1402 = vpop.f32.mrf.mxu0
      %v1403 = vadd.f32 %v1172, %v1402
      %1404 = vmatmul.bf16.gmra.mxu0 %v1066
      %v1405 = vpop.f32.mrf.mxu0
      %v1406 = vadd.f32 %v1172, %v1405
      %v1407 = vpop.f32.mrf.mxu0
      %v1408 = vadd.f32 %v1172, %v1407
      %1409 = vmatmul.bf16.gmra.mxu0 %v1070
      %v1410 = vpop.f32.mrf.mxu0
      %v1411 = vadd.f32 %v1172, %v1410
      %v1412 = vpop.f32.mrf.mxu0
      %v1413 = vadd.f32 %v1172, %v1412
      %1414 = vmatmul.bf16.gmra.mxu0 %v1074
      %v1415 = vpop.f32.mrf.mxu0
      %v1416 = vadd.f32 %v1172, %v1415
      %v1417 = vpop.f32.mrf.mxu0
      %v1418 = vadd.f32 %v1172, %v1417
      %1419 = vmatmul.bf16.gmra.mxu0 %v1078
      %v1420 = vpop.f32.mrf.mxu0
      %v1421 = vadd.f32 %v1172, %v1420
      %v1422 = vpop.f32.mrf.mxu0
      %v1423 = vadd.f32 %v1172, %v1422
      %1424 = vmatmul.bf16.gmra.mxu0 %v1082
      %v1425 = vpop.f32.mrf.mxu0
      %v1426 = vadd.f32 %v1172, %v1425
      %v1427 = vpop.f32.mrf.mxu0
      %v1428 = vadd.f32 %v1172, %v1427
      %1429 = vmatmul.bf16.gmra.mxu0 %v1086
      %v1430 = vpop.f32.mrf.mxu0
      %v1431 = vadd.f32 %v1172, %v1430
      %v1432 = vpop.f32.mrf.mxu0
      %v1433 = vadd.f32 %v1172, %v1432
      %1434 = vmatmul.bf16.gmra.mxu0 %v1090
      %v1435 = vpop.f32.mrf.mxu0
      %v1436 = vadd.f32 %v1172, %v1435
      %v1437 = vpop.f32.mrf.mxu0
      %v1438 = vadd.f32 %v1172, %v1437
      %1439 = vmatmul.bf16.gmra.mxu0 %v1094
      %v1440 = vpop.f32.mrf.mxu0
      %v1441 = vadd.f32 %v1172, %v1440
      %v1442 = vpop.f32.mrf.mxu0
      %v1443 = vadd.f32 %v1172, %v1442
      %1444 = vmatmul.bf16.gmra.mxu0 %v1098
      %v1445 = vpop.f32.mrf.mxu0
      %v1446 = vadd.f32 %v1172, %v1445
      %v1447 = vpop.f32.mrf.mxu0
      %v1448 = vadd.f32 %v1172, %v1447
      %1449 = vmatmul.bf16.gmra.mxu0 %v1102
      %v1450 = vpop.f32.mrf.mxu0
      %v1451 = vadd.f32 %v1172, %v1450
      %v1452 = vpop.f32.mrf.mxu0
      %v1453 = vadd.f32 %v1172, %v1452
      %1454 = vdwg.mxu0
      %1455 = vmatpush.bf16.msra.mxu0 %v1317
      %1456 = vmatpush.bf16.msra.mxu0 %v1316
      %1457 = vmatpush.bf16.msra.mxu0 %v1315
      %1458 = vmatpush.bf16.msra.mxu0 %v1314
      %1459 = vmatpush.bf16.msra.mxu0 %v1313
      %1460 = vmatpush.bf16.msra.mxu0 %v1312
      %1461 = vmatpush.bf16.msra.mxu0 %v1311
      %1462 = vmatpush.bf16.msra.mxu0 %v1310
      %1463 = vmatmul.bf16.gmra.mxu0 %v1043
      %v1464 = vpop.f32.mrf.mxu0
      %v1465 = vadd.f32 %v1376, %v1464
      %v1466 = vpop.f32.mrf.mxu0
      %v1467 = vadd.f32 %v1378, %v1466
      %1468 = vmatmul.bf16.gmra.mxu0 %v1047
      %v1469 = vpop.f32.mrf.mxu0
      %v1470 = vadd.f32 %v1381, %v1469
      %v1471 = vpop.f32.mrf.mxu0
      %v1472 = vadd.f32 %v1383, %v1471
      %1473 = vmatmul.bf16.gmra.mxu0 %v1051
      %v1474 = vpop.f32.mrf.mxu0
      %v1475 = vadd.f32 %v1386, %v1474
      %v1476 = vpop.f32.mrf.mxu0
      %v1477 = vadd.f32 %v1388, %v1476
      %1478 = vmatmul.bf16.gmra.mxu0 %v1055
      %v1479 = vpop.f32.mrf.mxu0
      %v1480 = vadd.f32 %v1391, %v1479
      %v1481 = vpop.f32.mrf.mxu0
      %v1482 = vadd.f32 %v1393, %v1481
      %1483 = vmatmul.bf16.gmra.mxu0 %v1059
      %v1484 = vpop.f32.mrf.mxu0
      %v1485 = vadd.f32 %v1396, %v1484
      %v1486 = vpop.f32.mrf.mxu0
      %v1487 = vadd.f32 %v1398, %v1486
      %1488 = vmatmul.bf16.gmra.mxu0 %v1063
      %v1489 = vpop.f32.mrf.mxu0
      %v1490 = vadd.f32 %v1401, %v1489
      %v1491 = vpop.f32.mrf.mxu0
      %v1492 = vadd.f32 %v1403, %v1491
      %1493 = vmatmul.bf16.gmra.mxu0 %v1067
      %v1494 = vpop.f32.mrf.mxu0
      %v1495 = vadd.f32 %v1406, %v1494
      %v1496 = vpop.f32.mrf.mxu0
      %v1497 = vadd.f32 %v1408, %v1496
      %1498 = vmatmul.bf16.gmra.mxu0 %v1071
      %v1499 = vpop.f32.mrf.mxu0
      %v1500 = vadd.f32 %v1411, %v1499
      %v1501 = vpop.f32.mrf.mxu0
      %v1502 = vadd.f32 %v1413, %v1501
      %1503 = vmatmul.bf16.gmra.mxu0 %v1075
      %v1504 = vpop.f32.mrf.mxu0
      %v1505 = vadd.f32 %v1416, %v1504
      %v1506 = vpop.f32.mrf.mxu0
      %v1507 = vadd.f32 %v1418, %v1506
      %1508 = vmatmul.bf16.gmra.mxu0 %v1079
      %v1509 = vpop.f32.mrf.mxu0
      %v1510 = vadd.f32 %v1421, %v1509
      %v1511 = vpop.f32.mrf.mxu0
      %v1512 = vadd.f32 %v1423, %v1511
      %1513 = vmatmul.bf16.gmra.mxu0 %v1083
      %v1514 = vpop.f32.mrf.mxu0
      %v1515 = vadd.f32 %v1426, %v1514
      %v1516 = vpop.f32.mrf.mxu0
      %v1517 = vadd.f32 %v1428, %v1516
      %1518 = vmatmul.bf16.gmra.mxu0 %v1087
      %v1519 = vpop.f32.mrf.mxu0
      %v1520 = vadd.f32 %v1431, %v1519
      %v1521 = vpop.f32.mrf.mxu0
      %v1522 = vadd.f32 %v1433, %v1521
      %1523 = vmatmul.bf16.gmra.mxu0 %v1091
      %v1524 = vpop.f32.mrf.mxu0
      %v1525 = vadd.f32 %v1436, %v1524
      %v1526 = vpop.f32.mrf.mxu0
      %v1527 = vadd.f32 %v1438, %v1526
      %1528 = vmatmul.bf16.gmra.mxu0 %v1095
      %v1529 = vpop.f32.mrf.mxu0
      %v1530 = vadd.f32 %v1441, %v1529
      %v1531 = vpop.f32.mrf.mxu0
      %v1532 = vadd.f32 %v1443, %v1531
      %1533 = vmatmul.bf16.gmra.mxu0 %v1099
      %v1534 = vpop.f32.mrf.mxu0
      %v1535 = vadd.f32 %v1446, %v1534
      %v1536 = vpop.f32.mrf.mxu0
      %v1537 = vadd.f32 %v1448, %v1536
      %1538 = vmatmul.bf16.gmra.mxu0 %v1103
      %v1539 = vpop.f32.mrf.mxu0
      %v1540 = vadd.f32 %v1451, %v1539
      %v1541 = vpop.f32.mrf.mxu0
      %v1542 = vadd.f32 %v1453, %v1541
      %1543 = vdwg.mxu0
      %1544 = vmatpush.bf16.msra.mxu0 %v1325
      %1545 = vmatpush.bf16.msra.mxu0 %v1324
      %1546 = vmatpush.bf16.msra.mxu0 %v1323
      %1547 = vmatpush.bf16.msra.mxu0 %v1322
      %1548 = vmatpush.bf16.msra.mxu0 %v1321
      %1549 = vmatpush.bf16.msra.mxu0 %v1320
      %1550 = vmatpush.bf16.msra.mxu0 %v1319
      %1551 = vmatpush.bf16.msra.mxu0 %v1318
      %1552 = vmatmul.bf16.gmra.mxu0 %v1044
      %v1553 = vpop.f32.mrf.mxu0
      %v1554 = vadd.f32 %v1465, %v1553
      %v1555 = vpop.f32.mrf.mxu0
      %v1556 = vadd.f32 %v1467, %v1555
      %1557 = vmatmul.bf16.gmra.mxu0 %v1048
      %v1558 = vpop.f32.mrf.mxu0
      %v1559 = vadd.f32 %v1470, %v1558
      %v1560 = vpop.f32.mrf.mxu0
      %v1561 = vadd.f32 %v1472, %v1560
      %1562 = vmatmul.bf16.gmra.mxu0 %v1052
      %v1563 = vpop.f32.mrf.mxu0
      %v1564 = vadd.f32 %v1475, %v1563
      %v1565 = vpop.f32.mrf.mxu0
      %v1566 = vadd.f32 %v1477, %v1565
      %1567 = vmatmul.bf16.gmra.mxu0 %v1056
      %v1568 = vpop.f32.mrf.mxu0
      %v1569 = vadd.f32 %v1480, %v1568
      %v1570 = vpop.f32.mrf.mxu0
      %v1571 = vadd.f32 %v1482, %v1570
      %1572 = vmatmul.bf16.gmra.mxu0 %v1060
      %v1573 = vpop.f32.mrf.mxu0
      %v1574 = vadd.f32 %v1485, %v1573
      %v1575 = vpop.f32.mrf.mxu0
      %v1576 = vadd.f32 %v1487, %v1575
      %1577 = vmatmul.bf16.gmra.mxu0 %v1064
      %v1578 = vpop.f32.mrf.mxu0
      %v1579 = vadd.f32 %v1490, %v1578
      %v1580 = vpop.f32.mrf.mxu0
      %v1581 = vadd.f32 %v1492, %v1580
      %1582 = vmatmul.bf16.gmra.mxu0 %v1068
      %v1583 = vpop.f32.mrf.mxu0
      %v1584 = vadd.f32 %v1495, %v1583
      %v1585 = vpop.f32.mrf.mxu0
      %v1586 = vadd.f32 %v1497, %v1585
      %1587 = vmatmul.bf16.gmra.mxu0 %v1072
      %v1588 = vpop.f32.mrf.mxu0
      %v1589 = vadd.f32 %v1500, %v1588
      %v1590 = vpop.f32.mrf.mxu0
      %v1591 = vadd.f32 %v1502, %v1590
      %1592 = vmatmul.bf16.gmra.mxu0 %v1076
      %v1593 = vpop.f32.mrf.mxu0
      %v1594 = vadd.f32 %v1505, %v1593
      %v1595 = vpop.f32.mrf.mxu0
      %v1596 = vadd.f32 %v1507, %v1595
      %1597 = vmatmul.bf16.gmra.mxu0 %v1080
      %v1598 = vpop.f32.mrf.mxu0
      %v1599 = vadd.f32 %v1510, %v1598
      %v1600 = vpop.f32.mrf.mxu0
      %v1601 = vadd.f32 %v1512, %v1600
      %1602 = vmatmul.bf16.gmra.mxu0 %v1084
      %v1603 = vpop.f32.mrf.mxu0
      %v1604 = vadd.f32 %v1515, %v1603
      %v1605 = vpop.f32.mrf.mxu0
      %v1606 = vadd.f32 %v1517, %v1605
      %1607 = vmatmul.bf16.gmra.mxu0 %v1088
      %v1608 = vpop.f32.mrf.mxu0
      %v1609 = vadd.f32 %v1520, %v1608
      %v1610 = vpop.f32.mrf.mxu0
      %v1611 = vadd.f32 %v1522, %v1610
      %1612 = vmatmul.bf16.gmra.mxu0 %v1092
      %v1613 = vpop.f32.mrf.mxu0
      %v1614 = vadd.f32 %v1525, %v1613
      %v1615 = vpop.f32.mrf.mxu0
      %v1616 = vadd.f32 %v1527, %v1615
      %1617 = vmatmul.bf16.gmra.mxu0 %v1096
      %v1618 = vpop.f32.mrf.mxu0
      %v1619 = vadd.f32 %v1530, %v1618
      %v1620 = vpop.f32.mrf.mxu0
      %v1621 = vadd.f32 %v1532, %v1620
      %1622 = vmatmul.bf16.gmra.mxu0 %v1100
      %v1623 = vpop.f32.mrf.mxu0
      %v1624 = vadd.f32 %v1535, %v1623
      %v1625 = vpop.f32.mrf.mxu0
      %v1626 = vadd.f32 %v1537, %v1625
      %1627 = vmatmul.bf16.gmra.mxu0 %v1104
      %v1628 = vpop.f32.mrf.mxu0
      %v1629 = vadd.f32 %v1540, %v1628
      %v1630 = vpop.f32.mrf.mxu0
      %v1631 = vadd.f32 %v1542, %v1630
      %1632 = vdwg.mxu0
      %1633 = vmatpush.bf16.msra.mxu0 %v1333
      %1634 = vmatpush.bf16.msra.mxu0 %v1332
      %1635 = vmatpush.bf16.msra.mxu0 %v1331
      %1636 = vmatpush.bf16.msra.mxu0 %v1330
      %1637 = vmatpush.bf16.msra.mxu0 %v1329
      %1638 = vmatpush.bf16.msra.mxu0 %v1328
      %1639 = vmatpush.bf16.msra.mxu0 %v1327
      %1640 = vmatpush.bf16.msra.mxu0 %v1326
      %1641 = vmatmul.bf16.gmra.mxu0 %v1045
      %v1642 = vpop.f32.mrf.mxu0
      %v1643 = vadd.f32 %v1554, %v1642
      %v1644 = vpop.f32.mrf.mxu0
      %v1645 = vadd.f32 %v1556, %v1644
      %1646 = vmatmul.bf16.gmra.mxu0 %v1049
      %v1647 = vpop.f32.mrf.mxu0
      %v1648 = vadd.f32 %v1559, %v1647
      %v1649 = vpop.f32.mrf.mxu0
      %v1650 = vadd.f32 %v1561, %v1649
      %1651 = vmatmul.bf16.gmra.mxu0 %v1053
      %v1652 = vpop.f32.mrf.mxu0
      %v1653 = vadd.f32 %v1564, %v1652
      %v1654 = vpop.f32.mrf.mxu0
      %v1655 = vadd.f32 %v1566, %v1654
      %1656 = vmatmul.bf16.gmra.mxu0 %v1057
      %v1657 = vpop.f32.mrf.mxu0
      %v1658 = vadd.f32 %v1569, %v1657
      %v1659 = vpop.f32.mrf.mxu0
      %v1660 = vadd.f32 %v1571, %v1659
      %1661 = vmatmul.bf16.gmra.mxu0 %v1061
      %v1662 = vpop.f32.mrf.mxu0
      %v1663 = vadd.f32 %v1574, %v1662
      %v1664 = vpop.f32.mrf.mxu0
      %v1665 = vadd.f32 %v1576, %v1664
      %1666 = vmatmul.bf16.gmra.mxu0 %v1065
      %v1667 = vpop.f32.mrf.mxu0
      %v1668 = vadd.f32 %v1579, %v1667
      %v1669 = vpop.f32.mrf.mxu0
      %v1670 = vadd.f32 %v1581, %v1669
      %1671 = vmatmul.bf16.gmra.mxu0 %v1069
      %v1672 = vpop.f32.mrf.mxu0
      %v1673 = vadd.f32 %v1584, %v1672
      %v1674 = vpop.f32.mrf.mxu0
      %v1675 = vadd.f32 %v1586, %v1674
      %1676 = vmatmul.bf16.gmra.mxu0 %v1073
      %v1677 = vpop.f32.mrf.mxu0
      %v1678 = vadd.f32 %v1589, %v1677
      %v1679 = vpop.f32.mrf.mxu0
      %v1680 = vadd.f32 %v1591, %v1679
      %1681 = vmatmul.bf16.gmra.mxu0 %v1077
      %v1682 = vpop.f32.mrf.mxu0
      %v1683 = vadd.f32 %v1594, %v1682
      %v1684 = vpop.f32.mrf.mxu0
      %v1685 = vadd.f32 %v1596, %v1684
      %1686 = vmatmul.bf16.gmra.mxu0 %v1081
      %v1687 = vpop.f32.mrf.mxu0
      %v1688 = vadd.f32 %v1599, %v1687
      %v1689 = vpop.f32.mrf.mxu0
      %v1690 = vadd.f32 %v1601, %v1689
      %1691 = vmatmul.bf16.gmra.mxu0 %v1085
      %v1692 = vpop.f32.mrf.mxu0
      %v1693 = vadd.f32 %v1604, %v1692
      %v1694 = vpop.f32.mrf.mxu0
      %v1695 = vadd.f32 %v1606, %v1694
      %1696 = vmatmul.bf16.gmra.mxu0 %v1089
      %v1697 = vpop.f32.mrf.mxu0
      %v1698 = vadd.f32 %v1609, %v1697
      %v1699 = vpop.f32.mrf.mxu0
      %v1700 = vadd.f32 %v1611, %v1699
      %1701 = vmatmul.bf16.gmra.mxu0 %v1093
      %v1702 = vpop.f32.mrf.mxu0
      %v1703 = vadd.f32 %v1614, %v1702
      %v1704 = vpop.f32.mrf.mxu0
      %v1705 = vadd.f32 %v1616, %v1704
      %1706 = vmatmul.bf16.gmra.mxu0 %v1097
      %v1707 = vpop.f32.mrf.mxu0
      %v1708 = vadd.f32 %v1619, %v1707
      %v1709 = vpop.f32.mrf.mxu0
      %v1710 = vadd.f32 %v1621, %v1709
      %1711 = vmatmul.bf16.gmra.mxu0 %v1101
      %v1712 = vpop.f32.mrf.mxu0
      %v1713 = vadd.f32 %v1624, %v1712
      %v1714 = vpop.f32.mrf.mxu0
      %v1715 = vadd.f32 %v1626, %v1714
      %1716 = vmatmul.bf16.gmra.mxu0 %v1105
      %v1717 = vpop.f32.mrf.mxu0
      %v1718 = vadd.f32 %v1629, %v1717
      %v1719 = vpop.f32.mrf.mxu0
      %v1720 = vadd.f32 %v1631, %v1719
      %1721 = vdwg.mxu0
      %vm1722 = vcmask 293888
      %1723 = vst.msk [vmem:[%s226] sm:$0xff] %vm1722, %v1643
      %1724 = vst.msk [vmem:[%s226 + $0x8] sm:$0xff] %vm1722, %v1645
      %1725 = vst.msk [vmem:[%s226 + $0x10] sm:$0xff] %vm1722, %v1648
      %1726 = vst.msk [vmem:[%s226 + $0x18] sm:$0xff] %vm1722, %v1650
      %1727 = vst.msk [vmem:[%s226 + $0x20] sm:$0xff] %vm1722, %v1653
      %1728 = vst.msk [vmem:[%s226 + $0x28] sm:$0xff] %vm1722, %v1655
      %1729 = vst.msk [vmem:[%s226 + $0x30] sm:$0xff] %vm1722, %v1658
      %1730 = vst.msk [vmem:[%s226 + $0x38] sm:$0xff] %vm1722, %v1660
      %1731 = vst.msk [vmem:[%s226 + $0x40] sm:$0xff] %vm1722, %v1663
      %1732 = vst.msk [vmem:[%s226 + $0x48] sm:$0xff] %vm1722, %v1665
      %1733 = vst.msk [vmem:[%s226 + $0x50] sm:$0xff] %vm1722, %v1668
      %1734 = vst.msk [vmem:[%s226 + $0x58] sm:$0xff] %vm1722, %v1670
      %1735 = vst.msk [vmem:[%s226 + $0x60] sm:$0xff] %vm1722, %v1673
      %1736 = vst.msk [vmem:[%s226 + $0x68] sm:$0xff] %vm1722, %v1675
      %1737 = vst.msk [vmem:[%s226 + $0x70] sm:$0xff] %vm1722, %v1678
      %1738 = vst.msk [vmem:[%s226 + $0x78] sm:$0xff] %vm1722, %v1680
      %1739 = vst.msk [vmem:[%s226 + $0x80] sm:$0xff] %vm1722, %v1683
      %1740 = vst.msk [vmem:[%s226 + $0x88] sm:$0xff] %vm1722, %v1685
      %1741 = vst.msk [vmem:[%s226 + $0x90] sm:$0xff] %vm1722, %v1688
      %1742 = vst.msk [vmem:[%s226 + $0x98] sm:$0xff] %vm1722, %v1690
      %1743 = vst.msk [vmem:[%s226 + $0xa0] sm:$0xff] %vm1722, %v1693
      %1744 = vst.msk [vmem:[%s226 + $0xa8] sm:$0xff] %vm1722, %v1695
      %1745 = vst.msk [vmem:[%s226 + $0xb0] sm:$0xff] %vm1722, %v1698
      %1746 = vst.msk [vmem:[%s226 + $0xb8] sm:$0xff] %vm1722, %v1700
      %1747 = vst.msk [vmem:[%s226 + $0xc0] sm:$0xff] %vm1722, %v1703
      %1748 = vst.msk [vmem:[%s226 + $0xc8] sm:$0xff] %vm1722, %v1705
      %1749 = vst.msk [vmem:[%s226 + $0xd0] sm:$0xff] %vm1722, %v1708
      %1750 = vst.msk [vmem:[%s226 + $0xd8] sm:$0xff] %vm1722, %v1710
      %1751 = vst.msk [vmem:[%s226 + $0xe0] sm:$0xff] %vm1722, %v1713
      %1752 = vst.msk [vmem:[%s226 + $0xe8] sm:$0xff] %vm1722, %v1715
      %1753 = vst.msk [vmem:[%s226 + $0xf0] sm:$0xff] %vm1722, %v1718
      %1754 = vst.msk [vmem:[%s226 + $0xf8] sm:$0xff] %vm1722, %v1720
      %s1755 = smul.u32 32, %s16
      %p1756 = scmp.lt.s32.totalorder %s1755, 63
      %s1757 = scalar_select %p1756, %s1755, 63
      %s1758 = smul.addr %s1757, 8
      %s1759 = scalar_lea.vmem %s5, %s1758
      // Predicated region
      $region41: #{autoencoder_forward.13} parent=39 // pred_check
        %p1760 = pneg %p144
      $region42: #{autoencoder_forward.13} parent=39 // pred_check_branch
        %1762 = sbr.rel (%p1760) target = $region44
      $region43: #{autoencoder_forward.13} parent=39 // pred_region
        %s1763 = smul.u32 32, %s16
      $region44: #{autoencoder_forward.13} parent=39 // pred_fallthru
        _
    $region40: #{autoencoder_forward.13} parent=5 // pred_fallthru
      _
    %p1764 = scmp.le.s32.totalorder 2, %s11
    // Predicated region
    $region45: #{autoencoder_forward.13} parent=5 // pred_check
      %p1765 = pneg %p1764
    $region46: #{autoencoder_forward.13} parent=5 // pred_check_branch
      %1767 = sbr.rel (%p1765) target = $region48
    $region47: #{autoencoder_forward.13} parent=5 // pred_region
      %s1768 = ssub.s32 %s11, 2
      // Predicated region
      $region49: #{autoencoder_forward.13} parent=47 // pred_check
        %p1769 = pneg %p150
      $region50: #{autoencoder_forward.13} parent=47 // pred_check_branch
        %1771 = sbr.rel (%p1769) target = $region52
      $region51: #{autoencoder_forward.13} parent=47 // pred_region
        %s1772 = smul.u32 32, %s17
        %p1773 = scmp.lt.s32.totalorder %s1772, 63
        %s1774 = scalar_select %p1773, %s1772, 63
        %s1775 = smul.addr %s1774, 8
        %s1776 = scalar_lea.vmem %s5, %s1775
      $region52: #{autoencoder_forward.13} parent=47 // pred_fallthru
        _
    $region48: #{autoencoder_forward.13} parent=5 // pred_fallthru
      _
  $region6: #{autoencoder_forward.13} parent=0 // loop_footer
    %s15 = sadd.s32 1, %s11
  $region7: #{autoencoder_forward.13} parent=0 // loop_footer_branch
    %10 = sbr.rel target = $region3
  $region8: #{autoencoder_forward.13} parent=0 // loop_exit
    _

</llo_original>
